<compile_context>
chip_gen: v6e
topology: v6e:2x2x1
jax: 0.10.0
libtpu: 0.0.40
codegen_flags: <defaults>
</compile_context>

<pallas_src>
import numpy as np
import jax
import jax.numpy as jnp
from jax.experimental import pallas as pl
from jax.experimental.pallas import tpu as pltpu

# eps used by the PyTorch module: torch.finfo(torch.float32).tiny
# (kept as a plain Python literal so the kernels don't capture a traced value).
_EPS = 1.1754943508222875e-38

# Matmul operand dtype: bf16 operands + f32 accumulation (native MXU path on
# v5e/v6e/v7x).  Set to jnp.float32 to recover exact-f32 reference semantics.
MATMUL_DTYPE = jnp.bfloat16


# ----------------------------- hardware helpers ------------------------------

def _tpu_vmem_capacity_bytes():
    try:
        return int(pltpu.get_tpu_info().vmem_capacity_bytes)
    except Exception:
        return 128 * 1024 * 1024   # v5e/v6e default


def _vmem_limit_bytes():
    # ~75% of physical VMEM, capped: ~48 MiB on v7x (64 MiB phys), ~96-100 MiB
    # on v5e/v6e (128 MiB phys).
    return int(min(_tpu_vmem_capacity_bytes() * 3 // 4, 100 * 1024 * 1024))


# ----------------------------- shared math -----------------------------------

def _layer_norm(x):
    # F.layer_norm(x, [D], eps=tiny) with no affine params (biased variance).
    mean = jnp.mean(x, axis=-1, keepdims=True)
    var = jnp.mean(jnp.square(x - mean), axis=-1, keepdims=True)
    return (x - mean) * jax.lax.rsqrt(var + _EPS)


def _softplus(x):
    # Numerically stable log(1 + exp(x)).
    return jnp.maximum(x, 0.0) + jnp.log(1.0 + jnp.exp(-jnp.abs(x)))


def _mish(x):
    # nn.Mish: x * tanh(softplus(x))
    return x * jnp.tanh(_softplus(x))


def _sigmoid(x):
    # Mathematically identical to torch.sigmoid; tanh form avoids inf.
    return 0.5 * (jnp.tanh(0.5 * x) + 1.0)


def _mm(a, b):
    # MXU matmul: MATMUL_DTYPE operands, f32 accumulation.
    return jnp.dot(a.astype(MATMUL_DTYPE), b.astype(MATMUL_DTYPE),
                   preferred_element_type=jnp.float32)


# ----------------------------- Pallas kernels --------------------------------

def _block_kernel(x_ref,
                  w1a_ref, b1a_ref, w1g_ref, b1g_ref, w2_ref, b2_ref,
                  wq_ref, bq_ref, wk_ref, bk_ref, wv_ref, bv_ref,
                  wo_ref, bo_ref, pe_ref,
                  o_ref, cur_ref):
    """One grid step = (batch b, layer l).

    Computes cur_{l+1} = Layer_l(cur_l) = cur_l + FFN(cur_l) + AFT(cur_l) on one
    batch's [T, D] slab (carried in `cur_ref`), and accumulates the ConstantBlock
    u-net residual  out = x + sum_l cur_l  directly in the output block, which is
    resident across the layer axis.
    """
    l = pl.program_id(1)

    @pl.when(l == 0)
    def _():
        cur_ref[...] = x_ref[0]
        o_ref[0] = x_ref[0]

    cur = cur_ref[...]                      # [T, D] f32, carried across layers
    xn = _layer_norm(cur)                   # shared by FFN and AFT (Norm is param-free)

    # --- FeedForwardModule: fc1 -> SwiGLU -> fc2 ---
    a = _mm(xn, w1a_ref[0]) + b1a_ref[0]
    g = _mm(xn, w1g_ref[0]) + b1g_ref[0]
    ffn = _mm(a * _mish(g), w2_ref[0]) + b2_ref[0]

    # --- AFTModule ---
    q = _mm(xn, wq_ref[0]) + bq_ref[0]
    k = _mm(xn, wk_ref[0]) + bk_ref[0]
    v = _mm(xn, wv_ref[0]) + bv_ref[0]
    ke = jnp.exp(k)                          # matches torch.exp(key)
    pe = pe_ref[0]                           # exp(resized pos_bias), [T, T]
    num = _mm(pe, ke * v)                    # [T, D] position mix over time
    den = _mm(pe, ke)
    weighted = num / den                     # exact divide (errors would compound)
    aft = _mm(_sigmoid(q) * weighted, wo_ref[0]) + bo_ref[0]

    new = cur + ffn + aft                    # Layer residual folded in
    cur_ref[...] = new
    o_ref[0] = o_ref[0] + new                # ConstantBlock u-net residual sum


def _upsample_norm_kernel(x_ref, w_ref, b_ref, o_ref):
    # Linear followed by Norm (layer_norm), on a token tile.
    y = _mm(x_ref[...], w_ref[...]) + b_ref[...]
    o_ref[...] = _layer_norm(y)


# ----------------------------- kernel wrappers -------------------------------

def block_forward(xb, bp):
    """xb: [B, T, D] batch-major. One fused pallas_call for a whole ConstantBlock."""
    B, T, D = xb.shape
    L = bp["w1a"].shape[0]

    x_spec = pl.BlockSpec((1, T, D), lambda b, l: (b, 0, 0))
    w_spec = pl.BlockSpec((1, D, D), lambda b, l: (l, 0, 0))
    b_spec = pl.BlockSpec((1, 1, D), lambda b, l: (l, 0, 0))
    pe_spec = pl.BlockSpec((1, T, T), lambda b, l: (l, 0, 0))

    in_specs = [x_spec,
                w_spec, b_spec,   # w1a, b1a
                w_spec, b_spec,   # w1g, b1g
                w_spec, b_spec,   # w2,  b2
                w_spec, b_spec,   # wq,  bq
                w_spec, b_spec,   # wk,  bk
                w_spec, b_spec,   # wv,  bv
                w_spec, b_spec,   # wo,  bo
                pe_spec]

    return pl.pallas_call(
        _block_kernel,
        out_shape=jax.ShapeDtypeStruct((B, T, D), jnp.float32),
        grid=(B, L),
        in_specs=in_specs,
        out_specs=pl.BlockSpec((1, T, D), lambda b, l: (b, 0, 0)),
        scratch_shapes=[pltpu.VMEM((T, D), jnp.float32)],
        compiler_params=pltpu.CompilerParams(
            dimension_semantics=("parallel", "arbitrary"),
            vmem_limit_bytes=_vmem_limit_bytes()),
    )(xb,
      bp["w1a"], bp["b1a"], bp["w1g"], bp["b1g"], bp["w2"], bp["b2"],
      bp["wq"], bp["bq"], bp["wk"], bp["bk"], bp["wv"], bp["bv"],
      bp["wo"], bp["bo"], bp["pe"])


def _token_tile(rows, cap):
    # Largest power-of-two multiple of 8 that divides `rows`, capped at `cap`.
    if rows % 8 != 0:
        return rows
    tm = 8
    while tm * 2 <= min(rows, cap) and rows % (tm * 2) == 0:
        tm *= 2
    return tm


def upsample_norm_forward(xb, w, b2d):
    # xb: [B, T, Din] -> Linear -> layer_norm -> [B, T, Dout]
    B, T, Din = xb.shape
    Dout = w.shape[1]
    rows = B * T
    # Bigger token tiles where VMEM allows (v5e/v6e 128 MiB); stay at 512 on v7x.
    cap = 1024 if _tpu_vmem_capacity_bytes() >= 100 * 1024 * 1024 else 512
    tm = _token_tile(rows, cap)
    y = pl.pallas_call(
        _upsample_norm_kernel,
        out_shape=jax.ShapeDtypeStruct((rows, Dout), jnp.float32),
        grid=(rows // tm,),
        in_specs=[
            pl.BlockSpec((tm, Din), lambda i: (i, 0)),     # token tile (pipelined)
            pl.BlockSpec((Din, Dout), lambda i: (0, 0)),   # weights stay resident
            pl.BlockSpec((1, Dout), lambda i: (0, 0)),
        ],
        out_specs=pl.BlockSpec((tm, Dout), lambda i: (i, 0)),
        compiler_params=pltpu.CompilerParams(
            dimension_semantics=("parallel",),
            vmem_limit_bytes=_vmem_limit_bytes()),
    )(xb.reshape(rows, Din), w, b2d)
    return y.reshape(B, T, Dout)


def decoder_forward(x, prep):
    # x: [T, B, D] seq-first (layout implied by the PyTorch module).
    xb = jnp.transpose(x, (1, 0, 2))      # -> [B, T, D], once for the whole stack
    nb = len(prep["blocks"])
    for i, bp in enumerate(prep["blocks"]):
        xb = block_forward(xb, bp)
        if i < nb - 1:
            w, b2d = prep["upsamples"][i]
            xb = upsample_norm_forward(xb, w, b2d)
    return jnp.transpose(xb, (1, 0, 2))   # back to [T, B, D]


# ----------------------------- parameter handling ----------------------------

def _bilinear_resize(p, out_size):
    # F.interpolate(mode='bilinear', align_corners=False) on a [S, S] map.
    # TODO(synk): parameter-only preprocessing (glue), kept in plain JAX.
    S = p.shape[0]
    if out_size == S:
        return p
    scale = S / out_size
    src = (jnp.arange(out_size, dtype=jnp.float32) + 0.5) * scale - 0.5
    src = jnp.maximum(src, 0.0)
    i0 = jnp.clip(jnp.floor(src).astype(jnp.int32), 0, S - 1)
    i1 = jnp.minimum(i0 + 1, S - 1)
    w1 = src - i0.astype(jnp.float32)
    w0 = 1.0 - w1
    rows = p[i0, :] * w0[:, None] + p[i1, :] * w1[:, None]
    return rows[:, i0] * w0[None, :] + rows[:, i1] * w1[None, :]


def _init_linear(key, fan_in, fan_out):
    kw, kb = jax.random.split(key)
    bound = 1.0 / float(np.sqrt(fan_in))
    w = jax.random.uniform(kw, (fan_in, fan_out), jnp.float32, -bound, bound)
    b = jax.random.uniform(kb, (fan_out,), jnp.float32, -bound, bound)
    return w, b


def init_decoder_params(key, d_models, seq_len, num_layers):
    rev = list(d_models[::-1])
    params = {"blocks": [], "upsamples": []}
    for d in rev:
        layers = []
        for _ in range(num_layers):
            key, k1, k2, k3, k4, k5, k6, k7, k8 = jax.random.split(key, 9)
            w1a, b1a = _init_linear(k1, d, d)   # fc1 "a" half
            w1g, b1g = _init_linear(k2, d, d)   # fc1 "gate" half
            w2, b2 = _init_linear(k3, d, d)     # fc2
            wq, bq = _init_linear(k4, d, d)     # qkv split into q / k / v
            wk, bk = _init_linear(k5, d, d)
            wv, bv = _init_linear(k6, d, d)
            wo, bo = _init_linear(k7, d, d)     # AFT output projection
            # Pos_bias is zeros in the PyTorch __init__; use small deterministic
            # noise so the position-mix path is exercised non-trivially.
            pos_bias = 0.02 * jax.random.normal(k8, (seq_len, seq_len), jnp.float32)
            layers.append(dict(w1a=w1a, b1a=b1a, w1g=w1g, b1g=b1g, w2=w2, b2=b2,
                               wq=wq, bq=bq, wk=wk, bk=bk, wv=wv, bv=bv,
                               wo=wo, bo=bo, pos_bias=pos_bias))
        params["blocks"].append({"layers": layers})
    for i in range(len(rev) - 1):
        key, kk = jax.random.split(key)
        params["upsamples"].append(_init_linear(kk, rev[i], rev[i + 1]))
    return params


def prepare_decoder_params(raw, T):
    """One-time parameter preprocessing: stack per-layer weights along a leading
    layer axis, cast matmul operands to MATMUL_DTYPE, and precompute
    pe = exp(bilinear_resize(pos_bias, T))."""
    w_names = ("w1a", "w1g", "w2", "wq", "wk", "wv", "wo")
    b_names = ("b1a", "b1g", "b2", "bq", "bk", "bv", "bo")
    prep = {"blocks": [], "upsamples": []}
    for bp in raw["blocks"]:
        layers = bp["layers"]
        d = {}
        for n in w_names:
            d[n] = jnp.stack([lp[n] for lp in layers]).astype(MATMUL_DTYPE)   # [L,D,D]
        for n in b_names:
            d[n] = jnp.stack([lp[n].reshape(1, -1) for lp in layers])         # [L,1,D] f32
        d["pe"] = jnp.stack(
            [jnp.exp(_bilinear_resize(lp["pos_bias"], T)) for lp in layers]
        ).astype(MATMUL_DTYPE)                                                # [L,T,T]
        prep["blocks"].append(d)
    for (w, b) in raw["upsamples"]:
        prep["upsamples"].append((w.astype(MATMUL_DTYPE), b.reshape(1, -1)))
    return prep


# ----------------------------- pure-JAX reference ----------------------------

def _ref_layer(x, p, l):
    # x: [T, B, D] seq-first.
    xn = _layer_norm(x)
    a = _mm(xn, p["w1a"][l]) + p["b1a"][l]
    g = _mm(xn, p["w1g"][l]) + p["b1g"][l]
    ffn = _mm(a * _mish(g), p["w2"][l]) + p["b2"][l]
    q = _mm(xn, p["wq"][l]) + p["bq"][l]
    k = _mm(xn, p["wk"][l]) + p["bk"][l]
    v = _mm(xn, p["wv"][l]) + p["bv"][l]
    ke = jnp.exp(k)
    pe = p["pe"][l]
    num = jnp.einsum("ij,jbd->ibd", pe, (ke * v).astype(MATMUL_DTYPE),
                     preferred_element_type=jnp.float32)
    den = jnp.einsum("ij,jbd->ibd", pe, ke.astype(MATMUL_DTYPE),
                     preferred_element_type=jnp.float32)
    aft = _mm(_sigmoid(q) * (num / den), p["wo"][l]) + p["bo"][l]
    return x + ffn + aft


def _ref_decoder(x, prep):
    nb = len(prep["blocks"])
    for i, bp in enumerate(prep["blocks"]):
        L = bp["w1a"].shape[0]
        out = x
        cur = x
        for l in range(L):
            cur = _ref_layer(cur, bp, l)
            out = out + cur
        x = out
        if i < nb - 1:
            w, b2d = prep["upsamples"][i]
            x = _layer_norm(_mm(x, w) + b2d)
    return x


# --------------------------------- main ---------------------------------------

if __name__ == "__main__":
    seq_len, batch, num_layers = 8, 2, 2
    d_models = [32, 16]          # small version of the default [512, ..., 32]

    key = jax.random.PRNGKey(0)
    kp, kx = jax.random.split(key)
    raw_params = init_decoder_params(kp, d_models, seq_len, num_layers)
    prep = prepare_decoder_params(raw_params, seq_len)

    # input: [seq_len, batch, d_models[-1]]  (seq-first, see layout note above)
    x = jax.random.normal(kx, (seq_len, batch, d_models[-1]), jnp.float32)

    fwd = jax.jit(decoder_forward)
    y = jax.block_until_ready(fwd(x, prep))
    y_ref = _ref_decoder(x, prep)

    assert y.shape == (seq_len, batch, d_models[0]), y.shape
    np.testing.assert_allclose(np.asarray(y), np.asarray(y_ref),
                               rtol=5e-3, atol=5e-3)
    print("KERNEL_OK")
</pallas_src>

<mosaic_0001>
module attributes {stable_mosaic.version = 11 : i64} {
  func.func @_upsample_norm_kernel(%arg0: i32, %arg1: memref<16x16xf32, #tpu.memory_space<vmem>>, %arg2: memref<16x32xbf16, #tpu.memory_space<vmem>>, %arg3: memref<1x32xf32, #tpu.memory_space<vmem>>, %arg4: memref<16x32xf32, #tpu.memory_space<vmem>>) attributes {dimension_semantics = [#tpu.dimension_semantics<parallel>], iteration_bounds = array<i64: 1>, scalar_prefetch = 0 : i64, scratch_operands = 0 : i64, tpu.core_type = #tpu.core_type<tc>, window_params = [{transform_indices = @transform_0, window_bounds = array<i64: 16, 16>}, {pipeline_mode = #tpu.pipeline_mode<synchronous>, transform_indices = @transform_1, window_bounds = array<i64: 16, 32>}, {pipeline_mode = #tpu.pipeline_mode<synchronous>, transform_indices = @transform_2, window_bounds = array<i64: 1, 32>}, {transform_indices = @transform_3, window_bounds = array<i64: 16, 32>}]} {
    %c0 = arith.constant 0 : index
    %c0_0 = arith.constant 0 : index
    %0 = vector.load %arg1[%c0, %c0_0] : memref<16x16xf32, #tpu.memory_space<vmem>>, vector<16x16xf32>
    %c0_1 = arith.constant 0 : index
    %c0_2 = arith.constant 0 : index
    %1 = vector.load %arg2[%c0_1, %c0_2] : memref<16x32xbf16, #tpu.memory_space<vmem>>, vector<16x32xbf16>
    %2 = arith.truncf %0 : vector<16x16xf32> to vector<16x16xbf16>
    %cst = arith.constant dense<0.000000e+00> : vector<16x32xf32>
    %3 = tpu.matmul %2, %1, %cst {dimension_numbers = #tpu.dot_dimension_numbers<[1], [0], [0], [1], [0, 0, 1, 1], [], []>} : vector<16x16xbf16>, vector<16x32xbf16>, vector<16x32xf32> -> vector<16x32xf32>
    %c0_3 = arith.constant 0 : index
    %c0_4 = arith.constant 0 : index
    %4 = vector.load %arg3[%c0_3, %c0_4] : memref<1x32xf32, #tpu.memory_space<vmem>>, vector<1x32xf32>
    %5 = vector.broadcast %4 : vector<1x32xf32> to vector<16x32xf32>
    %6 = arith.addf %3, %5 : vector<16x32xf32>
    %cst_5 = arith.constant dense<0.000000e+00> : vector<16xf32>
    %7 = vector.multi_reduction <add>, %6, %cst_5 [1] : vector<16x32xf32> to vector<16xf32>
    %8 = vector.shape_cast %7 : vector<16xf32> to vector<16x1xf32>
    %cst_6 = arith.constant 3.200000e+01 : f32
    %9 = vector.broadcast %cst_6 : f32 to vector<16x1xf32>
    %10 = arith.divf %8, %9 : vector<16x1xf32>
    %11 = vector.broadcast %10 : vector<16x1xf32> to vector<16x32xf32>
    %12 = arith.subf %6, %11 : vector<16x32xf32>
    %13 = arith.mulf %12, %12 : vector<16x32xf32>
    %cst_7 = arith.constant dense<0.000000e+00> : vector<16xf32>
    %14 = vector.multi_reduction <add>, %13, %cst_7 [1] : vector<16x32xf32> to vector<16xf32>
    %15 = vector.shape_cast %14 : vector<16xf32> to vector<16x1xf32>
    %cst_8 = arith.constant 3.200000e+01 : f32
    %16 = vector.broadcast %cst_8 : f32 to vector<16x1xf32>
    %17 = arith.divf %15, %16 : vector<16x1xf32>
    %18 = vector.broadcast %10 : vector<16x1xf32> to vector<16x32xf32>
    %19 = arith.subf %6, %18 : vector<16x32xf32>
    %cst_9 = arith.constant 1.17549435E-38 : f32
    %20 = vector.broadcast %cst_9 : f32 to vector<16x1xf32>
    %21 = arith.addf %17, %20 : vector<16x1xf32>
    %22 = math.rsqrt %21 : vector<16x1xf32>
    %23 = vector.broadcast %22 : vector<16x1xf32> to vector<16x32xf32>
    %24 = arith.mulf %19, %23 : vector<16x32xf32>
    %c0_10 = arith.constant 0 : index
    %c0_11 = arith.constant 0 : index
    %25 = vector.load %arg4[%c0_10, %c0_11] : memref<16x32xf32, #tpu.memory_space<vmem>>, vector<16x32xf32>
    tpu.vector_store %arg4[%c0_10, %c0_11], %24 {strides = array<i32>} : memref<16x32xf32, #tpu.memory_space<vmem>>, vector<16x32xf32>,
    return
  }
  func.func @transform_0(%arg0: i32) -> (i32, i32) {
    %c0_i32 = arith.constant 0 : i32
    %c0_i32_0 = arith.constant 0 : i32
    return %arg0, %c0_i32 : i32, i32
  }
  func.func @transform_1(%arg0: i32) -> (i32, i32) {
    %c0_i32 = arith.constant 0 : i32
    %c0_i32_0 = arith.constant 0 : i32
    %c0_i32_1 = arith.constant 0 : i32
    return %c0_i32, %c0_i32_0 : i32, i32
  }
  func.func @transform_2(%arg0: i32) -> (i32, i32) {
    %c0_i32 = arith.constant 0 : i32
    %c0_i32_0 = arith.constant 0 : i32
    %c0_i32_1 = arith.constant 0 : i32
    return %c0_i32, %c0_i32_0 : i32, i32
  }
  func.func @transform_3(%arg0: i32) -> (i32, i32) {
    %c0_i32 = arith.constant 0 : i32
    %c0_i32_0 = arith.constant 0 : i32
    return %arg0, %c0_i32 : i32, i32
  }
}

module attributes {stable_mosaic.version = 11 : i64} {
  func.func @_block_kernel(%arg0: i32, %arg1: i32, %arg2: memref<1x8x32xf32, #tpu.memory_space<vmem>>, %arg3: memref<1x32x32xbf16, #tpu.memory_space<vmem>>, %arg4: memref<1x1x32xf32, #tpu.memory_space<vmem>>, %arg5: memref<1x32x32xbf16, #tpu.memory_space<vmem>>, %arg6: memref<1x1x32xf32, #tpu.memory_space<vmem>>, %arg7: memref<1x32x32xbf16, #tpu.memory_space<vmem>>, %arg8: memref<1x1x32xf32, #tpu.memory_space<vmem>>, %arg9: memref<1x32x32xbf16, #tpu.memory_space<vmem>>, %arg10: memref<1x1x32xf32, #tpu.memory_space<vmem>>, %arg11: memref<1x32x32xbf16, #tpu.memory_space<vmem>>, %arg12: memref<1x1x32xf32, #tpu.memory_space<vmem>>, %arg13: memref<1x32x32xbf16, #tpu.memory_space<vmem>>, %arg14: memref<1x1x32xf32, #tpu.memory_space<vmem>>, %arg15: memref<1x32x32xbf16, #tpu.memory_space<vmem>>, %arg16: memref<1x1x32xf32, #tpu.memory_space<vmem>>, %arg17: memref<1x8x8xbf16, #tpu.memory_space<vmem>>, %arg18: memref<1x8x32xf32, #tpu.memory_space<vmem>>, %arg19: memref<8x32xf32, #tpu.memory_space<vmem>>) attributes {dimension_semantics = [#tpu.dimension_semantics<parallel>, #tpu.dimension_semantics<arbitrary>], iteration_bounds = array<i64: 2, 2>, scalar_prefetch = 0 : i64, scratch_operands = 1 : i64, tpu.core_type = #tpu.core_type<tc>, window_params = [{transform_indices = @transform_0, window_bounds = array<i64: 1, 8, 32>}, {transform_indices = @transform_1, window_bounds = array<i64: 1, 32, 32>}, {transform_indices = @transform_2, window_bounds = array<i64: 1, 1, 32>}, {transform_indices = @transform_3, window_bounds = array<i64: 1, 32, 32>}, {transform_indices = @transform_4, window_bounds = array<i64: 1, 1, 32>}, {transform_indices = @transform_5, window_bounds = array<i64: 1, 32, 32>}, {transform_indices = @transform_6, window_bounds = array<i64: 1, 1, 32>}, {transform_indices = @transform_7, window_bounds = array<i64: 1, 32, 32>}, {transform_indices = @transform_8, window_bounds = array<i64: 1, 1, 32>}, {transform_indices = @transform_9, window_bounds = array<i64: 1, 32, 32>}, {transform_indices = @transform_10, window_bounds = array<i64: 1, 1, 32>}, {transform_indices = @transform_11, window_bounds = array<i64: 1, 32, 32>}, {transform_indices = @transform_12, window_bounds = array<i64: 1, 1, 32>}, {transform_indices = @transform_13, window_bounds = array<i64: 1, 32, 32>}, {transform_indices = @transform_14, window_bounds = array<i64: 1, 1, 32>}, {transform_indices = @transform_15, window_bounds = array<i64: 1, 8, 8>}, {transform_indices = @transform_16, window_bounds = array<i64: 1, 8, 32>}]} {
    %c0_i32 = arith.constant 0 : i32
    %0 = arith.cmpi eq, %arg1, %c0_i32 : i32
    %1 = arith.extui %0 : i1 to i32
    %c0_i32_0 = arith.constant 0 : i32
    %2 = arith.cmpi ne, %1, %c0_i32_0 : i32
    scf.if %2 {
      %c0_74 = arith.constant 0 : index
      %c0_75 = arith.constant 0 : index
      %c0_76 = arith.constant 0 : index
      %117 = vector.load %arg2[%c0_74, %c0_75, %c0_76] : memref<1x8x32xf32, #tpu.memory_space<vmem>>, vector<1x8x32xf32>
      %118 = vector.shape_cast %117 : vector<1x8x32xf32> to vector<8x32xf32>
      %c0_77 = arith.constant 0 : index
      %c0_78 = arith.constant 0 : index
      %119 = vector.load %arg19[%c0_77, %c0_78] : memref<8x32xf32, #tpu.memory_space<vmem>>, vector<8x32xf32>
      tpu.vector_store %arg19[%c0_77, %c0_78], %118 {strides = array<i32>} : memref<8x32xf32, #tpu.memory_space<vmem>>, vector<8x32xf32>,
      %c0_79 = arith.constant 0 : index
      %c0_80 = arith.constant 0 : index
      %c0_81 = arith.constant 0 : index
      %120 = vector.load %arg2[%c0_79, %c0_80, %c0_81] : memref<1x8x32xf32, #tpu.memory_space<vmem>>, vector<1x8x32xf32>
      %121 = vector.shape_cast %120 : vector<1x8x32xf32> to vector<8x32xf32>
      %c0_82 = arith.constant 0 : index
      %c0_83 = arith.constant 0 : index
      %c0_84 = arith.constant 0 : index
      %122 = vector.load %arg18[%c0_82, %c0_83, %c0_84] : memref<1x8x32xf32, #tpu.memory_space<vmem>>, vector<1x8x32xf32>
      %123 = vector.shape_cast %122 : vector<1x8x32xf32> to vector<8x32xf32>
      %124 = vector.shape_cast %121 : vector<8x32xf32> to vector<1x8x32xf32>
      tpu.vector_store %arg18[%c0_82, %c0_83, %c0_84], %124 {strides = array<i32>} : memref<1x8x32xf32, #tpu.memory_space<vmem>>, vector<1x8x32xf32>,
    } else {
    }
    %c0 = arith.constant 0 : index
    %c0_1 = arith.constant 0 : index
    %3 = vector.load %arg19[%c0, %c0_1] : memref<8x32xf32, #tpu.memory_space<vmem>>, vector<8x32xf32>
    %cst = arith.constant dense<0.000000e+00> : vector<8xf32>
    %4 = vector.multi_reduction <add>, %3, %cst [1] : vector<8x32xf32> to vector<8xf32>
    %5 = vector.shape_cast %4 : vector<8xf32> to vector<8x1xf32>
    %cst_2 = arith.constant 3.200000e+01 : f32
    %6 = vector.broadcast %cst_2 : f32 to vector<8x1xf32>
    %7 = arith.divf %5, %6 : vector<8x1xf32>
    %8 = vector.broadcast %7 : vector<8x1xf32> to vector<8x32xf32>
    %9 = arith.subf %3, %8 : vector<8x32xf32>
    %10 = arith.mulf %9, %9 : vector<8x32xf32>
    %cst_3 = arith.constant dense<0.000000e+00> : vector<8xf32>
    %11 = vector.multi_reduction <add>, %10, %cst_3 [1] : vector<8x32xf32> to vector<8xf32>
    %12 = vector.shape_cast %11 : vector<8xf32> to vector<8x1xf32>
    %cst_4 = arith.constant 3.200000e+01 : f32
    %13 = vector.broadcast %cst_4 : f32 to vector<8x1xf32>
    %14 = arith.divf %12, %13 : vector<8x1xf32>
    %15 = vector.broadcast %7 : vector<8x1xf32> to vector<8x32xf32>
    %16 = arith.subf %3, %15 : vector<8x32xf32>
    %cst_5 = arith.constant 1.17549435E-38 : f32
    %17 = vector.broadcast %cst_5 : f32 to vector<8x1xf32>
    %18 = arith.addf %14, %17 : vector<8x1xf32>
    %19 = math.rsqrt %18 : vector<8x1xf32>
    %20 = vector.broadcast %19 : vector<8x1xf32> to vector<8x32xf32>
    %21 = arith.mulf %16, %20 : vector<8x32xf32>
    %c0_6 = arith.constant 0 : index
    %c0_7 = arith.constant 0 : index
    %c0_8 = arith.constant 0 : index
    %22 = vector.load %arg3[%c0_6, %c0_7, %c0_8] : memref<1x32x32xbf16, #tpu.memory_space<vmem>>, vector<1x32x32xbf16>
    %23 = vector.shape_cast %22 : vector<1x32x32xbf16> to vector<32x32xbf16>
    %24 = arith.truncf %21 : vector<8x32xf32> to vector<8x32xbf16>
    %cst_9 = arith.constant dense<0.000000e+00> : vector<8x32xf32>
    %25 = tpu.matmul %24, %23, %cst_9 {dimension_numbers = #tpu.dot_dimension_numbers<[1], [0], [0], [1], [0, 0, 1, 1], [], []>} : vector<8x32xbf16>, vector<32x32xbf16>, vector<8x32xf32> -> vector<8x32xf32>
    %c0_10 = arith.constant 0 : index
    %c0_11 = arith.constant 0 : index
    %c0_12 = arith.constant 0 : index
    %26 = vector.load %arg4[%c0_10, %c0_11, %c0_12] : memref<1x1x32xf32, #tpu.memory_space<vmem>>, vector<1x1x32xf32>
    %27 = vector.shape_cast %26 : vector<1x1x32xf32> to vector<1x32xf32>
    %28 = vector.broadcast %27 : vector<1x32xf32> to vector<8x32xf32>
    %29 = arith.addf %25, %28 : vector<8x32xf32>
    %c0_13 = arith.constant 0 : index
    %c0_14 = arith.constant 0 : index
    %c0_15 = arith.constant 0 : index
    %30 = vector.load %arg5[%c0_13, %c0_14, %c0_15] : memref<1x32x32xbf16, #tpu.memory_space<vmem>>, vector<1x32x32xbf16>
    %31 = vector.shape_cast %30 : vector<1x32x32xbf16> to vector<32x32xbf16>
    %32 = arith.truncf %21 : vector<8x32xf32> to vector<8x32xbf16>
    %cst_16 = arith.constant dense<0.000000e+00> : vector<8x32xf32>
    %33 = tpu.matmul %32, %31, %cst_16 {dimension_numbers = #tpu.dot_dimension_numbers<[1], [0], [0], [1], [0, 0, 1, 1], [], []>} : vector<8x32xbf16>, vector<32x32xbf16>, vector<8x32xf32> -> vector<8x32xf32>
    %c0_17 = arith.constant 0 : index
    %c0_18 = arith.constant 0 : index
    %c0_19 = arith.constant 0 : index
    %34 = vector.load %arg6[%c0_17, %c0_18, %c0_19] : memref<1x1x32xf32, #tpu.memory_space<vmem>>, vector<1x1x32xf32>
    %35 = vector.shape_cast %34 : vector<1x1x32xf32> to vector<1x32xf32>
    %36 = vector.broadcast %35 : vector<1x32xf32> to vector<8x32xf32>
    %37 = arith.addf %33, %36 : vector<8x32xf32>
    %cst_20 = arith.constant 0.000000e+00 : f32
    %38 = vector.broadcast %cst_20 : f32 to vector<8x32xf32>
    %39 = arith.maximumf %37, %38 : vector<8x32xf32>
    %40 = math.absf %37 : vector<8x32xf32>
    %cst_21 = arith.constant 0.000000e+00 : f32
    %41 = vector.broadcast %cst_21 : f32 to vector<8x32xf32>
    %42 = arith.subf %41, %40 : vector<8x32xf32>
    %43 = math.exp %42 : vector<8x32xf32>
    %cst_22 = arith.constant 1.000000e+00 : f32
    %44 = vector.broadcast %cst_22 : f32 to vector<8x32xf32>
    %45 = arith.addf %44, %43 : vector<8x32xf32>
    %46 = math.log %45 : vector<8x32xf32>
    %47 = arith.addf %39, %46 : vector<8x32xf32>
    %48 = math.tanh %47 : vector<8x32xf32>
    %49 = arith.mulf %37, %48 : vector<8x32xf32>
    %50 = arith.mulf %29, %49 : vector<8x32xf32>
    %c0_23 = arith.constant 0 : index
    %c0_24 = arith.constant 0 : index
    %c0_25 = arith.constant 0 : index
    %51 = vector.load %arg7[%c0_23, %c0_24, %c0_25] : memref<1x32x32xbf16, #tpu.memory_space<vmem>>, vector<1x32x32xbf16>
    %52 = vector.shape_cast %51 : vector<1x32x32xbf16> to vector<32x32xbf16>
    %53 = arith.truncf %50 : vector<8x32xf32> to vector<8x32xbf16>
    %cst_26 = arith.constant dense<0.000000e+00> : vector<8x32xf32>
    %54 = tpu.matmul %53, %52, %cst_26 {dimension_numbers = #tpu.dot_dimension_numbers<[1], [0], [0], [1], [0, 0, 1, 1], [], []>} : vector<8x32xbf16>, vector<32x32xbf16>, vector<8x32xf32> -> vector<8x32xf32>
    %c0_27 = arith.constant 0 : index
    %c0_28 = arith.constant 0 : index
    %c0_29 = arith.constant 0 : index
    %55 = vector.load %arg8[%c0_27, %c0_28, %c0_29] : memref<1x1x32xf32, #tpu.memory_space<vmem>>, vector<1x1x32xf32>
    %56 = vector.shape_cast %55 : vector<1x1x32xf32> to vector<1x32xf32>
    %57 = vector.broadcast %56 : vector<1x32xf32> to vector<8x32xf32>
    %58 = arith.addf %54, %57 : vector<8x32xf32>
    %c0_30 = arith.constant 0 : index
    %c0_31 = arith.constant 0 : index
    %c0_32 = arith.constant 0 : index
    %59 = vector.load %arg9[%c0_30, %c0_31, %c0_32] : memref<1x32x32xbf16, #tpu.memory_space<vmem>>, vector<1x32x32xbf16>
    %60 = vector.shape_cast %59 : vector<1x32x32xbf16> to vector<32x32xbf16>
    %61 = arith.truncf %21 : vector<8x32xf32> to vector<8x32xbf16>
    %cst_33 = arith.constant dense<0.000000e+00> : vector<8x32xf32>
    %62 = tpu.matmul %61, %60, %cst_33 {dimension_numbers = #tpu.dot_dimension_numbers<[1], [0], [0], [1], [0, 0, 1, 1], [], []>} : vector<8x32xbf16>, vector<32x32xbf16>, vector<8x32xf32> -> vector<8x32xf32>
    %c0_34 = arith.constant 0 : index
    %c0_35 = arith.constant 0 : index
    %c0_36 = arith.constant 0 : index
    %63 = vector.load %arg10[%c0_34, %c0_35, %c0_36] : memref<1x1x32xf32, #tpu.memory_space<vmem>>, vector<1x1x32xf32>
    %64 = vector.shape_cast %63 : vector<1x1x32xf32> to vector<1x32xf32>
    %65 = vector.broadcast %64 : vector<1x32xf32> to vector<8x32xf32>
    %66 = arith.addf %62, %65 : vector<8x32xf32>
    %c0_37 = arith.constant 0 : index
    %c0_38 = arith.constant 0 : index
    %c0_39 = arith.constant 0 : index
    %67 = vector.load %arg11[%c0_37, %c0_38, %c0_39] : memref<1x32x32xbf16, #tpu.memory_space<vmem>>, vector<1x32x32xbf16>
    %68 = vector.shape_cast %67 : vector<1x32x32xbf16> to vector<32x32xbf16>
    %69 = arith.truncf %21 : vector<8x32xf32> to vector<8x32xbf16>
    %cst_40 = arith.constant dense<0.000000e+00> : vector<8x32xf32>
    %70 = tpu.matmul %69, %68, %cst_40 {dimension_numbers = #tpu.dot_dimension_numbers<[1], [0], [0], [1], [0, 0, 1, 1], [], []>} : vector<8x32xbf16>, vector<32x32xbf16>, vector<8x32xf32> -> vector<8x32xf32>
    %c0_41 = arith.constant 0 : index
    %c0_42 = arith.constant 0 : index
    %c0_43 = arith.constant 0 : index
    %71 = vector.load %arg12[%c0_41, %c0_42, %c0_43] : memref<1x1x32xf32, #tpu.memory_space<vmem>>, vector<1x1x32xf32>
    %72 = vector.shape_cast %71 : vector<1x1x32xf32> to vector<1x32xf32>
    %73 = vector.broadcast %72 : vector<1x32xf32> to vector<8x32xf32>
    %74 = arith.addf %70, %73 : vector<8x32xf32>
    %c0_44 = arith.constant 0 : index
    %c0_45 = arith.constant 0 : index
    %c0_46 = arith.constant 0 : index
    %75 = vector.load %arg13[%c0_44, %c0_45, %c0_46] : memref<1x32x32xbf16, #tpu.memory_space<vmem>>, vector<1x32x32xbf16>
    %76 = vector.shape_cast %75 : vector<1x32x32xbf16> to vector<32x32xbf16>
    %77 = arith.truncf %21 : vector<8x32xf32> to vector<8x32xbf16>
    %cst_47 = arith.constant dense<0.000000e+00> : vector<8x32xf32>
    %78 = tpu.matmul %77, %76, %cst_47 {dimension_numbers = #tpu.dot_dimension_numbers<[1], [0], [0], [1], [0, 0, 1, 1], [], []>} : vector<8x32xbf16>, vector<32x32xbf16>, vector<8x32xf32> -> vector<8x32xf32>
    %c0_48 = arith.constant 0 : index
    %c0_49 = arith.constant 0 : index
    %c0_50 = arith.constant 0 : index
    %79 = vector.load %arg14[%c0_48, %c0_49, %c0_50] : memref<1x1x32xf32, #tpu.memory_space<vmem>>, vector<1x1x32xf32>
    %80 = vector.shape_cast %79 : vector<1x1x32xf32> to vector<1x32xf32>
    %81 = vector.broadcast %80 : vector<1x32xf32> to vector<8x32xf32>
    %82 = arith.addf %78, %81 : vector<8x32xf32>
    %83 = math.exp %74 : vector<8x32xf32>
    %c0_51 = arith.constant 0 : index
    %c0_52 = arith.constant 0 : index
    %c0_53 = arith.constant 0 : index
    %84 = vector.load %arg17[%c0_51, %c0_52, %c0_53] : memref<1x8x8xbf16, #tpu.memory_space<vmem>>, vector<1x8x8xbf16>
    %85 = vector.shape_cast %84 : vector<1x8x8xbf16> to vector<8x8xbf16>
    %86 = arith.mulf %83, %82 : vector<8x32xf32>
    %87 = arith.truncf %86 : vector<8x32xf32> to vector<8x32xbf16>
    %cst_54 = arith.constant dense<0.000000e+00> : vector<8x32xf32>
    %88 = tpu.matmul %85, %87, %cst_54 {dimension_numbers = #tpu.dot_dimension_numbers<[1], [0], [0], [1], [0, 0, 1, 1], [], []>} : vector<8x8xbf16>, vector<8x32xbf16>, vector<8x32xf32> -> vector<8x32xf32>
    %89 = arith.truncf %83 : vector<8x32xf32> to vector<8x32xbf16>
    %cst_55 = arith.constant dense<0.000000e+00> : vector<8x32xf32>
    %90 = tpu.matmul %85, %89, %cst_55 {dimension_numbers = #tpu.dot_dimension_numbers<[1], [0], [0], [1], [0, 0, 1, 1], [], []>} : vector<8x8xbf16>, vector<8x32xbf16>, vector<8x32xf32> -> vector<8x32xf32>
    %91 = arith.divf %88, %90 : vector<8x32xf32>
    %cst_56 = arith.constant 5.000000e-01 : f32
    %92 = vector.broadcast %cst_56 : f32 to vector<8x32xf32>
    %93 = arith.mulf %92, %66 : vector<8x32xf32>
    %94 = math.tanh %93 : vector<8x32xf32>
    %cst_57 = arith.constant 1.000000e+00 : f32
    %95 = vector.broadcast %cst_57 : f32 to vector<8x32xf32>
    %96 = arith.addf %94, %95 : vector<8x32xf32>
    %cst_58 = arith.constant 5.000000e-01 : f32
    %97 = vector.broadcast %cst_58 : f32 to vector<8x32xf32>
    %98 = arith.mulf %97, %96 : vector<8x32xf32>
    %99 = arith.mulf %98, %91 : vector<8x32xf32>
    %c0_59 = arith.constant 0 : index
    %c0_60 = arith.constant 0 : index
    %c0_61 = arith.constant 0 : index
    %100 = vector.load %arg15[%c0_59, %c0_60, %c0_61] : memref<1x32x32xbf16, #tpu.memory_space<vmem>>, vector<1x32x32xbf16>
    %101 = vector.shape_cast %100 : vector<1x32x32xbf16> to vector<32x32xbf16>
    %102 = arith.truncf %99 : vector<8x32xf32> to vector<8x32xbf16>
    %cst_62 = arith.constant dense<0.000000e+00> : vector<8x32xf32>
    %103 = tpu.matmul %102, %101, %cst_62 {dimension_numbers = #tpu.dot_dimension_numbers<[1], [0], [0], [1], [0, 0, 1, 1], [], []>} : vector<8x32xbf16>, vector<32x32xbf16>, vector<8x32xf32> -> vector<8x32xf32>
    %c0_63 = arith.constant 0 : index
    %c0_64 = arith.constant 0 : index
    %c0_65 = arith.constant 0 : index
    %104 = vector.load %arg16[%c0_63, %c0_64, %c0_65] : memref<1x1x32xf32, #tpu.memory_space<vmem>>, vector<1x1x32xf32>
    %105 = vector.shape_cast %104 : vector<1x1x32xf32> to vector<1x32xf32>
    %106 = vector.broadcast %105 : vector<1x32xf32> to vector<8x32xf32>
    %107 = arith.addf %103, %106 : vector<8x32xf32>
    %108 = arith.addf %3, %58 : vector<8x32xf32>
    %109 = arith.addf %108, %107 : vector<8x32xf32>
    %c0_66 = arith.constant 0 : index
    %c0_67 = arith.constant 0 : index
    %110 = vector.load %arg19[%c0_66, %c0_67] : memref<8x32xf32, #tpu.memory_space<vmem>>, vector<8x32xf32>
    tpu.vector_store %arg19[%c0_66, %c0_67], %109 {strides = array<i32>} : memref<8x32xf32, #tpu.memory_space<vmem>>, vector<8x32xf32>,
    %c0_68 = arith.constant 0 : index
    %c0_69 = arith.constant 0 : index
    %c0_70 = arith.constant 0 : index
    %111 = vector.load %arg18[%c0_68, %c0_69, %c0_70] : memref<1x8x32xf32, #tpu.memory_space<vmem>>, vector<1x8x32xf32>
    %112 = vector.shape_cast %111 : vector<1x8x32xf32> to vector<8x32xf32>
    %113 = arith.addf %112, %109 : vector<8x32xf32>
    %c0_71 = arith.constant 0 : index
    %c0_72 = arith.constant 0 : index
    %c0_73 = arith.constant 0 : index
    %114 = vector.load %arg18[%c0_71, %c0_72, %c0_73] : memref<1x8x32xf32, #tpu.memory_space<vmem>>, vector<1x8x32xf32>
    %115 = vector.shape_cast %114 : vector<1x8x32xf32> to vector<8x32xf32>
    %116 = vector.shape_cast %113 : vector<8x32xf32> to vector<1x8x32xf32>
    tpu.vector_store %arg18[%c0_71, %c0_72, %c0_73], %116 {strides = array<i32>} : memref<1x8x32xf32, #tpu.memory_space<vmem>>, vector<1x8x32xf32>,
    return
  }
  func.func @transform_0(%arg0: i32, %arg1: i32) -> (i32, i32, i32) {
    %c0_i32 = arith.constant 0 : i32
    %c0_i32_0 = arith.constant 0 : i32
    %c0_i32_1 = arith.constant 0 : i32
    return %arg0, %c0_i32, %c0_i32_0 : i32, i32, i32
  }
  func.func @transform_1(%arg0: i32, %arg1: i32) -> (i32, i32, i32) {
    %c0_i32 = arith.constant 0 : i32
    %c0_i32_0 = arith.constant 0 : i32
    %c0_i32_1 = arith.constant 0 : i32
    return %arg1, %c0_i32, %c0_i32_0 : i32, i32, i32
  }
  func.func @transform_2(%arg0: i32, %arg1: i32) -> (i32, i32, i32) {
    %c0_i32 = arith.constant 0 : i32
    %c0_i32_0 = arith.constant 0 : i32
    %c0_i32_1 = arith.constant 0 : i32
    return %arg1, %c0_i32, %c0_i32_0 : i32, i32, i32
  }
  func.func @transform_3(%arg0: i32, %arg1: i32) -> (i32, i32, i32) {
    %c0_i32 = arith.constant 0 : i32
    %c0_i32_0 = arith.constant 0 : i32
    %c0_i32_1 = arith.constant 0 : i32
    return %arg1, %c0_i32, %c0_i32_0 : i32, i32, i32
  }
  func.func @transform_4(%arg0: i32, %arg1: i32) -> (i32, i32, i32) {
    %c0_i32 = arith.constant 0 : i32
    %c0_i32_0 = arith.constant 0 : i32
    %c0_i32_1 = arith.constant 0 : i32
    return %arg1, %c0_i32, %c0_i32_0 : i32, i32, i32
  }
  func.func @transform_5(%arg0: i32, %arg1: i32) -> (i32, i32, i32) {
    %c0_i32 = arith.constant 0 : i32
    %c0_i32_0 = arith.constant 0 : i32
    %c0_i32_1 = arith.constant 0 : i32
    return %arg1, %c0_i32, %c0_i32_0 : i32, i32, i32
  }
  func.func @transform_6(%arg0: i32, %arg1: i32) -> (i32, i32, i32) {
    %c0_i32 = arith.constant 0 : i32
    %c0_i32_0 = arith.constant 0 : i32
    %c0_i32_1 = arith.constant 0 : i32
    return %arg1, %c0_i32, %c0_i32_0 : i32, i32, i32
  }
  func.func @transform_7(%arg0: i32, %arg1: i32) -> (i32, i32, i32) {
    %c0_i32 = arith.constant 0 : i32
    %c0_i32_0 = arith.constant 0 : i32
    %c0_i32_1 = arith.constant 0 : i32
    return %arg1, %c0_i32, %c0_i32_0 : i32, i32, i32
  }
  func.func @transform_8(%arg0: i32, %arg1: i32) -> (i32, i32, i32) {
    %c0_i32 = arith.constant 0 : i32
    %c0_i32_0 = arith.constant 0 : i32
    %c0_i32_1 = arith.constant 0 : i32
    return %arg1, %c0_i32, %c0_i32_0 : i32, i32, i32
  }
  func.func @transform_9(%arg0: i32, %arg1: i32) -> (i32, i32, i32) {
    %c0_i32 = arith.constant 0 : i32
    %c0_i32_0 = arith.constant 0 : i32
    %c0_i32_1 = arith.constant 0 : i32
    return %arg1, %c0_i32, %c0_i32_0 : i32, i32, i32
  }
  func.func @transform_10(%arg0: i32, %arg1: i32) -> (i32, i32, i32) {
    %c0_i32 = arith.constant 0 : i32
    %c0_i32_0 = arith.constant 0 : i32
    %c0_i32_1 = arith.constant 0 : i32
    return %arg1, %c0_i32, %c0_i32_0 : i32, i32, i32
  }
  func.func @transform_11(%arg0: i32, %arg1: i32) -> (i32, i32, i32) {
    %c0_i32 = arith.constant 0 : i32
    %c0_i32_0 = arith.constant 0 : i32
    %c0_i32_1 = arith.constant 0 : i32
    return %arg1, %c0_i32, %c0_i32_0 : i32, i32, i32
  }
  func.func @transform_12(%arg0: i32, %arg1: i32) -> (i32, i32, i32) {
    %c0_i32 = arith.constant 0 : i32
    %c0_i32_0 = arith.constant 0 : i32
    %c0_i32_1 = arith.constant 0 : i32
    return %arg1, %c0_i32, %c0_i32_0 : i32, i32, i32
  }
  func.func @transform_13(%arg0: i32, %arg1: i32) -> (i32, i32, i32) {
    %c0_i32 = arith.constant 0 : i32
    %c0_i32_0 = arith.constant 0 : i32
    %c0_i32_1 = arith.constant 0 : i32
    return %arg1, %c0_i32, %c0_i32_0 : i32, i32, i32
  }
  func.func @transform_14(%arg0: i32, %arg1: i32) -> (i32, i32, i32) {
    %c0_i32 = arith.constant 0 : i32
    %c0_i32_0 = arith.constant 0 : i32
    %c0_i32_1 = arith.constant 0 : i32
    return %arg1, %c0_i32, %c0_i32_0 : i32, i32, i32
  }
  func.func @transform_15(%arg0: i32, %arg1: i32) -> (i32, i32, i32) {
    %c0_i32 = arith.constant 0 : i32
    %c0_i32_0 = arith.constant 0 : i32
    %c0_i32_1 = arith.constant 0 : i32
    return %arg1, %c0_i32, %c0_i32_0 : i32, i32, i32
  }
  func.func @transform_16(%arg0: i32, %arg1: i32) -> (i32, i32, i32) {
    %c0_i32 = arith.constant 0 : i32
    %c0_i32_0 = arith.constant 0 : i32
    %c0_i32_1 = arith.constant 0 : i32
    return %arg0, %c0_i32, %c0_i32_0 : i32, i32, i32
  }
}

module attributes {stable_mosaic.version = 11 : i64} {
  func.func @_block_kernel(%arg0: i32, %arg1: i32, %arg2: memref<1x8x16xf32, #tpu.memory_space<vmem>>, %arg3: memref<1x16x16xbf16, #tpu.memory_space<vmem>>, %arg4: memref<1x1x16xf32, #tpu.memory_space<vmem>>, %arg5: memref<1x16x16xbf16, #tpu.memory_space<vmem>>, %arg6: memref<1x1x16xf32, #tpu.memory_space<vmem>>, %arg7: memref<1x16x16xbf16, #tpu.memory_space<vmem>>, %arg8: memref<1x1x16xf32, #tpu.memory_space<vmem>>, %arg9: memref<1x16x16xbf16, #tpu.memory_space<vmem>>, %arg10: memref<1x1x16xf32, #tpu.memory_space<vmem>>, %arg11: memref<1x16x16xbf16, #tpu.memory_space<vmem>>, %arg12: memref<1x1x16xf32, #tpu.memory_space<vmem>>, %arg13: memref<1x16x16xbf16, #tpu.memory_space<vmem>>, %arg14: memref<1x1x16xf32, #tpu.memory_space<vmem>>, %arg15: memref<1x16x16xbf16, #tpu.memory_space<vmem>>, %arg16: memref<1x1x16xf32, #tpu.memory_space<vmem>>, %arg17: memref<1x8x8xbf16, #tpu.memory_space<vmem>>, %arg18: memref<1x8x16xf32, #tpu.memory_space<vmem>>, %arg19: memref<8x16xf32, #tpu.memory_space<vmem>>) attributes {dimension_semantics = [#tpu.dimension_semantics<parallel>, #tpu.dimension_semantics<arbitrary>], iteration_bounds = array<i64: 2, 2>, scalar_prefetch = 0 : i64, scratch_operands = 1 : i64, tpu.core_type = #tpu.core_type<tc>, window_params = [{transform_indices = @transform_0, window_bounds = array<i64: 1, 8, 16>}, {transform_indices = @transform_1, window_bounds = array<i64: 1, 16, 16>}, {transform_indices = @transform_2, window_bounds = array<i64: 1, 1, 16>}, {transform_indices = @transform_3, window_bounds = array<i64: 1, 16, 16>}, {transform_indices = @transform_4, window_bounds = array<i64: 1, 1, 16>}, {transform_indices = @transform_5, window_bounds = array<i64: 1, 16, 16>}, {transform_indices = @transform_6, window_bounds = array<i64: 1, 1, 16>}, {transform_indices = @transform_7, window_bounds = array<i64: 1, 16, 16>}, {transform_indices = @transform_8, window_bounds = array<i64: 1, 1, 16>}, {transform_indices = @transform_9, window_bounds = array<i64: 1, 16, 16>}, {transform_indices = @transform_10, window_bounds = array<i64: 1, 1, 16>}, {transform_indices = @transform_11, window_bounds = array<i64: 1, 16, 16>}, {transform_indices = @transform_12, window_bounds = array<i64: 1, 1, 16>}, {transform_indices = @transform_13, window_bounds = array<i64: 1, 16, 16>}, {transform_indices = @transform_14, window_bounds = array<i64: 1, 1, 16>}, {transform_indices = @transform_15, window_bounds = array<i64: 1, 8, 8>}, {transform_indices = @transform_16, window_bounds = array<i64: 1, 8, 16>}]} {
    %c0_i32 = arith.constant 0 : i32
    %0 = arith.cmpi eq, %arg1, %c0_i32 : i32
    %1 = arith.extui %0 : i1 to i32
    %c0_i32_0 = arith.constant 0 : i32
    %2 = arith.cmpi ne, %1, %c0_i32_0 : i32
    scf.if %2 {
      %c0_74 = arith.constant 0 : index
      %c0_75 = arith.constant 0 : index
      %c0_76 = arith.constant 0 : index
      %117 = vector.load %arg2[%c0_74, %c0_75, %c0_76] : memref<1x8x16xf32, #tpu.memory_space<vmem>>, vector<1x8x16xf32>
      %118 = vector.shape_cast %117 : vector<1x8x16xf32> to vector<8x16xf32>
      %c0_77 = arith.constant 0 : index
      %c0_78 = arith.constant 0 : index
      %119 = vector.load %arg19[%c0_77, %c0_78] : memref<8x16xf32, #tpu.memory_space<vmem>>, vector<8x16xf32>
      tpu.vector_store %arg19[%c0_77, %c0_78], %118 {strides = array<i32>} : memref<8x16xf32, #tpu.memory_space<vmem>>, vector<8x16xf32>,
      %c0_79 = arith.constant 0 : index
      %c0_80 = arith.constant 0 : index
      %c0_81 = arith.constant 0 : index
      %120 = vector.load %arg2[%c0_79, %c0_80, %c0_81] : memref<1x8x16xf32, #tpu.memory_space<vmem>>, vector<1x8x16xf32>
      %121 = vector.shape_cast %120 : vector<1x8x16xf32> to vector<8x16xf32>
      %c0_82 = arith.constant 0 : index
      %c0_83 = arith.constant 0 : index
      %c0_84 = arith.constant 0 : index
      %122 = vector.load %arg18[%c0_82, %c0_83, %c0_84] : memref<1x8x16xf32, #tpu.memory_space<vmem>>, vector<1x8x16xf32>
      %123 = vector.shape_cast %122 : vector<1x8x16xf32> to vector<8x16xf32>
      %124 = vector.shape_cast %121 : vector<8x16xf32> to vector<1x8x16xf32>
      tpu.vector_store %arg18[%c0_82, %c0_83, %c0_84], %124 {strides = array<i32>} : memref<1x8x16xf32, #tpu.memory_space<vmem>>, vector<1x8x16xf32>,
    } else {
    }
    %c0 = arith.constant 0 : index
    %c0_1 = arith.constant 0 : index
    %3 = vector.load %arg19[%c0, %c0_1] : memref<8x16xf32, #tpu.memory_space<vmem>>, vector<8x16xf32>
    %cst = arith.constant dense<0.000000e+00> : vector<8xf32>
    %4 = vector.multi_reduction <add>, %3, %cst [1] : vector<8x16xf32> to vector<8xf32>
    %5 = vector.shape_cast %4 : vector<8xf32> to vector<8x1xf32>
    %cst_2 = arith.constant 1.600000e+01 : f32
    %6 = vector.broadcast %cst_2 : f32 to vector<8x1xf32>
    %7 = arith.divf %5, %6 : vector<8x1xf32>
    %8 = vector.broadcast %7 : vector<8x1xf32> to vector<8x16xf32>
    %9 = arith.subf %3, %8 : vector<8x16xf32>
    %10 = arith.mulf %9, %9 : vector<8x16xf32>
    %cst_3 = arith.constant dense<0.000000e+00> : vector<8xf32>
    %11 = vector.multi_reduction <add>, %10, %cst_3 [1] : vector<8x16xf32> to vector<8xf32>
    %12 = vector.shape_cast %11 : vector<8xf32> to vector<8x1xf32>
    %cst_4 = arith.constant 1.600000e+01 : f32
    %13 = vector.broadcast %cst_4 : f32 to vector<8x1xf32>
    %14 = arith.divf %12, %13 : vector<8x1xf32>
    %15 = vector.broadcast %7 : vector<8x1xf32> to vector<8x16xf32>
    %16 = arith.subf %3, %15 : vector<8x16xf32>
    %cst_5 = arith.constant 1.17549435E-38 : f32
    %17 = vector.broadcast %cst_5 : f32 to vector<8x1xf32>
    %18 = arith.addf %14, %17 : vector<8x1xf32>
    %19 = math.rsqrt %18 : vector<8x1xf32>
    %20 = vector.broadcast %19 : vector<8x1xf32> to vector<8x16xf32>
    %21 = arith.mulf %16, %20 : vector<8x16xf32>
    %c0_6 = arith.constant 0 : index
    %c0_7 = arith.constant 0 : index
    %c0_8 = arith.constant 0 : index
    %22 = vector.load %arg3[%c0_6, %c0_7, %c0_8] : memref<1x16x16xbf16, #tpu.memory_space<vmem>>, vector<1x16x16xbf16>
    %23 = vector.shape_cast %22 : vector<1x16x16xbf16> to vector<16x16xbf16>
    %24 = arith.truncf %21 : vector<8x16xf32> to vector<8x16xbf16>
    %cst_9 = arith.constant dense<0.000000e+00> : vector<8x16xf32>
    %25 = tpu.matmul %24, %23, %cst_9 {dimension_numbers = #tpu.dot_dimension_numbers<[1], [0], [0], [1], [0, 0, 1, 1], [], []>} : vector<8x16xbf16>, vector<16x16xbf16>, vector<8x16xf32> -> vector<8x16xf32>
    %c0_10 = arith.constant 0 : index
    %c0_11 = arith.constant 0 : index
    %c0_12 = arith.constant 0 : index
    %26 = vector.load %arg4[%c0_10, %c0_11, %c0_12] : memref<1x1x16xf32, #tpu.memory_space<vmem>>, vector<1x1x16xf32>
    %27 = vector.shape_cast %26 : vector<1x1x16xf32> to vector<1x16xf32>
    %28 = vector.broadcast %27 : vector<1x16xf32> to vector<8x16xf32>
    %29 = arith.addf %25, %28 : vector<8x16xf32>
    %c0_13 = arith.constant 0 : index
    %c0_14 = arith.constant 0 : index
    %c0_15 = arith.constant 0 : index
    %30 = vector.load %arg5[%c0_13, %c0_14, %c0_15] : memref<1x16x16xbf16, #tpu.memory_space<vmem>>, vector<1x16x16xbf16>
    %31 = vector.shape_cast %30 : vector<1x16x16xbf16> to vector<16x16xbf16>
    %32 = arith.truncf %21 : vector<8x16xf32> to vector<8x16xbf16>
    %cst_16 = arith.constant dense<0.000000e+00> : vector<8x16xf32>
    %33 = tpu.matmul %32, %31, %cst_16 {dimension_numbers = #tpu.dot_dimension_numbers<[1], [0], [0], [1], [0, 0, 1, 1], [], []>} : vector<8x16xbf16>, vector<16x16xbf16>, vector<8x16xf32> -> vector<8x16xf32>
    %c0_17 = arith.constant 0 : index
    %c0_18 = arith.constant 0 : index
    %c0_19 = arith.constant 0 : index
    %34 = vector.load %arg6[%c0_17, %c0_18, %c0_19] : memref<1x1x16xf32, #tpu.memory_space<vmem>>, vector<1x1x16xf32>
    %35 = vector.shape_cast %34 : vector<1x1x16xf32> to vector<1x16xf32>
    %36 = vector.broadcast %35 : vector<1x16xf32> to vector<8x16xf32>
    %37 = arith.addf %33, %36 : vector<8x16xf32>
    %cst_20 = arith.constant 0.000000e+00 : f32
    %38 = vector.broadcast %cst_20 : f32 to vector<8x16xf32>
    %39 = arith.maximumf %37, %38 : vector<8x16xf32>
    %40 = math.absf %37 : vector<8x16xf32>
    %cst_21 = arith.constant 0.000000e+00 : f32
    %41 = vector.broadcast %cst_21 : f32 to vector<8x16xf32>
    %42 = arith.subf %41, %40 : vector<8x16xf32>
    %43 = math.exp %42 : vector<8x16xf32>
    %cst_22 = arith.constant 1.000000e+00 : f32
    %44 = vector.broadcast %cst_22 : f32 to vector<8x16xf32>
    %45 = arith.addf %44, %43 : vector<8x16xf32>
    %46 = math.log %45 : vector<8x16xf32>
    %47 = arith.addf %39, %46 : vector<8x16xf32>
    %48 = math.tanh %47 : vector<8x16xf32>
    %49 = arith.mulf %37, %48 : vector<8x16xf32>
    %50 = arith.mulf %29, %49 : vector<8x16xf32>
    %c0_23 = arith.constant 0 : index
    %c0_24 = arith.constant 0 : index
    %c0_25 = arith.constant 0 : index
    %51 = vector.load %arg7[%c0_23, %c0_24, %c0_25] : memref<1x16x16xbf16, #tpu.memory_space<vmem>>, vector<1x16x16xbf16>
    %52 = vector.shape_cast %51 : vector<1x16x16xbf16> to vector<16x16xbf16>
    %53 = arith.truncf %50 : vector<8x16xf32> to vector<8x16xbf16>
    %cst_26 = arith.constant dense<0.000000e+00> : vector<8x16xf32>
    %54 = tpu.matmul %53, %52, %cst_26 {dimension_numbers = #tpu.dot_dimension_numbers<[1], [0], [0], [1], [0, 0, 1, 1], [], []>} : vector<8x16xbf16>, vector<16x16xbf16>, vector<8x16xf32> -> vector<8x16xf32>
    %c0_27 = arith.constant 0 : index
    %c0_28 = arith.constant 0 : index
    %c0_29 = arith.constant 0 : index
    %55 = vector.load %arg8[%c0_27, %c0_28, %c0_29] : memref<1x1x16xf32, #tpu.memory_space<vmem>>, vector<1x1x16xf32>
    %56 = vector.shape_cast %55 : vector<1x1x16xf32> to vector<1x16xf32>
    %57 = vector.broadcast %56 : vector<1x16xf32> to vector<8x16xf32>
    %58 = arith.addf %54, %57 : vector<8x16xf32>
    %c0_30 = arith.constant 0 : index
    %c0_31 = arith.constant 0 : index
    %c0_32 = arith.constant 0 : index
    %59 = vector.load %arg9[%c0_30, %c0_31, %c0_32] : memref<1x16x16xbf16, #tpu.memory_space<vmem>>, vector<1x16x16xbf16>
    %60 = vector.shape_cast %59 : vector<1x16x16xbf16> to vector<16x16xbf16>
    %61 = arith.truncf %21 : vector<8x16xf32> to vector<8x16xbf16>
    %cst_33 = arith.constant dense<0.000000e+00> : vector<8x16xf32>
    %62 = tpu.matmul %61, %60, %cst_33 {dimension_numbers = #tpu.dot_dimension_numbers<[1], [0], [0], [1], [0, 0, 1, 1], [], []>} : vector<8x16xbf16>, vector<16x16xbf16>, vector<8x16xf32> -> vector<8x16xf32>
    %c0_34 = arith.constant 0 : index
    %c0_35 = arith.constant 0 : index
    %c0_36 = arith.constant 0 : index
    %63 = vector.load %arg10[%c0_34, %c0_35, %c0_36] : memref<1x1x16xf32, #tpu.memory_space<vmem>>, vector<1x1x16xf32>
    %64 = vector.shape_cast %63 : vector<1x1x16xf32> to vector<1x16xf32>
    %65 = vector.broadcast %64 : vector<1x16xf32> to vector<8x16xf32>
    %66 = arith.addf %62, %65 : vector<8x16xf32>
    %c0_37 = arith.constant 0 : index
    %c0_38 = arith.constant 0 : index
    %c0_39 = arith.constant 0 : index
    %67 = vector.load %arg11[%c0_37, %c0_38, %c0_39] : memref<1x16x16xbf16, #tpu.memory_space<vmem>>, vector<1x16x16xbf16>
    %68 = vector.shape_cast %67 : vector<1x16x16xbf16> to vector<16x16xbf16>
    %69 = arith.truncf %21 : vector<8x16xf32> to vector<8x16xbf16>
    %cst_40 = arith.constant dense<0.000000e+00> : vector<8x16xf32>
    %70 = tpu.matmul %69, %68, %cst_40 {dimension_numbers = #tpu.dot_dimension_numbers<[1], [0], [0], [1], [0, 0, 1, 1], [], []>} : vector<8x16xbf16>, vector<16x16xbf16>, vector<8x16xf32> -> vector<8x16xf32>
    %c0_41 = arith.constant 0 : index
    %c0_42 = arith.constant 0 : index
    %c0_43 = arith.constant 0 : index
    %71 = vector.load %arg12[%c0_41, %c0_42, %c0_43] : memref<1x1x16xf32, #tpu.memory_space<vmem>>, vector<1x1x16xf32>
    %72 = vector.shape_cast %71 : vector<1x1x16xf32> to vector<1x16xf32>
    %73 = vector.broadcast %72 : vector<1x16xf32> to vector<8x16xf32>
    %74 = arith.addf %70, %73 : vector<8x16xf32>
    %c0_44 = arith.constant 0 : index
    %c0_45 = arith.constant 0 : index
    %c0_46 = arith.constant 0 : index
    %75 = vector.load %arg13[%c0_44, %c0_45, %c0_46] : memref<1x16x16xbf16, #tpu.memory_space<vmem>>, vector<1x16x16xbf16>
    %76 = vector.shape_cast %75 : vector<1x16x16xbf16> to vector<16x16xbf16>
    %77 = arith.truncf %21 : vector<8x16xf32> to vector<8x16xbf16>
    %cst_47 = arith.constant dense<0.000000e+00> : vector<8x16xf32>
    %78 = tpu.matmul %77, %76, %cst_47 {dimension_numbers = #tpu.dot_dimension_numbers<[1], [0], [0], [1], [0, 0, 1, 1], [], []>} : vector<8x16xbf16>, vector<16x16xbf16>, vector<8x16xf32> -> vector<8x16xf32>
    %c0_48 = arith.constant 0 : index
    %c0_49 = arith.constant 0 : index
    %c0_50 = arith.constant 0 : index
    %79 = vector.load %arg14[%c0_48, %c0_49, %c0_50] : memref<1x1x16xf32, #tpu.memory_space<vmem>>, vector<1x1x16xf32>
    %80 = vector.shape_cast %79 : vector<1x1x16xf32> to vector<1x16xf32>
    %81 = vector.broadcast %80 : vector<1x16xf32> to vector<8x16xf32>
    %82 = arith.addf %78, %81 : vector<8x16xf32>
    %83 = math.exp %74 : vector<8x16xf32>
    %c0_51 = arith.constant 0 : index
    %c0_52 = arith.constant 0 : index
    %c0_53 = arith.constant 0 : index
    %84 = vector.load %arg17[%c0_51, %c0_52, %c0_53] : memref<1x8x8xbf16, #tpu.memory_space<vmem>>, vector<1x8x8xbf16>
    %85 = vector.shape_cast %84 : vector<1x8x8xbf16> to vector<8x8xbf16>
    %86 = arith.mulf %83, %82 : vector<8x16xf32>
    %87 = arith.truncf %86 : vector<8x16xf32> to vector<8x16xbf16>
    %cst_54 = arith.constant dense<0.000000e+00> : vector<8x16xf32>
    %88 = tpu.matmul %85, %87, %cst_54 {dimension_numbers = #tpu.dot_dimension_numbers<[1], [0], [0], [1], [0, 0, 1, 1], [], []>} : vector<8x8xbf16>, vector<8x16xbf16>, vector<8x16xf32> -> vector<8x16xf32>
    %89 = arith.truncf %83 : vector<8x16xf32> to vector<8x16xbf16>
    %cst_55 = arith.constant dense<0.000000e+00> : vector<8x16xf32>
    %90 = tpu.matmul %85, %89, %cst_55 {dimension_numbers = #tpu.dot_dimension_numbers<[1], [0], [0], [1], [0, 0, 1, 1], [], []>} : vector<8x8xbf16>, vector<8x16xbf16>, vector<8x16xf32> -> vector<8x16xf32>
    %91 = arith.divf %88, %90 : vector<8x16xf32>
    %cst_56 = arith.constant 5.000000e-01 : f32
    %92 = vector.broadcast %cst_56 : f32 to vector<8x16xf32>
    %93 = arith.mulf %92, %66 : vector<8x16xf32>
    %94 = math.tanh %93 : vector<8x16xf32>
    %cst_57 = arith.constant 1.000000e+00 : f32
    %95 = vector.broadcast %cst_57 : f32 to vector<8x16xf32>
    %96 = arith.addf %94, %95 : vector<8x16xf32>
    %cst_58 = arith.constant 5.000000e-01 : f32
    %97 = vector.broadcast %cst_58 : f32 to vector<8x16xf32>
    %98 = arith.mulf %97, %96 : vector<8x16xf32>
    %99 = arith.mulf %98, %91 : vector<8x16xf32>
    %c0_59 = arith.constant 0 : index
    %c0_60 = arith.constant 0 : index
    %c0_61 = arith.constant 0 : index
    %100 = vector.load %arg15[%c0_59, %c0_60, %c0_61] : memref<1x16x16xbf16, #tpu.memory_space<vmem>>, vector<1x16x16xbf16>
    %101 = vector.shape_cast %100 : vector<1x16x16xbf16> to vector<16x16xbf16>
    %102 = arith.truncf %99 : vector<8x16xf32> to vector<8x16xbf16>
    %cst_62 = arith.constant dense<0.000000e+00> : vector<8x16xf32>
    %103 = tpu.matmul %102, %101, %cst_62 {dimension_numbers = #tpu.dot_dimension_numbers<[1], [0], [0], [1], [0, 0, 1, 1], [], []>} : vector<8x16xbf16>, vector<16x16xbf16>, vector<8x16xf32> -> vector<8x16xf32>
    %c0_63 = arith.constant 0 : index
    %c0_64 = arith.constant 0 : index
    %c0_65 = arith.constant 0 : index
    %104 = vector.load %arg16[%c0_63, %c0_64, %c0_65] : memref<1x1x16xf32, #tpu.memory_space<vmem>>, vector<1x1x16xf32>
    %105 = vector.shape_cast %104 : vector<1x1x16xf32> to vector<1x16xf32>
    %106 = vector.broadcast %105 : vector<1x16xf32> to vector<8x16xf32>
    %107 = arith.addf %103, %106 : vector<8x16xf32>
    %108 = arith.addf %3, %58 : vector<8x16xf32>
    %109 = arith.addf %108, %107 : vector<8x16xf32>
    %c0_66 = arith.constant 0 : index
    %c0_67 = arith.constant 0 : index
    %110 = vector.load %arg19[%c0_66, %c0_67] : memref<8x16xf32, #tpu.memory_space<vmem>>, vector<8x16xf32>
    tpu.vector_store %arg19[%c0_66, %c0_67], %109 {strides = array<i32>} : memref<8x16xf32, #tpu.memory_space<vmem>>, vector<8x16xf32>,
    %c0_68 = arith.constant 0 : index
    %c0_69 = arith.constant 0 : index
    %c0_70 = arith.constant 0 : index
    %111 = vector.load %arg18[%c0_68, %c0_69, %c0_70] : memref<1x8x16xf32, #tpu.memory_space<vmem>>, vector<1x8x16xf32>
    %112 = vector.shape_cast %111 : vector<1x8x16xf32> to vector<8x16xf32>
    %113 = arith.addf %112, %109 : vector<8x16xf32>
    %c0_71 = arith.constant 0 : index
    %c0_72 = arith.constant 0 : index
    %c0_73 = arith.constant 0 : index
    %114 = vector.load %arg18[%c0_71, %c0_72, %c0_73] : memref<1x8x16xf32, #tpu.memory_space<vmem>>, vector<1x8x16xf32>
    %115 = vector.shape_cast %114 : vector<1x8x16xf32> to vector<8x16xf32>
    %116 = vector.shape_cast %113 : vector<8x16xf32> to vector<1x8x16xf32>
    tpu.vector_store %arg18[%c0_71, %c0_72, %c0_73], %116 {strides = array<i32>} : memref<1x8x16xf32, #tpu.memory_space<vmem>>, vector<1x8x16xf32>,
    return
  }
  func.func @transform_0(%arg0: i32, %arg1: i32) -> (i32, i32, i32) {
    %c0_i32 = arith.constant 0 : i32
    %c0_i32_0 = arith.constant 0 : i32
    %c0_i32_1 = arith.constant 0 : i32
    return %arg0, %c0_i32, %c0_i32_0 : i32, i32, i32
  }
  func.func @transform_1(%arg0: i32, %arg1: i32) -> (i32, i32, i32) {
    %c0_i32 = arith.constant 0 : i32
    %c0_i32_0 = arith.constant 0 : i32
    %c0_i32_1 = arith.constant 0 : i32
    return %arg1, %c0_i32, %c0_i32_0 : i32, i32, i32
  }
  func.func @transform_2(%arg0: i32, %arg1: i32) -> (i32, i32, i32) {
    %c0_i32 = arith.constant 0 : i32
    %c0_i32_0 = arith.constant 0 : i32
    %c0_i32_1 = arith.constant 0 : i32
    return %arg1, %c0_i32, %c0_i32_0 : i32, i32, i32
  }
  func.func @transform_3(%arg0: i32, %arg1: i32) -> (i32, i32, i32) {
    %c0_i32 = arith.constant 0 : i32
    %c0_i32_0 = arith.constant 0 : i32
    %c0_i32_1 = arith.constant 0 : i32
    return %arg1, %c0_i32, %c0_i32_0 : i32, i32, i32
  }
  func.func @transform_4(%arg0: i32, %arg1: i32) -> (i32, i32, i32) {
    %c0_i32 = arith.constant 0 : i32
    %c0_i32_0 = arith.constant 0 : i32
    %c0_i32_1 = arith.constant 0 : i32
    return %arg1, %c0_i32, %c0_i32_0 : i32, i32, i32
  }
  func.func @transform_5(%arg0: i32, %arg1: i32) -> (i32, i32, i32) {
    %c0_i32 = arith.constant 0 : i32
    %c0_i32_0 = arith.constant 0 : i32
    %c0_i32_1 = arith.constant 0 : i32
    return %arg1, %c0_i32, %c0_i32_0 : i32, i32, i32
  }
  func.func @transform_6(%arg0: i32, %arg1: i32) -> (i32, i32, i32) {
    %c0_i32 = arith.constant 0 : i32
    %c0_i32_0 = arith.constant 0 : i32
    %c0_i32_1 = arith.constant 0 : i32
    return %arg1, %c0_i32, %c0_i32_0 : i32, i32, i32
  }
  func.func @transform_7(%arg0: i32, %arg1: i32) -> (i32, i32, i32) {
    %c0_i32 = arith.constant 0 : i32
    %c0_i32_0 = arith.constant 0 : i32
    %c0_i32_1 = arith.constant 0 : i32
    return %arg1, %c0_i32, %c0_i32_0 : i32, i32, i32
  }
  func.func @transform_8(%arg0: i32, %arg1: i32) -> (i32, i32, i32) {
    %c0_i32 = arith.constant 0 : i32
    %c0_i32_0 = arith.constant 0 : i32
    %c0_i32_1 = arith.constant 0 : i32
    return %arg1, %c0_i32, %c0_i32_0 : i32, i32, i32
  }
  func.func @transform_9(%arg0: i32, %arg1: i32) -> (i32, i32, i32) {
    %c0_i32 = arith.constant 0 : i32
    %c0_i32_0 = arith.constant 0 : i32
    %c0_i32_1 = arith.constant 0 : i32
    return %arg1, %c0_i32, %c0_i32_0 : i32, i32, i32
  }
  func.func @transform_10(%arg0: i32, %arg1: i32) -> (i32, i32, i32) {
    %c0_i32 = arith.constant 0 : i32
    %c0_i32_0 = arith.constant 0 : i32
    %c0_i32_1 = arith.constant 0 : i32
    return %arg1, %c0_i32, %c0_i32_0 : i32, i32, i32
  }
  func.func @transform_11(%arg0: i32, %arg1: i32) -> (i32, i32, i32) {
    %c0_i32 = arith.constant 0 : i32
    %c0_i32_0 = arith.constant 0 : i32
    %c0_i32_1 = arith.constant 0 : i32
    return %arg1, %c0_i32, %c0_i32_0 : i32, i32, i32
  }
  func.func @transform_12(%arg0: i32, %arg1: i32) -> (i32, i32, i32) {
    %c0_i32 = arith.constant 0 : i32
    %c0_i32_0 = arith.constant 0 : i32
    %c0_i32_1 = arith.constant 0 : i32
    return %arg1, %c0_i32, %c0_i32_0 : i32, i32, i32
  }
  func.func @transform_13(%arg0: i32, %arg1: i32) -> (i32, i32, i32) {
    %c0_i32 = arith.constant 0 : i32
    %c0_i32_0 = arith.constant 0 : i32
    %c0_i32_1 = arith.constant 0 : i32
    return %arg1, %c0_i32, %c0_i32_0 : i32, i32, i32
  }
  func.func @transform_14(%arg0: i32, %arg1: i32) -> (i32, i32, i32) {
    %c0_i32 = arith.constant 0 : i32
    %c0_i32_0 = arith.constant 0 : i32
    %c0_i32_1 = arith.constant 0 : i32
    return %arg1, %c0_i32, %c0_i32_0 : i32, i32, i32
  }
  func.func @transform_15(%arg0: i32, %arg1: i32) -> (i32, i32, i32) {
    %c0_i32 = arith.constant 0 : i32
    %c0_i32_0 = arith.constant 0 : i32
    %c0_i32_1 = arith.constant 0 : i32
    return %arg1, %c0_i32, %c0_i32_0 : i32, i32, i32
  }
  func.func @transform_16(%arg0: i32, %arg1: i32) -> (i32, i32, i32) {
    %c0_i32 = arith.constant 0 : i32
    %c0_i32_0 = arith.constant 0 : i32
    %c0_i32_1 = arith.constant 0 : i32
    return %arg0, %c0_i32, %c0_i32_0 : i32, i32, i32
  }
}

</mosaic_0001>

<llo_original>
// kernel: decoder_forward.4
$region0: #{decoder_forward.4}
  #allocation0 [shape = 'u32[]', space=smem, size = 0x4, offset = 0x4, fixed_abs, tag = 'smem constant byte address 0x4 - core index']
  #allocation1 [shape = 'u32[144,128]{1,0:T(1,128)}', space=vmem, size = 0x12000, scoped, tag = 'internal scratch']
  %s0 = inlined_call_operand.vmem [shape: f32[16,16], index: 0, kind: input, shape index: {}]
  %s1 = inlined_call_operand.vmem [shape: bf16[16,32], index: 1, kind: input, shape index: {}]
  %s2 = inlined_call_operand.vmem [shape: f32[1,32], index: 2, kind: input, shape index: {}]
  %s3 = inlined_call_operand.vmem [shape: f32[16,32], index: 3, kind: output, shape index: {}]
  %s4 = sld [smem:[#allocation0]]
  $region22: #{decoder_forward.4} parent=0
    _
  %s6 = ssub.s32 1, %s4
  %s7 = scalar_select 0, %s6, %s4
  // Predicated region
  $region2: #{decoder_forward.4} parent=0 // pred_check
    _
  $region3: #{decoder_forward.4} parent=0 // pred_check_branch
    %9 = sbr.rel (0) target = $region5
  $region4: #{decoder_forward.4} parent=0 // pred_region
    _
  $region5: #{decoder_forward.4} parent=0 // pred_fallthru
    _
  // Predicated region
  $region6: #{decoder_forward.4} parent=0 // pred_check
    _
  $region7: #{decoder_forward.4} parent=0 // pred_check_branch
    %11 = sbr.rel (0) target = $region9
  $region8: #{decoder_forward.4} parent=0 // pred_region
    _
  $region9: #{decoder_forward.4} parent=0 // pred_fallthru
    _
  // Predicated region
  $region10: #{decoder_forward.4} parent=0 // pred_check
    _
  $region11: #{decoder_forward.4} parent=0 // pred_check_branch
    %13 = sbr.rel (0) target = $region13
  $region12: #{decoder_forward.4} parent=0 // pred_region
    _
  $region13: #{decoder_forward.4} parent=0 // pred_fallthru
    _
  %v15 = vld [vmem:[%s0] sm:$0xff]
  %v16 = vld [vmem:[%s0 + $0x8] sm:$0xff]
  %v17 = vld [vmem:[%s1] sm:$0xf]
  %v18 = vld [vmem:[%s1 + $0x4] sm:$0xf]
  %v19 = vpack.c.bf16 %v16, %v15
  %v20 = vld [vmem:[%s2] sm:$0x1]
  %v22 = vlaneseq
  %v23 = vshrl.u32 %v22, 7
  %v24 = vsub.s32 0, %v23
  %v25 = vrot.slane %v20, %v24
  %v29 = vunpack.c.l.b16 %v17
  %v30 = vunpack.c.l.b16 %v18
  %v31 = vpack.c.b16 %v30, %v29
  %vm33 = vcmask 130048
  %v35 = vsel %vm33, %v19, 0
  %37 = vmatprep.subr.bf16.mxu0 0
  %38 = vmatpush1.bf16.msra.mxu0 0
  %39 = vmatprep.subr.bf16.mxu0 0
  %40 = vmatpush1.bf16.msra.mxu0 0
  %41 = vmatprep.subr.bf16.mxu0 0
  %42 = vmatpush1.bf16.msra.mxu0 0
  %43 = vmatprep.subr.bf16.mxu0 0
  %44 = vmatpush1.bf16.msra.mxu0 0
  %45 = vmatprep.subr.bf16.mxu0 0
  %46 = vmatpush1.bf16.msra.mxu0 0
  %47 = vmatprep.subr.bf16.mxu0 0
  %48 = vmatpush1.bf16.msra.mxu0 0
  %49 = vmatprep.subr.bf16.mxu0 0
  %50 = vmatpush1.bf16.msra.mxu0 0
  %51 = vmatprep.subr.bf16.mxu0 0
  %52 = vmatpush1.bf16.msra.mxu0 %v31
  %53 = vmatprep.subr.bf16.mxu0 0
  %54 = vmatpush2.bf16.msra.mxu0 0
  %55 = vmatprep.subr.bf16.mxu0 0
  %56 = vmatpush2.bf16.msra.mxu0 0
  %57 = vmatprep.subr.bf16.mxu0 0
  %58 = vmatpush2.bf16.msra.mxu0 0
  %59 = vmatprep.subr.bf16.mxu0 0
  %60 = vmatpush2.bf16.msra.mxu0 0
  %61 = vmatprep.subr.bf16.mxu0 0
  %62 = vmatpush2.bf16.msra.mxu0 0
  %63 = vmatprep.subr.bf16.mxu0 0
  %64 = vmatpush2.bf16.msra.mxu0 0
  %65 = vmatprep.subr.bf16.mxu0 0
  %66 = vmatpush2.bf16.msra.mxu0 0
  %67 = vmatprep.subr.bf16.mxu0 0
  %68 = vmatpush2.bf16.msra.mxu0 0
  %69 = vmatprep.mubr.bf16.mxu0 0
  %70 = vmatmul.mubr.bf16.gmra.mxu0 %v35
  %v71 = vpop.f32.mrf.mxu0
  %v72 = vadd.f32 %v25, %v71
  %v73 = vpop.f32.mrf.mxu0
  %v74 = vpop.f32.mrf.mxu0
  %v75 = vadd.f32 %v25, %v74
  %v76 = vpop.f32.mrf.mxu0
  %77 = vdwg.mxu0
  %vm78 = vcmask 261120
  %v79 = vsel %vm78, %v72, 0.0
  %80 = vadd.xlane.f32.xlu0 %v79
  %v81 = vpop.xlane.xlu0 %80
  %v82 = vsel %vm78, %v75, 0.0
  %83 = vadd.xlane.f32.xlu0 %v82
  %v84 = vpop.xlane.xlu0 %83
  %v85 = vrcp.pop 32.0
  %v86 = vmul.f32 %v81, %v85
  %v87 = vmul.f32 %v84, %v85
  %v88 = vsub.f32 %v72, %v86
  %v89 = vsub.f32 %v75, %v87
  %v90 = vmul.f32 %v88, %v88
  %v91 = vmul.f32 %v89, %v89
  %v92 = vsel %vm78, %v90, 0.0
  %93 = vadd.xlane.f32.xlu0 %v92
  %v94 = vpop.xlane.xlu0 %93
  %v95 = vsel %vm78, %v91, 0.0
  %96 = vadd.xlane.f32.xlu0 %v95
  %v97 = vpop.xlane.xlu0 %96
  %v98 = vmul.f32 %v94, %v85
  %v99 = vmul.f32 %v97, %v85
  %v100 = vadd.f32 %v98, 1.1754944e-38
  %v101 = vadd.f32 %v99, 1.1754944e-38
  %v102 = vrsqrt.pop %v100
  %v103 = vrsqrt.pop %v101
  %v104 = vmul.f32 %v88, %v102
  %v105 = vmul.f32 %v89, %v103
  %106 = vst.msk [vmem:[%s3] sm:$0xff] %vm78, %v104
  %107 = vst.msk [vmem:[%s3 + $0x8] sm:$0xff] %vm78, %v105
  // Predicated region
  $region14: #{decoder_forward.4} parent=0 // pred_check
    _
  $region15: #{decoder_forward.4} parent=0 // pred_check_branch
    %109 = sbr.rel (0) target = $region17
  $region16: #{decoder_forward.4} parent=0 // pred_region
    _
  $region17: #{decoder_forward.4} parent=0 // pred_fallthru
    _
  // Predicated region
  $region18: #{decoder_forward.4} parent=0 // pred_check
    _
  $region19: #{decoder_forward.4} parent=0 // pred_check_branch
    %111 = sbr.rel (0) target = $region21
  $region20: #{decoder_forward.4} parent=0 // pred_region
    _
  $region21: #{decoder_forward.4} parent=0 // pred_fallthru
    _

// kernel: decoder_forward.5
$region0: #{decoder_forward.5}
  #allocation0 [shape = 'u32[]', space=smem, size = 0x4, offset = 0x4, fixed_abs, tag = 'smem constant byte address 0x4 - core index']
  #allocation1 [shape = 'u32[144,128]{1,0:T(1,128)}', space=vmem, size = 0x12000, scoped, tag = 'internal scratch']
  #allocation2 [shape = 'f32[8,32]{1,0:T(8,128)}', space=vmem, size = 0x1000, scoped, tag = 'scratch operand']
  %s0 = inlined_call_operand.vmem [shape: f32[2,8,32], index: 0, kind: input, shape index: {}]
  %s1 = inlined_call_operand.vmem [shape: bf16[2,32,32], index: 1, kind: input, shape index: {}]
  %s2 = inlined_call_operand.vmem [shape: f32[2,1,32], index: 2, kind: input, shape index: {}]
  %s3 = inlined_call_operand.vmem [shape: bf16[2,32,32], index: 3, kind: input, shape index: {}]
  %s4 = inlined_call_operand.hbm [shape: f32[2,1,32], index: 4, kind: input, shape index: {}]
  %s5 = inlined_call_operand.vmem [shape: bf16[2,32,32], index: 5, kind: input, shape index: {}]
  %s6 = inlined_call_operand.hbm [shape: f32[2,1,32], index: 6, kind: input, shape index: {}]
  %s7 = inlined_call_operand.vmem [shape: bf16[2,32,32], index: 7, kind: input, shape index: {}]
  %s8 = inlined_call_operand.vmem [shape: f32[2,1,32], index: 8, kind: input, shape index: {}]
  %s9 = inlined_call_operand.vmem [shape: bf16[2,32,32], index: 9, kind: input, shape index: {}]
  %s10 = inlined_call_operand.hbm [shape: f32[2,1,32], index: 10, kind: input, shape index: {}]
  %s11 = inlined_call_operand.vmem [shape: bf16[2,32,32], index: 11, kind: input, shape index: {}]
  %s12 = inlined_call_operand.vmem [shape: f32[2,1,32], index: 12, kind: input, shape index: {}]
  %s13 = inlined_call_operand.vmem [shape: bf16[2,32,32], index: 13, kind: input, shape index: {}]
  %s14 = inlined_call_operand.hbm [shape: f32[2,1,32], index: 14, kind: input, shape index: {}]
  %s15 = inlined_call_operand.vmem [shape: bf16[2,8,8], index: 15, kind: input, shape index: {}]
  %s16 = inlined_call_operand.vmem [shape: f32[2,8,32], index: 16, kind: output, shape index: {}]
  %s17 = sld [smem:[#allocation0]]
  $region117: #{decoder_forward.5} parent=0
    _
  %s19 = ssub.s32 1, %s17
  %s20 = scalar_select 0, %s19, %s17
  $region1: #{decoder_forward.5} parent=0
    #allocation3 [shape = 'u8[1024]{0}', space=vmem, size = 0x400, scoped, tag = 'input window, operand 4']
    #allocation4 [shape = 's32[2]{0}', space=sflag, size = 0x8, scoped, tag = 'scoped memory for decoder_forward.5']
    #allocation5 [shape = 'u8[1024]{0}', space=vmem, size = 0x400, scoped, tag = 'input window, operand 6']
    #allocation6 [shape = 's32[2]{0}', space=sflag, size = 0x8, scoped, tag = 'scoped memory for decoder_forward.5']
    #allocation7 [shape = 'u8[1024]{0}', space=vmem, size = 0x400, scoped, tag = 'input window, operand 10']
    #allocation8 [shape = 'u8[1024]{0}', space=vmem, size = 0x400, scoped, tag = 'input window, operand 14']
    #allocation9 [shape = 's32[2]{0}', space=sflag, size = 0x8, scoped, tag = 'scoped memory for decoder_forward.5']
    %21 = vsyncpa [#allocation4], 0
    %s22 = scalar_lea.sflag [#allocation4], 1
    %23 = vsyncpa %s22, 0
    %24 = vsyncpa [#allocation6], 0
    %s25 = scalar_lea.sflag [#allocation6], 1
    %26 = vsyncpa %s25, 0
    %27 = vsyncpa [#allocation9], 0
    %s28 = scalar_lea.sflag [#allocation9], 1
    %29 = vsyncpa %s28, 0
    loop: start=0, step=1, limit=6
    $region2: #{decoder_forward.5} parent=1 // loop_pre_header
      _
    $region3: #{decoder_forward.5} parent=1 // loop_header
      %s31 = sphi 0, %s35
      %p32 = scmp.ge.s32.totalorder %s31, 6
      %s38 = sphi 0, %s50
      %s39 = sphi 0, %s46
      %s40 = sphi 0, %s38
      %s41 = sphi 0, %s39
      %s42 = sphi 0, %s40
      %s43 = sphi 0, %s41
      %s53 = sphi 0, %s55
      %s56 = sphi 0, %s53
      %s57 = sphi 0, %s56
      %s73 = sphi 0, %s57
      %s79 = sphi 0, %s81
      %s82 = sphi 0, %s79
      %s83 = sphi 0, %s82
      %s99 = sphi 0, %s83
      %s105 = sphi 0, %s107
      %s108 = sphi 0, %s105
      %s109 = sphi 0, %s108
      %s125 = sphi 0, %s109
      %s131 = sphi 0, %s133
      %s134 = sphi 0, %s131
      %s135 = sphi 0, %s134
      %s151 = sphi 0, %s135
      %s157 = sphi 0, %s159
      %s160 = sphi 0, %s157
      %s161 = sphi 0, %s160
      %s177 = sphi 0, %s161
      %s183 = sphi 0, %s185
      %s186 = sphi 0, %s183
      %s187 = sphi 0, %s186
      %s203 = sphi 0, %s187
      %s209 = sphi 0, %s211
      %s212 = sphi 0, %s209
      %s213 = sphi 0, %s212
      %s229 = sphi 0, %s213
      %s235 = sphi 0, %s237
      %s238 = sphi 0, %s235
      %s239 = sphi 0, %s238
      %s255 = sphi 0, %s239
      %s261 = sphi 0, %s263
      %s264 = sphi 0, %s261
      %s265 = sphi 0, %s264
      %s281 = sphi 0, %s265
      %s287 = sphi 0, %s289
      %s290 = sphi 0, %s287
      %s291 = sphi 0, %s290
      %s307 = sphi 0, %s291
      %s313 = sphi 0, %s315
      %s316 = sphi 0, %s313
      %s317 = sphi 0, %s316
      %s333 = sphi 0, %s317
      %s339 = sphi 0, %s341
      %s342 = sphi 0, %s339
      %s343 = sphi 0, %s342
      %s359 = sphi 0, %s343
      %s365 = sphi 0, %s367
      %s368 = sphi 0, %s365
      %s369 = sphi 0, %s368
      %s385 = sphi 0, %s369
      %s391 = sphi 0, %s393
      %s394 = sphi 0, %s391
      %s395 = sphi 0, %s394
      %s411 = sphi 0, %s395
      %s417 = sphi 0, %s419
      %s420 = sphi 0, %s417
      %s421 = sphi 0, %s420
      %s437 = sphi 0, %s421
      %s443 = sphi 0, %s445
      %s446 = sphi 0, %s443
      %s447 = sphi 0, %s446
      %s463 = sphi 0, %s447
      %s469 = sphi 0, %s471
      %s472 = sphi 0, %s469
      %s473 = sphi 0, %s472
      %s489 = sphi 0, %s473
    $region4: #{decoder_forward.5} parent=1 // loop_header_branch
      %34 = sbr.rel (%p32) target = $region8
    $region5: #{decoder_forward.5} parent=1 // loop_body
      %s36 = ssub.s32 %s31, 1
      %s37 = ssub.s32 %s31, 2
      %s44 = sadd.s32 1, %s39
      %p45 = scmp.ge.s32.totalorder %s44, 2
      %s46 = scalar_select %p45, 0, %s44
      %s47 = sadd.s32 1, %s38
      %s48 = scalar_select %p45, %s47, %s38
      %p49 = scmp.ge.s32.totalorder %s48, 2
      %s50 = scalar_select %p49, 0, %s48
      %s51 = ssub.s32 %s38, %s50
      %p52 = scmp.eq.s32.totalorder %s51, 0
      %s54 = sadd.s32 %s53, 1
      %s55 = scalar_select %p52, %s53, %s54
      %p58 = pneg %p52
      %p59 = scmp.eq.s32.totalorder %s31, 3
      %p60 = por %p58, %p59
      %p61 = scmp.ne.s32.totalorder %s53, %s56
      %p62 = scmp.eq.s32.totalorder %s31, 0
      %p63 = por %p61, %p62
      %p64 = scmp.ne.s32.totalorder %s53, %s56
      %p65 = scmp.eq.s32.totalorder %s36, 3
      %p66 = por %p64, %p65
      %p67 = scmp.ne.s32.totalorder %s56, %s57
      %p68 = scmp.eq.s32.totalorder %s36, 0
      %p69 = por %p67, %p68
      %p70 = scmp.ne.s32.totalorder %s56, %s57
      %p71 = scmp.eq.s32.totalorder %s37, 3
      %p72 = por %p70, %p71
      %p74 = scmp.ne.s32.totalorder %s57, %s73
      %p75 = scmp.eq.s32.totalorder %s37, 0
      %p76 = por %p74, %p75
      %s77 = ssub.s32 %s39, %s46
      %p78 = scmp.eq.s32.totalorder %s77, 0
      %s80 = sadd.s32 %s79, 1
      %s81 = scalar_select %p78, %s79, %s80
      %p84 = pneg %p78
      %p85 = scmp.eq.s32.totalorder %s31, 3
      %p86 = por %p84, %p85
      %p87 = scmp.ne.s32.totalorder %s79, %s82
      %p88 = scmp.eq.s32.totalorder %s31, 0
      %p89 = por %p87, %p88
      %p90 = scmp.ne.s32.totalorder %s79, %s82
      %p91 = scmp.eq.s32.totalorder %s36, 3
      %p92 = por %p90, %p91
      %p93 = scmp.ne.s32.totalorder %s82, %s83
      %p94 = scmp.eq.s32.totalorder %s36, 0
      %p95 = por %p93, %p94
      %p96 = scmp.ne.s32.totalorder %s82, %s83
      %p97 = scmp.eq.s32.totalorder %s37, 3
      %p98 = por %p96, %p97
      %p100 = scmp.ne.s32.totalorder %s83, %s99
      %p101 = scmp.eq.s32.totalorder %s37, 0
      %p102 = por %p100, %p101
      %s103 = ssub.s32 %s39, %s46
      %p104 = scmp.eq.s32.totalorder %s103, 0
      %s106 = sadd.s32 %s105, 1
      %s107 = scalar_select %p104, %s105, %s106
      %p110 = pneg %p104
      %p111 = scmp.eq.s32.totalorder %s31, 3
      %p112 = por %p110, %p111
      %p113 = scmp.ne.s32.totalorder %s105, %s108
      %p114 = scmp.eq.s32.totalorder %s31, 0
      %p115 = por %p113, %p114
      %p116 = scmp.ne.s32.totalorder %s105, %s108
      %p117 = scmp.eq.s32.totalorder %s36, 3
      %p118 = por %p116, %p117
      %p119 = scmp.ne.s32.totalorder %s108, %s109
      %p120 = scmp.eq.s32.totalorder %s36, 0
      %p121 = por %p119, %p120
      %p122 = scmp.ne.s32.totalorder %s108, %s109
      %p123 = scmp.eq.s32.totalorder %s37, 3
      %p124 = por %p122, %p123
      %p126 = scmp.ne.s32.totalorder %s109, %s125
      %p127 = scmp.eq.s32.totalorder %s37, 0
      %p128 = por %p126, %p127
      %s129 = ssub.s32 %s39, %s46
      %p130 = scmp.eq.s32.totalorder %s129, 0
      %s132 = sadd.s32 %s131, 1
      %s133 = scalar_select %p130, %s131, %s132
      %p136 = pneg %p130
      %p137 = scmp.eq.s32.totalorder %s31, 3
      %p138 = por %p136, %p137
      %p139 = scmp.ne.s32.totalorder %s131, %s134
      %p140 = scmp.eq.s32.totalorder %s31, 0
      %p141 = por %p139, %p140
      %p142 = scmp.ne.s32.totalorder %s131, %s134
      %p143 = scmp.eq.s32.totalorder %s36, 3
      %p144 = por %p142, %p143
      %p145 = scmp.ne.s32.totalorder %s134, %s135
      %p146 = scmp.eq.s32.totalorder %s36, 0
      %p147 = por %p145, %p146
      %p148 = scmp.ne.s32.totalorder %s134, %s135
      %p149 = scmp.eq.s32.totalorder %s37, 3
      %p150 = por %p148, %p149
      %p152 = scmp.ne.s32.totalorder %s135, %s151
      %p153 = scmp.eq.s32.totalorder %s37, 0
      %p154 = por %p152, %p153
      %s155 = ssub.s32 %s39, %s46
      %p156 = scmp.eq.s32.totalorder %s155, 0
      %s158 = sadd.s32 %s157, 1
      %s159 = scalar_select %p156, %s157, %s158
      %p162 = pneg %p156
      %p163 = scmp.eq.s32.totalorder %s31, 3
      %p164 = por %p162, %p163
      %p165 = scmp.ne.s32.totalorder %s157, %s160
      %p166 = scmp.eq.s32.totalorder %s31, 0
      %p167 = por %p165, %p166
      %p168 = scmp.ne.s32.totalorder %s157, %s160
      %p169 = scmp.eq.s32.totalorder %s36, 3
      %p170 = por %p168, %p169
      %p171 = scmp.ne.s32.totalorder %s160, %s161
      %p172 = scmp.eq.s32.totalorder %s36, 0
      %p173 = por %p171, %p172
      %p174 = scmp.ne.s32.totalorder %s160, %s161
      %p175 = scmp.eq.s32.totalorder %s37, 3
      %p176 = por %p174, %p175
      %p178 = scmp.ne.s32.totalorder %s161, %s177
      %p179 = scmp.eq.s32.totalorder %s37, 0
      %p180 = por %p178, %p179
      %s181 = ssub.s32 %s39, %s46
      %p182 = scmp.eq.s32.totalorder %s181, 0
      %s184 = sadd.s32 %s183, 1
      %s185 = scalar_select %p182, %s183, %s184
      %p188 = pneg %p182
      %p189 = scmp.eq.s32.totalorder %s31, 3
      %p190 = por %p188, %p189
      %p191 = scmp.ne.s32.totalorder %s183, %s186
      %p192 = scmp.eq.s32.totalorder %s31, 0
      %p193 = por %p191, %p192
      %p194 = scmp.ne.s32.totalorder %s183, %s186
      %p195 = scmp.eq.s32.totalorder %s36, 3
      %p196 = por %p194, %p195
      %p197 = scmp.ne.s32.totalorder %s186, %s187
      %p198 = scmp.eq.s32.totalorder %s36, 0
      %p199 = por %p197, %p198
      %p200 = scmp.ne.s32.totalorder %s186, %s187
      %p201 = scmp.eq.s32.totalorder %s37, 3
      %p202 = por %p200, %p201
      %p204 = scmp.ne.s32.totalorder %s187, %s203
      %p205 = scmp.eq.s32.totalorder %s37, 0
      %p206 = por %p204, %p205
      %s207 = ssub.s32 %s39, %s46
      %p208 = scmp.eq.s32.totalorder %s207, 0
      %s210 = sadd.s32 %s209, 1
      %s211 = scalar_select %p208, %s209, %s210
      %p214 = pneg %p208
      %p215 = scmp.eq.s32.totalorder %s31, 3
      %p216 = por %p214, %p215
      %p217 = scmp.ne.s32.totalorder %s209, %s212
      %p218 = scmp.eq.s32.totalorder %s31, 0
      %p219 = por %p217, %p218
      %p220 = scmp.ne.s32.totalorder %s209, %s212
      %p221 = scmp.eq.s32.totalorder %s36, 3
      %p222 = por %p220, %p221
      %p223 = scmp.ne.s32.totalorder %s212, %s213
      %p224 = scmp.eq.s32.totalorder %s36, 0
      %p225 = por %p223, %p224
      %p226 = scmp.ne.s32.totalorder %s212, %s213
      %p227 = scmp.eq.s32.totalorder %s37, 3
      %p228 = por %p226, %p227
      %p230 = scmp.ne.s32.totalorder %s213, %s229
      %p231 = scmp.eq.s32.totalorder %s37, 0
      %p232 = por %p230, %p231
      %s233 = ssub.s32 %s39, %s46
      %p234 = scmp.eq.s32.totalorder %s233, 0
      %s236 = sadd.s32 %s235, 1
      %s237 = scalar_select %p234, %s235, %s236
      %p240 = pneg %p234
      %p241 = scmp.eq.s32.totalorder %s31, 3
      %p242 = por %p240, %p241
      %p243 = scmp.ne.s32.totalorder %s235, %s238
      %p244 = scmp.eq.s32.totalorder %s31, 0
      %p245 = por %p243, %p244
      %p246 = scmp.ne.s32.totalorder %s235, %s238
      %p247 = scmp.eq.s32.totalorder %s36, 3
      %p248 = por %p246, %p247
      %p249 = scmp.ne.s32.totalorder %s238, %s239
      %p250 = scmp.eq.s32.totalorder %s36, 0
      %p251 = por %p249, %p250
      %p252 = scmp.ne.s32.totalorder %s238, %s239
      %p253 = scmp.eq.s32.totalorder %s37, 3
      %p254 = por %p252, %p253
      %p256 = scmp.ne.s32.totalorder %s239, %s255
      %p257 = scmp.eq.s32.totalorder %s37, 0
      %p258 = por %p256, %p257
      %s259 = ssub.s32 %s39, %s46
      %p260 = scmp.eq.s32.totalorder %s259, 0
      %s262 = sadd.s32 %s261, 1
      %s263 = scalar_select %p260, %s261, %s262
      %p266 = pneg %p260
      %p267 = scmp.eq.s32.totalorder %s31, 3
      %p268 = por %p266, %p267
      %p269 = scmp.ne.s32.totalorder %s261, %s264
      %p270 = scmp.eq.s32.totalorder %s31, 0
      %p271 = por %p269, %p270
      %p272 = scmp.ne.s32.totalorder %s261, %s264
      %p273 = scmp.eq.s32.totalorder %s36, 3
      %p274 = por %p272, %p273
      %p275 = scmp.ne.s32.totalorder %s264, %s265
      %p276 = scmp.eq.s32.totalorder %s36, 0
      %p277 = por %p275, %p276
      %p278 = scmp.ne.s32.totalorder %s264, %s265
      %p279 = scmp.eq.s32.totalorder %s37, 3
      %p280 = por %p278, %p279
      %p282 = scmp.ne.s32.totalorder %s265, %s281
      %p283 = scmp.eq.s32.totalorder %s37, 0
      %p284 = por %p282, %p283
      %s285 = ssub.s32 %s39, %s46
      %p286 = scmp.eq.s32.totalorder %s285, 0
      %s288 = sadd.s32 %s287, 1
      %s289 = scalar_select %p286, %s287, %s288
      %p292 = pneg %p286
      %p293 = scmp.eq.s32.totalorder %s31, 3
      %p294 = por %p292, %p293
      %p295 = scmp.ne.s32.totalorder %s287, %s290
      %p296 = scmp.eq.s32.totalorder %s31, 0
      %p297 = por %p295, %p296
      %p298 = scmp.ne.s32.totalorder %s287, %s290
      %p299 = scmp.eq.s32.totalorder %s36, 3
      %p300 = por %p298, %p299
      %p301 = scmp.ne.s32.totalorder %s290, %s291
      %p302 = scmp.eq.s32.totalorder %s36, 0
      %p303 = por %p301, %p302
      %p304 = scmp.ne.s32.totalorder %s290, %s291
      %p305 = scmp.eq.s32.totalorder %s37, 3
      %p306 = por %p304, %p305
      %p308 = scmp.ne.s32.totalorder %s291, %s307
      %p309 = scmp.eq.s32.totalorder %s37, 0
      %p310 = por %p308, %p309
      %s311 = ssub.s32 %s39, %s46
      %p312 = scmp.eq.s32.totalorder %s311, 0
      %s314 = sadd.s32 %s313, 1
      %s315 = scalar_select %p312, %s313, %s314
      %p318 = pneg %p312
      %p319 = scmp.eq.s32.totalorder %s31, 3
      %p320 = por %p318, %p319
      %p321 = scmp.ne.s32.totalorder %s313, %s316
      %p322 = scmp.eq.s32.totalorder %s31, 0
      %p323 = por %p321, %p322
      %p324 = scmp.ne.s32.totalorder %s313, %s316
      %p325 = scmp.eq.s32.totalorder %s36, 3
      %p326 = por %p324, %p325
      %p327 = scmp.ne.s32.totalorder %s316, %s317
      %p328 = scmp.eq.s32.totalorder %s36, 0
      %p329 = por %p327, %p328
      %p330 = scmp.ne.s32.totalorder %s316, %s317
      %p331 = scmp.eq.s32.totalorder %s37, 3
      %p332 = por %p330, %p331
      %p334 = scmp.ne.s32.totalorder %s317, %s333
      %p335 = scmp.eq.s32.totalorder %s37, 0
      %p336 = por %p334, %p335
      %s337 = ssub.s32 %s39, %s46
      %p338 = scmp.eq.s32.totalorder %s337, 0
      %s340 = sadd.s32 %s339, 1
      %s341 = scalar_select %p338, %s339, %s340
      %p344 = pneg %p338
      %p345 = scmp.eq.s32.totalorder %s31, 3
      %p346 = por %p344, %p345
      %p347 = scmp.ne.s32.totalorder %s339, %s342
      %p348 = scmp.eq.s32.totalorder %s31, 0
      %p349 = por %p347, %p348
      %p350 = scmp.ne.s32.totalorder %s339, %s342
      %p351 = scmp.eq.s32.totalorder %s36, 3
      %p352 = por %p350, %p351
      %p353 = scmp.ne.s32.totalorder %s342, %s343
      %p354 = scmp.eq.s32.totalorder %s36, 0
      %p355 = por %p353, %p354
      %p356 = scmp.ne.s32.totalorder %s342, %s343
      %p357 = scmp.eq.s32.totalorder %s37, 3
      %p358 = por %p356, %p357
      %p360 = scmp.ne.s32.totalorder %s343, %s359
      %p361 = scmp.eq.s32.totalorder %s37, 0
      %p362 = por %p360, %p361
      %s363 = ssub.s32 %s39, %s46
      %p364 = scmp.eq.s32.totalorder %s363, 0
      %s366 = sadd.s32 %s365, 1
      %s367 = scalar_select %p364, %s365, %s366
      %p370 = pneg %p364
      %p371 = scmp.eq.s32.totalorder %s31, 3
      %p372 = por %p370, %p371
      %p373 = scmp.ne.s32.totalorder %s365, %s368
      %p374 = scmp.eq.s32.totalorder %s31, 0
      %p375 = por %p373, %p374
      %p376 = scmp.ne.s32.totalorder %s365, %s368
      %p377 = scmp.eq.s32.totalorder %s36, 3
      %p378 = por %p376, %p377
      %p379 = scmp.ne.s32.totalorder %s368, %s369
      %p380 = scmp.eq.s32.totalorder %s36, 0
      %p381 = por %p379, %p380
      %p382 = scmp.ne.s32.totalorder %s368, %s369
      %p383 = scmp.eq.s32.totalorder %s37, 3
      %p384 = por %p382, %p383
      %p386 = scmp.ne.s32.totalorder %s369, %s385
      %p387 = scmp.eq.s32.totalorder %s37, 0
      %p388 = por %p386, %p387
      %s389 = ssub.s32 %s39, %s46
      %p390 = scmp.eq.s32.totalorder %s389, 0
      %s392 = sadd.s32 %s391, 1
      %s393 = scalar_select %p390, %s391, %s392
      %p396 = pneg %p390
      %p397 = scmp.eq.s32.totalorder %s31, 3
      %p398 = por %p396, %p397
      %p399 = scmp.ne.s32.totalorder %s391, %s394
      %p400 = scmp.eq.s32.totalorder %s31, 0
      %p401 = por %p399, %p400
      %p402 = scmp.ne.s32.totalorder %s391, %s394
      %p403 = scmp.eq.s32.totalorder %s36, 3
      %p404 = por %p402, %p403
      %p405 = scmp.ne.s32.totalorder %s394, %s395
      %p406 = scmp.eq.s32.totalorder %s36, 0
      %p407 = por %p405, %p406
      %p408 = scmp.ne.s32.totalorder %s394, %s395
      %p409 = scmp.eq.s32.totalorder %s37, 3
      %p410 = por %p408, %p409
      %p412 = scmp.ne.s32.totalorder %s395, %s411
      %p413 = scmp.eq.s32.totalorder %s37, 0
      %p414 = por %p412, %p413
      %s415 = ssub.s32 %s39, %s46
      %p416 = scmp.eq.s32.totalorder %s415, 0
      %s418 = sadd.s32 %s417, 1
      %s419 = scalar_select %p416, %s417, %s418
      %p422 = pneg %p416
      %p423 = scmp.eq.s32.totalorder %s31, 3
      %p424 = por %p422, %p423
      %p425 = scmp.ne.s32.totalorder %s417, %s420
      %p426 = scmp.eq.s32.totalorder %s31, 0
      %p427 = por %p425, %p426
      %p428 = scmp.ne.s32.totalorder %s417, %s420
      %p429 = scmp.eq.s32.totalorder %s36, 3
      %p430 = por %p428, %p429
      %p431 = scmp.ne.s32.totalorder %s420, %s421
      %p432 = scmp.eq.s32.totalorder %s36, 0
      %p433 = por %p431, %p432
      %p434 = scmp.ne.s32.totalorder %s420, %s421
      %p435 = scmp.eq.s32.totalorder %s37, 3
      %p436 = por %p434, %p435
      %p438 = scmp.ne.s32.totalorder %s421, %s437
      %p439 = scmp.eq.s32.totalorder %s37, 0
      %p440 = por %p438, %p439
      %s441 = ssub.s32 %s39, %s46
      %p442 = scmp.eq.s32.totalorder %s441, 0
      %s444 = sadd.s32 %s443, 1
      %s445 = scalar_select %p442, %s443, %s444
      %p448 = pneg %p442
      %p449 = scmp.eq.s32.totalorder %s31, 3
      %p450 = por %p448, %p449
      %p451 = scmp.ne.s32.totalorder %s443, %s446
      %p452 = scmp.eq.s32.totalorder %s31, 0
      %p453 = por %p451, %p452
      %p454 = scmp.ne.s32.totalorder %s443, %s446
      %p455 = scmp.eq.s32.totalorder %s36, 3
      %p456 = por %p454, %p455
      %p457 = scmp.ne.s32.totalorder %s446, %s447
      %p458 = scmp.eq.s32.totalorder %s36, 0
      %p459 = por %p457, %p458
      %p460 = scmp.ne.s32.totalorder %s446, %s447
      %p461 = scmp.eq.s32.totalorder %s37, 3
      %p462 = por %p460, %p461
      %p464 = scmp.ne.s32.totalorder %s447, %s463
      %p465 = scmp.eq.s32.totalorder %s37, 0
      %p466 = por %p464, %p465
      %s467 = ssub.s32 %s38, %s50
      %p468 = scmp.eq.s32.totalorder %s467, 0
      %s470 = sadd.s32 %s469, 1
      %s471 = scalar_select %p468, %s469, %s470
      %p474 = pneg %p468
      %p475 = scmp.eq.s32.totalorder %s31, 3
      %p476 = por %p474, %p475
      %p477 = scmp.ne.s32.totalorder %s469, %s472
      %p478 = scmp.eq.s32.totalorder %s31, 0
      %p479 = por %p477, %p478
      %p480 = scmp.ne.s32.totalorder %s469, %s472
      %p481 = scmp.eq.s32.totalorder %s36, 3
      %p482 = por %p480, %p481
      %p483 = scmp.ne.s32.totalorder %s472, %s473
      %p484 = scmp.eq.s32.totalorder %s36, 0
      %p485 = por %p483, %p484
      %p486 = scmp.ne.s32.totalorder %s472, %s473
      %p487 = scmp.eq.s32.totalorder %s37, 3
      %p488 = por %p486, %p487
      %p490 = scmp.ne.s32.totalorder %s473, %s489
      %p491 = scmp.eq.s32.totalorder %s37, 0
      %p492 = por %p490, %p491
      %p493 = scmp.le.s32.totalorder 1, %s31
      %p494 = scmp.lt.s32.totalorder %s31, 5
      %p495 = pnand %p493, %p494
      %p496 = pneg %p495
      // Predicated region
      $region9: #{decoder_forward.5} parent=5 // pred_check
        _
      $region10: #{decoder_forward.5} parent=5 // pred_check_branch
        %498 = sbr.rel (%p495) target = $region12
      $region11: #{decoder_forward.5} parent=5 // pred_region
        %s499 = ssub.s32 %s31, 1
      $region12: #{decoder_forward.5} parent=5 // pred_fallthru
        _
      %p500 = scmp.lt.s32.totalorder %s31, 4
      // Predicated region
      $region13: #{decoder_forward.5} parent=5 // pred_check
        %p501 = pneg %p500
      $region14: #{decoder_forward.5} parent=5 // pred_check_branch
        %503 = sbr.rel (%p501) target = $region16
      $region15: #{decoder_forward.5} parent=5 // pred_region
        // Predicated region
        $region17: #{decoder_forward.5} parent=15 // pred_check
          %p504 = pneg %p63
        $region18: #{decoder_forward.5} parent=15 // pred_check_branch
          %506 = sbr.rel (%p504) target = $region20
        $region19: #{decoder_forward.5} parent=15 // pred_region
          %p507 = scmp.lt.s32.totalorder %s38, 1
          %s508 = scalar_select %p507, %s38, 1
          %s509 = smul.addr %s508, 8
          %s510 = scalar_lea.vmem %s0, %s509
        $region20: #{decoder_forward.5} parent=15 // pred_fallthru
          _
        // Predicated region
        $region21: #{decoder_forward.5} parent=15 // pred_check
          %p511 = pneg %p89
        $region22: #{decoder_forward.5} parent=15 // pred_check_branch
          %513 = sbr.rel (%p511) target = $region24
        $region23: #{decoder_forward.5} parent=15 // pred_region
          %p514 = scmp.lt.s32.totalorder %s39, 1
          %s515 = scalar_select %p514, %s39, 1
          %s516 = smul.addr %s515, 4
          %s517 = smul.addr %s516, 4
          %s518 = scalar_lea.vmem %s1, %s517
        $region24: #{decoder_forward.5} parent=15 // pred_fallthru
          _
        // Predicated region
        $region25: #{decoder_forward.5} parent=15 // pred_check
          %p519 = pneg %p115
        $region26: #{decoder_forward.5} parent=15 // pred_check_branch
          %521 = sbr.rel (%p519) target = $region28
        $region27: #{decoder_forward.5} parent=15 // pred_region
          %p522 = scmp.lt.s32.totalorder %s39, 1
          %s523 = scalar_select %p522, %s39, 1
          %s524 = scalar_lea.vmem %s2, %s523
        $region28: #{decoder_forward.5} parent=15 // pred_fallthru
          _
        // Predicated region
        $region29: #{decoder_forward.5} parent=15 // pred_check
          %p525 = pneg %p141
        $region30: #{decoder_forward.5} parent=15 // pred_check_branch
          %527 = sbr.rel (%p525) target = $region32
        $region31: #{decoder_forward.5} parent=15 // pred_region
          %p528 = scmp.lt.s32.totalorder %s39, 1
          %s529 = scalar_select %p528, %s39, 1
          %s530 = smul.addr %s529, 4
          %s531 = smul.addr %s530, 4
          %s532 = scalar_lea.vmem %s3, %s531
        $region32: #{decoder_forward.5} parent=15 // pred_fallthru
          _
        // Predicated region
        $region33: #{decoder_forward.5} parent=15 // pred_check
          %p533 = pneg %p167
        $region34: #{decoder_forward.5} parent=15 // pred_check_branch
          %535 = sbr.rel (%p533) target = $region36
        $region35: #{decoder_forward.5} parent=15 // pred_region
          %s536 = sand.u32 %s157, 1
          %s537 = scalar_lea.sflag [#allocation4], %s536
          %s538 = sand.u32 %s157, 1
          %s539 = scalar_lea.vmem [#allocation3], %s538
          %s541 = ssub.s32 16, 16
          %542 = vsyncadd %s537, %s541
          %s543 = smul.addr %s39, 16
          %s544 = scalar_lea.hbm %s4, %s543
          %s546 = sshll.u32 %s539, 4
          %s547 = int_to_ptr.vmem [resolvable:$true] %s546
          %549 = dma.hbm_to_vmem [thread:$0]  %s544, 16, %s547, %s537
        $region36: #{decoder_forward.5} parent=15 // pred_fallthru
          _
        // Predicated region
        $region37: #{decoder_forward.5} parent=15 // pred_check
          %p550 = pneg %p193
        $region38: #{decoder_forward.5} parent=15 // pred_check_branch
          %552 = sbr.rel (%p550) target = $region40
        $region39: #{decoder_forward.5} parent=15 // pred_region
          %p553 = scmp.lt.s32.totalorder %s39, 1
          %s554 = scalar_select %p553, %s39, 1
          %s555 = smul.addr %s554, 4
          %s556 = smul.addr %s555, 4
          %s557 = scalar_lea.vmem %s5, %s556
        $region40: #{decoder_forward.5} parent=15 // pred_fallthru
          _
        // Predicated region
        $region41: #{decoder_forward.5} parent=15 // pred_check
          %p558 = pneg %p219
        $region42: #{decoder_forward.5} parent=15 // pred_check_branch
          %560 = sbr.rel (%p558) target = $region44
        $region43: #{decoder_forward.5} parent=15 // pred_region
          %s561 = sand.u32 %s31, 1
          %s562 = scalar_lea.sflag [#allocation6], %s561
          %s563 = sand.u32 %s209, 1
          %s564 = scalar_lea.vmem [#allocation5], %s563
          %s566 = ssub.s32 16, 16
          %567 = vsyncadd %s562, %s566
          %s568 = smul.addr %s39, 16
          %s569 = scalar_lea.hbm %s6, %s568
          %s571 = sshll.u32 %s564, 4
          %s572 = int_to_ptr.vmem [resolvable:$true] %s571
          %574 = dma.hbm_to_vmem [thread:$0]  %s569, 16, %s572, %s562
        $region44: #{decoder_forward.5} parent=15 // pred_fallthru
          _
        // Predicated region
        $region45: #{decoder_forward.5} parent=15 // pred_check
          %p575 = pneg %p245
        $region46: #{decoder_forward.5} parent=15 // pred_check_branch
          %577 = sbr.rel (%p575) target = $region48
        $region47: #{decoder_forward.5} parent=15 // pred_region
          %p578 = scmp.lt.s32.totalorder %s39, 1
          %s579 = scalar_select %p578, %s39, 1
          %s580 = smul.addr %s579, 4
          %s581 = smul.addr %s580, 4
          %s582 = scalar_lea.vmem %s7, %s581
        $region48: #{decoder_forward.5} parent=15 // pred_fallthru
          _
        // Predicated region
        $region49: #{decoder_forward.5} parent=15 // pred_check
          %p583 = pneg %p271
        $region50: #{decoder_forward.5} parent=15 // pred_check_branch
          %585 = sbr.rel (%p583) target = $region52
        $region51: #{decoder_forward.5} parent=15 // pred_region
          %p586 = scmp.lt.s32.totalorder %s39, 1
          %s587 = scalar_select %p586, %s39, 1
          %s588 = scalar_lea.vmem %s8, %s587
        $region52: #{decoder_forward.5} parent=15 // pred_fallthru
          _
        // Predicated region
        $region53: #{decoder_forward.5} parent=15 // pred_check
          %p589 = pneg %p297
        $region54: #{decoder_forward.5} parent=15 // pred_check_branch
          %591 = sbr.rel (%p589) target = $region56
        $region55: #{decoder_forward.5} parent=15 // pred_region
          %p592 = scmp.lt.s32.totalorder %s39, 1
          %s593 = scalar_select %p592, %s39, 1
          %s594 = smul.addr %s593, 4
          %s595 = smul.addr %s594, 4
          %s596 = scalar_lea.vmem %s9, %s595
        $region56: #{decoder_forward.5} parent=15 // pred_fallthru
          _
        // Predicated region
        $region57: #{decoder_forward.5} parent=15 // pred_check
          %p597 = pneg %p323
        $region58: #{decoder_forward.5} parent=15 // pred_check_branch
          %599 = sbr.rel (%p597) target = $region60
        $region59: #{decoder_forward.5} parent=15 // pred_region
          %s600 = sand.u32 %s31, 1
          %s601 = scalar_lea.sflag [#allocation6], %s600
          %s602 = sand.u32 %s313, 1
          %s603 = scalar_lea.vmem [#allocation7], %s602
          %s605 = ssub.s32 16, 16
          %606 = vsyncadd %s601, %s605
          %s607 = smul.addr %s39, 16
          %s608 = scalar_lea.hbm %s10, %s607
          %s610 = sshll.u32 %s603, 4
          %s611 = int_to_ptr.vmem [resolvable:$true] %s610
          %613 = dma.hbm_to_vmem [thread:$0]  %s608, 16, %s611, %s601
        $region60: #{decoder_forward.5} parent=15 // pred_fallthru
          _
        // Predicated region
        $region61: #{decoder_forward.5} parent=15 // pred_check
          %p614 = pneg %p349
        $region62: #{decoder_forward.5} parent=15 // pred_check_branch
          %616 = sbr.rel (%p614) target = $region64
        $region63: #{decoder_forward.5} parent=15 // pred_region
          %p617 = scmp.lt.s32.totalorder %s39, 1
          %s618 = scalar_select %p617, %s39, 1
          %s619 = smul.addr %s618, 4
          %s620 = smul.addr %s619, 4
          %s621 = scalar_lea.vmem %s11, %s620
        $region64: #{decoder_forward.5} parent=15 // pred_fallthru
          _
        // Predicated region
        $region65: #{decoder_forward.5} parent=15 // pred_check
          %p622 = pneg %p375
        $region66: #{decoder_forward.5} parent=15 // pred_check_branch
          %624 = sbr.rel (%p622) target = $region68
        $region67: #{decoder_forward.5} parent=15 // pred_region
          %p625 = scmp.lt.s32.totalorder %s39, 1
          %s626 = scalar_select %p625, %s39, 1
          %s627 = scalar_lea.vmem %s12, %s626
        $region68: #{decoder_forward.5} parent=15 // pred_fallthru
          _
        // Predicated region
        $region69: #{decoder_forward.5} parent=15 // pred_check
          %p628 = pneg %p401
        $region70: #{decoder_forward.5} parent=15 // pred_check_branch
          %630 = sbr.rel (%p628) target = $region72
        $region71: #{decoder_forward.5} parent=15 // pred_region
          %p631 = scmp.lt.s32.totalorder %s39, 1
          %s632 = scalar_select %p631, %s39, 1
          %s633 = smul.addr %s632, 4
          %s634 = smul.addr %s633, 4
          %s635 = scalar_lea.vmem %s13, %s634
        $region72: #{decoder_forward.5} parent=15 // pred_fallthru
          _
        // Predicated region
        $region73: #{decoder_forward.5} parent=15 // pred_check
          %p636 = pneg %p427
        $region74: #{decoder_forward.5} parent=15 // pred_check_branch
          %638 = sbr.rel (%p636) target = $region76
        $region75: #{decoder_forward.5} parent=15 // pred_region
          %s639 = sand.u32 %s417, 1
          %s640 = scalar_lea.sflag [#allocation9], %s639
          %s641 = sand.u32 %s417, 1
          %s642 = scalar_lea.vmem [#allocation8], %s641
          %s644 = ssub.s32 16, 16
          %645 = vsyncadd %s640, %s644
          %s646 = smul.addr %s39, 16
          %s647 = scalar_lea.hbm %s14, %s646
          %s649 = sshll.u32 %s642, 4
          %s650 = int_to_ptr.vmem [resolvable:$true] %s649
          %652 = dma.hbm_to_vmem [thread:$0]  %s647, 16, %s650, %s640
        $region76: #{decoder_forward.5} parent=15 // pred_fallthru
          _
        // Predicated region
        $region77: #{decoder_forward.5} parent=15 // pred_check
          %p653 = pneg %p453
        $region78: #{decoder_forward.5} parent=15 // pred_check_branch
          %655 = sbr.rel (%p653) target = $region80
        $region79: #{decoder_forward.5} parent=15 // pred_region
          %p656 = scmp.lt.s32.totalorder %s39, 1
          %s657 = scalar_select %p656, %s39, 1
          %s658 = smul.addr %s657, 4
          %s659 = scalar_lea.vmem %s15, %s658
        $region80: #{decoder_forward.5} parent=15 // pred_fallthru
          _
      $region16: #{decoder_forward.5} parent=5 // pred_fallthru
        _
      %p660 = scmp.le.s32.totalorder 1, %s31
      %p661 = scmp.lt.s32.totalorder %s31, 5
      %p662 = pnand %p660, %p661
      %p663 = pneg %p662
      // Predicated region
      $region81: #{decoder_forward.5} parent=5 // pred_check
        _
      $region82: #{decoder_forward.5} parent=5 // pred_check_branch
        %665 = sbr.rel (%p662) target = $region84
      $region83: #{decoder_forward.5} parent=5 // pred_region
        %s666 = ssub.s32 %s31, 1
        %s667 = sand.u32 %s160, 1
        %s668 = scalar_lea.sflag [#allocation4], %s667
        %s669 = sand.u32 %s160, 1
        %s670 = scalar_lea.vmem [#allocation3], %s669
        // Predicated region
        $region85: #{decoder_forward.5} parent=83 // pred_check
          %p671 = pneg %p173
        $region86: #{decoder_forward.5} parent=83 // pred_check_branch
          %673 = sbr.rel (%p671) target = $region88
        $region87: #{decoder_forward.5} parent=83 // pred_region
          %674 = dma.done %s668, 16
        $region88: #{decoder_forward.5} parent=83 // pred_fallthru
          _
        %s675 = sand.u32 %s36, 1
        %s676 = scalar_lea.sflag [#allocation6], %s675
        %s677 = sand.u32 %s212, 1
        %s678 = scalar_lea.vmem [#allocation5], %s677
        // Predicated region
        $region89: #{decoder_forward.5} parent=83 // pred_check
          %p679 = pneg %p225
        $region90: #{decoder_forward.5} parent=83 // pred_check_branch
          %681 = sbr.rel (%p679) target = $region92
        $region91: #{decoder_forward.5} parent=83 // pred_region
          %682 = dma.done %s676, 16
        $region92: #{decoder_forward.5} parent=83 // pred_fallthru
          _
        %s683 = sand.u32 %s36, 1
        %s684 = scalar_lea.sflag [#allocation6], %s683
        %s685 = sand.u32 %s316, 1
        %s686 = scalar_lea.vmem [#allocation7], %s685
        // Predicated region
        $region93: #{decoder_forward.5} parent=83 // pred_check
          %p687 = pneg %p329
        $region94: #{decoder_forward.5} parent=83 // pred_check_branch
          %689 = sbr.rel (%p687) target = $region96
        $region95: #{decoder_forward.5} parent=83 // pred_region
          %690 = dma.done %s684, 16
        $region96: #{decoder_forward.5} parent=83 // pred_fallthru
          _
        %s691 = sand.u32 %s420, 1
        %s692 = scalar_lea.sflag [#allocation9], %s691
        %s693 = sand.u32 %s420, 1
        %s694 = scalar_lea.vmem [#allocation8], %s693
        // Predicated region
        $region97: #{decoder_forward.5} parent=83 // pred_check
          %p695 = pneg %p433
        $region98: #{decoder_forward.5} parent=83 // pred_check_branch
          %697 = sbr.rel (%p695) target = $region100
        $region99: #{decoder_forward.5} parent=83 // pred_region
          %698 = dma.done %s692, 16
        $region100: #{decoder_forward.5} parent=83 // pred_fallthru
          _
        %p699 = scmp.lt.s32.totalorder %s40, 1
        %s700 = scalar_select %p699, %s40, 1
        %s701 = smul.addr %s700, 8
        %s702 = scalar_lea.vmem %s0, %s701
        %p703 = pneg %p69
        %p704 = pneg %p66
        %p705 = scmp.lt.s32.totalorder %s41, 1
        %s706 = scalar_select %p705, %s41, 1
        %s707 = smul.addr %s706, 4
        %s708 = smul.addr %s707, 4
        %s709 = scalar_lea.vmem %s1, %s708
        %p710 = pneg %p95
        %p711 = pneg %p92
        %p712 = scmp.lt.s32.totalorder %s41, 1
        %s713 = scalar_select %p712, %s41, 1
        %s714 = scalar_lea.vmem %s2, %s713
        %p715 = pneg %p121
        %p716 = pneg %p118
        %p717 = scmp.lt.s32.totalorder %s41, 1
        %s718 = scalar_select %p717, %s41, 1
        %s719 = smul.addr %s718, 4
        %s720 = smul.addr %s719, 4
        %s721 = scalar_lea.vmem %s3, %s720
        %p722 = pneg %p147
        %p723 = pneg %p144
        %s724 = sand.u32 %s160, 1
        %s725 = scalar_lea.sflag [#allocation4], %s724
        %s726 = sand.u32 %s160, 1
        %s727 = scalar_lea.vmem [#allocation3], %s726
        %p728 = pneg %p173
        %p729 = pneg %p170
        %p730 = scmp.lt.s32.totalorder %s41, 1
        %s731 = scalar_select %p730, %s41, 1
        %s732 = smul.addr %s731, 4
        %s733 = smul.addr %s732, 4
        %s734 = scalar_lea.vmem %s5, %s733
        %p735 = pneg %p199
        %p736 = pneg %p196
        %s737 = sand.u32 %s36, 1
        %s738 = scalar_lea.sflag [#allocation6], %s737
        %s739 = sand.u32 %s212, 1
        %s740 = scalar_lea.vmem [#allocation5], %s739
        %p741 = pneg %p225
        %p742 = pneg %p222
        %p743 = scmp.lt.s32.totalorder %s41, 1
        %s744 = scalar_select %p743, %s41, 1
        %s745 = smul.addr %s744, 4
        %s746 = smul.addr %s745, 4
        %s747 = scalar_lea.vmem %s7, %s746
        %p748 = pneg %p251
        %p749 = pneg %p248
        %p750 = scmp.lt.s32.totalorder %s41, 1
        %s751 = scalar_select %p750, %s41, 1
        %s752 = scalar_lea.vmem %s8, %s751
        %p753 = pneg %p277
        %p754 = pneg %p274
        %p755 = scmp.lt.s32.totalorder %s41, 1
        %s756 = scalar_select %p755, %s41, 1
        %s757 = smul.addr %s756, 4
        %s758 = smul.addr %s757, 4
        %s759 = scalar_lea.vmem %s9, %s758
        %p760 = pneg %p303
        %p761 = pneg %p300
        %s762 = sand.u32 %s36, 1
        %s763 = scalar_lea.sflag [#allocation6], %s762
        %s764 = sand.u32 %s316, 1
        %s765 = scalar_lea.vmem [#allocation7], %s764
        %p766 = pneg %p329
        %p767 = pneg %p326
        %p768 = scmp.lt.s32.totalorder %s41, 1
        %s769 = scalar_select %p768, %s41, 1
        %s770 = smul.addr %s769, 4
        %s771 = smul.addr %s770, 4
        %s772 = scalar_lea.vmem %s11, %s771
        %p773 = pneg %p355
        %p774 = pneg %p352
        %p775 = scmp.lt.s32.totalorder %s41, 1
        %s776 = scalar_select %p775, %s41, 1
        %s777 = scalar_lea.vmem %s12, %s776
        %p778 = pneg %p381
        %p779 = pneg %p378
        %p780 = scmp.lt.s32.totalorder %s41, 1
        %s781 = scalar_select %p780, %s41, 1
        %s782 = smul.addr %s781, 4
        %s783 = smul.addr %s782, 4
        %s784 = scalar_lea.vmem %s13, %s783
        %p785 = pneg %p407
        %p786 = pneg %p404
        %s787 = sand.u32 %s420, 1
        %s788 = scalar_lea.sflag [#allocation9], %s787
        %s789 = sand.u32 %s420, 1
        %s790 = scalar_lea.vmem [#allocation8], %s789
        %p791 = pneg %p433
        %p792 = pneg %p430
        %p793 = scmp.lt.s32.totalorder %s41, 1
        %s794 = scalar_select %p793, %s41, 1
        %s795 = smul.addr %s794, 4
        %s796 = scalar_lea.vmem %s15, %s795
        %p797 = pneg %p459
        %p798 = pneg %p456
        %p799 = pneg %p485
        %p800 = pneg %p482
        %p801 = scmp.lt.s32.totalorder %s40, 1
        %s802 = scalar_select %p801, %s40, 1
        %s803 = smul.addr %s802, 8
        %s804 = scalar_lea.vmem %s16, %s803
        %p805 = scmp.lt.s32.totalorder %s40, 1
        %s806 = scalar_select %p805, %s40, 1
        %s807 = smul.addr %s806, 8
        %s808 = scalar_lea.vmem %s0, %s807
        %p809 = scmp.lt.s32.totalorder %s41, 1
        %s810 = scalar_select %p809, %s41, 1
        %s811 = smul.addr %s810, 4
        %s812 = smul.addr %s811, 4
        %s813 = scalar_lea.vmem %s1, %s812
        %p814 = scmp.lt.s32.totalorder %s41, 1
        %s815 = scalar_select %p814, %s41, 1
        %s816 = scalar_lea.vmem %s2, %s815
        %p817 = scmp.lt.s32.totalorder %s41, 1
        %s818 = scalar_select %p817, %s41, 1
        %s819 = smul.addr %s818, 4
        %s820 = smul.addr %s819, 4
        %s821 = scalar_lea.vmem %s3, %s820
        %p822 = scmp.lt.s32.totalorder %s41, 1
        %s823 = scalar_select %p822, %s41, 1
        %s824 = smul.addr %s823, 4
        %s825 = smul.addr %s824, 4
        %s826 = scalar_lea.vmem %s5, %s825
        %p827 = scmp.lt.s32.totalorder %s41, 1
        %s828 = scalar_select %p827, %s41, 1
        %s829 = smul.addr %s828, 4
        %s830 = smul.addr %s829, 4
        %s831 = scalar_lea.vmem %s7, %s830
        %p832 = scmp.lt.s32.totalorder %s41, 1
        %s833 = scalar_select %p832, %s41, 1
        %s834 = scalar_lea.vmem %s8, %s833
        %p835 = scmp.lt.s32.totalorder %s41, 1
        %s836 = scalar_select %p835, %s41, 1
        %s837 = smul.addr %s836, 4
        %s838 = smul.addr %s837, 4
        %s839 = scalar_lea.vmem %s9, %s838
        %p840 = scmp.lt.s32.totalorder %s41, 1
        %s841 = scalar_select %p840, %s41, 1
        %s842 = smul.addr %s841, 4
        %s843 = smul.addr %s842, 4
        %s844 = scalar_lea.vmem %s11, %s843
        %p845 = scmp.lt.s32.totalorder %s41, 1
        %s846 = scalar_select %p845, %s41, 1
        %s847 = scalar_lea.vmem %s12, %s846
        %p848 = scmp.lt.s32.totalorder %s41, 1
        %s849 = scalar_select %p848, %s41, 1
        %s850 = smul.addr %s849, 4
        %s851 = smul.addr %s850, 4
        %s852 = scalar_lea.vmem %s13, %s851
        %p853 = scmp.lt.s32.totalorder %s41, 1
        %s854 = scalar_select %p853, %s41, 1
        %s855 = smul.addr %s854, 4
        %s856 = scalar_lea.vmem %s15, %s855
        %p857 = scmp.lt.s32.totalorder %s40, 1
        %s858 = scalar_select %p857, %s40, 1
        %s859 = smul.addr %s858, 8
        %s860 = scalar_lea.vmem %s16, %s859
        %p862 = scmp.eq.s32.totalorder %s41, 0
        // Predicated region
        $region101: #{decoder_forward.5} parent=83 // pred_check
          %p863 = pneg %p862
        $region102: #{decoder_forward.5} parent=83 // pred_check_branch
          %865 = sbr.rel (%p863) target = $region104
        $region103: #{decoder_forward.5} parent=83 // pred_region
          %v866 = vld [vmem:[%s808] sm:$0xff]
          %vm867 = vcmask 261120
          %868 = vst.msk [vmem:[#allocation2] sm:$0xff] %vm867, %v866
          %v869 = vld [vmem:[%s808] sm:$0xff]
          %870 = vst.msk [vmem:[%s860] sm:$0xff] %vm867, %v869
        $region104: #{decoder_forward.5} parent=83 // pred_fallthru
          _
        %v871 = vld [vmem:[#allocation2] sm:$0xff]
        %vm872 = vcmask 261120
        %v873 = vsel %vm872, %v871, 0.0
        %874 = vadd.xlane.f32.xlu0 %v873
        %v875 = vpop.xlane.xlu0 %874
        %v876 = vrcp.pop 32.0
        %v877 = vmul.f32 %v875, %v876
        %v878 = vsub.f32 %v871, %v877
        %v879 = vmul.f32 %v878, %v878
        %v880 = vsel %vm872, %v879, 0.0
        %881 = vadd.xlane.f32.xlu0 %v880
        %v882 = vpop.xlane.xlu0 %881
        %v883 = vmul.f32 %v882, %v876
        %v884 = vadd.f32 %v883, 1.1754944e-38
        %v885 = vrsqrt.pop %v884
        %v886 = vmul.f32 %v878, %v885
        %v887 = vld [vmem:[%s813] sm:$0xf]
        %v888 = vld [vmem:[%s813 + $0x4] sm:$0xf]
        %v889 = vld [vmem:[%s813 + $0x8] sm:$0xf]
        %v890 = vld [vmem:[%s813 + $0xc] sm:$0xf]
        %v891 = vpack.c.bf16 %v886, %v886
        %v892 = vld [vmem:[%s816] sm:$0x1]
        %v894 = vlaneseq
        %v895 = vshrl.u32 %v894, 7
        %v896 = vsub.s32 0, %v895
        %v897 = vrot.slane %v892, %v896
        %v903 = vunpack.c.l.b16 %v887
        %v904 = vunpack.c.l.b16 %v888
        %v905 = vunpack.c.l.b16 %v889
        %v906 = vunpack.c.l.b16 %v890
        %v907 = vpack.c.b16 %v904, %v903
        %v908 = vpack.c.b16 %v906, %v905
        %v912 = vsel %vm872, %v891, 0
        %914 = vmatprep.subr.bf16.mxu0 0
        %915 = vmatpush1.bf16.msra.mxu0 0
        %916 = vmatprep.subr.bf16.mxu0 0
        %917 = vmatpush1.bf16.msra.mxu0 0
        %918 = vmatprep.subr.bf16.mxu0 0
        %919 = vmatpush1.bf16.msra.mxu0 0
        %920 = vmatprep.subr.bf16.mxu0 0
        %921 = vmatpush1.bf16.msra.mxu0 0
        %922 = vmatprep.subr.bf16.mxu0 0
        %923 = vmatpush1.bf16.msra.mxu0 0
        %924 = vmatprep.subr.bf16.mxu0 0
        %925 = vmatpush1.bf16.msra.mxu0 0
        %926 = vmatprep.subr.bf16.mxu0 0
        %927 = vmatpush1.bf16.msra.mxu0 %v908
        %928 = vmatprep.subr.bf16.mxu0 0
        %929 = vmatpush1.bf16.msra.mxu0 %v907
        %930 = vmatprep.subr.bf16.mxu0 0
        %931 = vmatpush2.bf16.msra.mxu0 0
        %932 = vmatprep.subr.bf16.mxu0 0
        %933 = vmatpush2.bf16.msra.mxu0 0
        %934 = vmatprep.subr.bf16.mxu0 0
        %935 = vmatpush2.bf16.msra.mxu0 0
        %936 = vmatprep.subr.bf16.mxu0 0
        %937 = vmatpush2.bf16.msra.mxu0 0
        %938 = vmatprep.subr.bf16.mxu0 0
        %939 = vmatpush2.bf16.msra.mxu0 0
        %940 = vmatprep.subr.bf16.mxu0 0
        %941 = vmatpush2.bf16.msra.mxu0 0
        %942 = vmatprep.subr.bf16.mxu0 0
        %943 = vmatpush2.bf16.msra.mxu0 0
        %944 = vmatprep.subr.bf16.mxu0 0
        %945 = vmatpush2.bf16.msra.mxu0 0
        %946 = vmatprep.mubr.bf16.mxu0 0
        %947 = vmatmul.mubr.bf16.gmra.mxu0 %v912
        %v948 = vpop.f32.mrf.mxu0
        %v949 = vadd.f32 %v897, %v948
        %v950 = vpop.f32.mrf.mxu0
        %v951 = vpop.f32.mrf.mxu0
        %v952 = vpop.f32.mrf.mxu0
        %953 = vdwg.mxu0
        %v954 = vld [vmem:[%s821] sm:$0xf]
        %v955 = vld [vmem:[%s821 + $0x4] sm:$0xf]
        %v956 = vld [vmem:[%s821 + $0x8] sm:$0xf]
        %v957 = vld [vmem:[%s821 + $0xc] sm:$0xf]
        %v958 = vld [vmem:[%s670] sm:$0x1]
        %v960 = vlaneseq
        %v961 = vshrl.u32 %v960, 7
        %v962 = vsub.s32 0, %v961
        %v963 = vrot.slane %v958, %v962
        %v969 = vunpack.c.l.b16 %v954
        %v970 = vunpack.c.l.b16 %v955
        %v971 = vunpack.c.l.b16 %v956
        %v972 = vunpack.c.l.b16 %v957
        %v973 = vpack.c.b16 %v970, %v969
        %v974 = vpack.c.b16 %v972, %v971
        %977 = vmatprep.subr.bf16.mxu0 0
        %978 = vmatpush1.bf16.msra.mxu0 0
        %979 = vmatprep.subr.bf16.mxu0 0
        %980 = vmatpush1.bf16.msra.mxu0 0
        %981 = vmatprep.subr.bf16.mxu0 0
        %982 = vmatpush1.bf16.msra.mxu0 0
        %983 = vmatprep.subr.bf16.mxu0 0
        %984 = vmatpush1.bf16.msra.mxu0 0
        %985 = vmatprep.subr.bf16.mxu0 0
        %986 = vmatpush1.bf16.msra.mxu0 0
        %987 = vmatprep.subr.bf16.mxu0 0
        %988 = vmatpush1.bf16.msra.mxu0 0
        %989 = vmatprep.subr.bf16.mxu0 0
        %990 = vmatpush1.bf16.msra.mxu0 %v974
        %991 = vmatprep.subr.bf16.mxu0 0
        %992 = vmatpush1.bf16.msra.mxu0 %v973
        %993 = vmatprep.subr.bf16.mxu0 0
        %994 = vmatpush2.bf16.msra.mxu0 0
        %995 = vmatprep.subr.bf16.mxu0 0
        %996 = vmatpush2.bf16.msra.mxu0 0
        %997 = vmatprep.subr.bf16.mxu0 0
        %998 = vmatpush2.bf16.msra.mxu0 0
        %999 = vmatprep.subr.bf16.mxu0 0
        %1000 = vmatpush2.bf16.msra.mxu0 0
        %1001 = vmatprep.subr.bf16.mxu0 0
        %1002 = vmatpush2.bf16.msra.mxu0 0
        %1003 = vmatprep.subr.bf16.mxu0 0
        %1004 = vmatpush2.bf16.msra.mxu0 0
        %1005 = vmatprep.subr.bf16.mxu0 0
        %1006 = vmatpush2.bf16.msra.mxu0 0
        %1007 = vmatprep.subr.bf16.mxu0 0
        %1008 = vmatpush2.bf16.msra.mxu0 0
        %1009 = vmatprep.mubr.bf16.mxu0 0
        %1010 = vmatmul.mubr.bf16.gmra.mxu0 %v912
        %v1011 = vpop.f32.mrf.mxu0
        %v1012 = vadd.f32 %v963, %v1011
        %v1013 = vpop.f32.mrf.mxu0
        %v1014 = vpop.f32.mrf.mxu0
        %v1015 = vpop.f32.mrf.mxu0
        %1016 = vdwg.mxu0
        %v1017 = vmax.f32 %v1012, 0.0
        %v1018 = vand.u32 2147483647, %v1012
        %v1019 = vsub.f32 0.0, %v1018
        %v1020 = vmul.f32 %v1019, 1.442695
        %v1021 = vpow.pop %v1020
        %v1022 = vadd.f32 %v1021, 1.0
        %v1023 = vlog2.pop %v1022
        %v1024 = vmul.f32 %v1023, 0.6931472
        %v1025 = vadd.f32 %v1017, %v1024
        %v1026 = vtanh.pop %v1025
        %v1027 = vmul.f32 %v1012, %v1026
        %v1028 = vmul.f32 %v949, %v1027
        %v1029 = vld [vmem:[%s826] sm:$0xf]
        %v1030 = vld [vmem:[%s826 + $0x4] sm:$0xf]
        %v1031 = vld [vmem:[%s826 + $0x8] sm:$0xf]
        %v1032 = vld [vmem:[%s826 + $0xc] sm:$0xf]
        %v1033 = vpack.c.bf16 %v1028, %v1028
        %v1034 = vld [vmem:[%s678] sm:$0x1]
        %v1036 = vlaneseq
        %v1037 = vshrl.u32 %v1036, 7
        %v1038 = vsub.s32 0, %v1037
        %v1039 = vrot.slane %v1034, %v1038
        %v1045 = vunpack.c.l.b16 %v1029
        %v1046 = vunpack.c.l.b16 %v1030
        %v1047 = vunpack.c.l.b16 %v1031
        %v1048 = vunpack.c.l.b16 %v1032
        %v1049 = vpack.c.b16 %v1046, %v1045
        %v1050 = vpack.c.b16 %v1048, %v1047
        %v1054 = vsel %vm872, %v1033, 0
        %1056 = vmatprep.subr.bf16.mxu0 0
        %1057 = vmatpush1.bf16.msra.mxu0 0
        %1058 = vmatprep.subr.bf16.mxu0 0
        %1059 = vmatpush1.bf16.msra.mxu0 0
        %1060 = vmatprep.subr.bf16.mxu0 0
        %1061 = vmatpush1.bf16.msra.mxu0 0
        %1062 = vmatprep.subr.bf16.mxu0 0
        %1063 = vmatpush1.bf16.msra.mxu0 0
        %1064 = vmatprep.subr.bf16.mxu0 0
        %1065 = vmatpush1.bf16.msra.mxu0 0
        %1066 = vmatprep.subr.bf16.mxu0 0
        %1067 = vmatpush1.bf16.msra.mxu0 0
        %1068 = vmatprep.subr.bf16.mxu0 0
        %1069 = vmatpush1.bf16.msra.mxu0 %v1050
        %1070 = vmatprep.subr.bf16.mxu0 0
        %1071 = vmatpush1.bf16.msra.mxu0 %v1049
        %1072 = vmatprep.subr.bf16.mxu0 0
        %1073 = vmatpush2.bf16.msra.mxu0 0
        %1074 = vmatprep.subr.bf16.mxu0 0
        %1075 = vmatpush2.bf16.msra.mxu0 0
        %1076 = vmatprep.subr.bf16.mxu0 0
        %1077 = vmatpush2.bf16.msra.mxu0 0
        %1078 = vmatprep.subr.bf16.mxu0 0
        %1079 = vmatpush2.bf16.msra.mxu0 0
        %1080 = vmatprep.subr.bf16.mxu0 0
        %1081 = vmatpush2.bf16.msra.mxu0 0
        %1082 = vmatprep.subr.bf16.mxu0 0
        %1083 = vmatpush2.bf16.msra.mxu0 0
        %1084 = vmatprep.subr.bf16.mxu0 0
        %1085 = vmatpush2.bf16.msra.mxu0 0
        %1086 = vmatprep.subr.bf16.mxu0 0
        %1087 = vmatpush2.bf16.msra.mxu0 0
        %1088 = vmatprep.mubr.bf16.mxu0 0
        %1089 = vmatmul.mubr.bf16.gmra.mxu0 %v1054
        %v1090 = vpop.f32.mrf.mxu0
        %v1091 = vadd.f32 %v1039, %v1090
        %v1092 = vpop.f32.mrf.mxu0
        %v1093 = vpop.f32.mrf.mxu0
        %v1094 = vpop.f32.mrf.mxu0
        %1095 = vdwg.mxu0
        %v1096 = vld [vmem:[%s831] sm:$0xf]
        %v1097 = vld [vmem:[%s831 + $0x4] sm:$0xf]
        %v1098 = vld [vmem:[%s831 + $0x8] sm:$0xf]
        %v1099 = vld [vmem:[%s831 + $0xc] sm:$0xf]
        %v1100 = vld [vmem:[%s834] sm:$0x1]
        %v1102 = vlaneseq
        %v1103 = vshrl.u32 %v1102, 7
        %v1104 = vsub.s32 0, %v1103
        %v1105 = vrot.slane %v1100, %v1104
        %v1111 = vunpack.c.l.b16 %v1096
        %v1112 = vunpack.c.l.b16 %v1097
        %v1113 = vunpack.c.l.b16 %v1098
        %v1114 = vunpack.c.l.b16 %v1099
        %v1115 = vpack.c.b16 %v1112, %v1111
        %v1116 = vpack.c.b16 %v1114, %v1113
        %1119 = vmatprep.subr.bf16.mxu0 0
        %1120 = vmatpush1.bf16.msra.mxu0 0
        %1121 = vmatprep.subr.bf16.mxu0 0
        %1122 = vmatpush1.bf16.msra.mxu0 0
        %1123 = vmatprep.subr.bf16.mxu0 0
        %1124 = vmatpush1.bf16.msra.mxu0 0
        %1125 = vmatprep.subr.bf16.mxu0 0
        %1126 = vmatpush1.bf16.msra.mxu0 0
        %1127 = vmatprep.subr.bf16.mxu0 0
        %1128 = vmatpush1.bf16.msra.mxu0 0
        %1129 = vmatprep.subr.bf16.mxu0 0
        %1130 = vmatpush1.bf16.msra.mxu0 0
        %1131 = vmatprep.subr.bf16.mxu0 0
        %1132 = vmatpush1.bf16.msra.mxu0 %v1116
        %1133 = vmatprep.subr.bf16.mxu0 0
        %1134 = vmatpush1.bf16.msra.mxu0 %v1115
        %1135 = vmatprep.subr.bf16.mxu0 0
        %1136 = vmatpush2.bf16.msra.mxu0 0
        %1137 = vmatprep.subr.bf16.mxu0 0
        %1138 = vmatpush2.bf16.msra.mxu0 0
        %1139 = vmatprep.subr.bf16.mxu0 0
        %1140 = vmatpush2.bf16.msra.mxu0 0
        %1141 = vmatprep.subr.bf16.mxu0 0
        %1142 = vmatpush2.bf16.msra.mxu0 0
        %1143 = vmatprep.subr.bf16.mxu0 0
        %1144 = vmatpush2.bf16.msra.mxu0 0
        %1145 = vmatprep.subr.bf16.mxu0 0
        %1146 = vmatpush2.bf16.msra.mxu0 0
        %1147 = vmatprep.subr.bf16.mxu0 0
        %1148 = vmatpush2.bf16.msra.mxu0 0
        %1149 = vmatprep.subr.bf16.mxu0 0
        %1150 = vmatpush2.bf16.msra.mxu0 0
        %1151 = vmatprep.mubr.bf16.mxu0 0
        %1152 = vmatmul.mubr.bf16.gmra.mxu0 %v912
        %v1153 = vpop.f32.mrf.mxu0
        %v1154 = vadd.f32 %v1105, %v1153
        %v1155 = vpop.f32.mrf.mxu0
        %v1156 = vpop.f32.mrf.mxu0
        %v1157 = vpop.f32.mrf.mxu0
        %1158 = vdwg.mxu0
        %v1159 = vld [vmem:[%s839] sm:$0xf]
        %v1160 = vld [vmem:[%s839 + $0x4] sm:$0xf]
        %v1161 = vld [vmem:[%s839 + $0x8] sm:$0xf]
        %v1162 = vld [vmem:[%s839 + $0xc] sm:$0xf]
        %v1163 = vld [vmem:[%s686] sm:$0x1]
        %v1165 = vlaneseq
        %v1166 = vshrl.u32 %v1165, 7
        %v1167 = vsub.s32 0, %v1166
        %v1168 = vrot.slane %v1163, %v1167
        %v1174 = vunpack.c.l.b16 %v1159
        %v1175 = vunpack.c.l.b16 %v1160
        %v1176 = vunpack.c.l.b16 %v1161
        %v1177 = vunpack.c.l.b16 %v1162
        %v1178 = vpack.c.b16 %v1175, %v1174
        %v1179 = vpack.c.b16 %v1177, %v1176
        %1182 = vmatprep.subr.bf16.mxu0 0
        %1183 = vmatpush1.bf16.msra.mxu0 0
        %1184 = vmatprep.subr.bf16.mxu0 0
        %1185 = vmatpush1.bf16.msra.mxu0 0
        %1186 = vmatprep.subr.bf16.mxu0 0
        %1187 = vmatpush1.bf16.msra.mxu0 0
        %1188 = vmatprep.subr.bf16.mxu0 0
        %1189 = vmatpush1.bf16.msra.mxu0 0
        %1190 = vmatprep.subr.bf16.mxu0 0
        %1191 = vmatpush1.bf16.msra.mxu0 0
        %1192 = vmatprep.subr.bf16.mxu0 0
        %1193 = vmatpush1.bf16.msra.mxu0 0
        %1194 = vmatprep.subr.bf16.mxu0 0
        %1195 = vmatpush1.bf16.msra.mxu0 %v1179
        %1196 = vmatprep.subr.bf16.mxu0 0
        %1197 = vmatpush1.bf16.msra.mxu0 %v1178
        %1198 = vmatprep.subr.bf16.mxu0 0
        %1199 = vmatpush2.bf16.msra.mxu0 0
        %1200 = vmatprep.subr.bf16.mxu0 0
        %1201 = vmatpush2.bf16.msra.mxu0 0
        %1202 = vmatprep.subr.bf16.mxu0 0
        %1203 = vmatpush2.bf16.msra.mxu0 0
        %1204 = vmatprep.subr.bf16.mxu0 0
        %1205 = vmatpush2.bf16.msra.mxu0 0
        %1206 = vmatprep.subr.bf16.mxu0 0
        %1207 = vmatpush2.bf16.msra.mxu0 0
        %1208 = vmatprep.subr.bf16.mxu0 0
        %1209 = vmatpush2.bf16.msra.mxu0 0
        %1210 = vmatprep.subr.bf16.mxu0 0
        %1211 = vmatpush2.bf16.msra.mxu0 0
        %1212 = vmatprep.subr.bf16.mxu0 0
        %1213 = vmatpush2.bf16.msra.mxu0 0
        %1214 = vmatprep.mubr.bf16.mxu0 0
        %1215 = vmatmul.mubr.bf16.gmra.mxu0 %v912
        %v1216 = vpop.f32.mrf.mxu0
        %v1217 = vadd.f32 %v1168, %v1216
        %v1218 = vpop.f32.mrf.mxu0
        %v1219 = vpop.f32.mrf.mxu0
        %v1220 = vpop.f32.mrf.mxu0
        %1221 = vdwg.mxu0
        %v1222 = vld [vmem:[%s844] sm:$0xf]
        %v1223 = vld [vmem:[%s844 + $0x4] sm:$0xf]
        %v1224 = vld [vmem:[%s844 + $0x8] sm:$0xf]
        %v1225 = vld [vmem:[%s844 + $0xc] sm:$0xf]
        %v1226 = vld [vmem:[%s847] sm:$0x1]
        %v1228 = vlaneseq
        %v1229 = vshrl.u32 %v1228, 7
        %v1230 = vsub.s32 0, %v1229
        %v1231 = vrot.slane %v1226, %v1230
        %v1237 = vunpack.c.l.b16 %v1222
        %v1238 = vunpack.c.l.b16 %v1223
        %v1239 = vunpack.c.l.b16 %v1224
        %v1240 = vunpack.c.l.b16 %v1225
        %v1241 = vpack.c.b16 %v1238, %v1237
        %v1242 = vpack.c.b16 %v1240, %v1239
        %1245 = vmatprep.subr.bf16.mxu0 0
        %1246 = vmatpush1.bf16.msra.mxu0 0
        %1247 = vmatprep.subr.bf16.mxu0 0
        %1248 = vmatpush1.bf16.msra.mxu0 0
        %1249 = vmatprep.subr.bf16.mxu0 0
        %1250 = vmatpush1.bf16.msra.mxu0 0
        %1251 = vmatprep.subr.bf16.mxu0 0
        %1252 = vmatpush1.bf16.msra.mxu0 0
        %1253 = vmatprep.subr.bf16.mxu0 0
        %1254 = vmatpush1.bf16.msra.mxu0 0
        %1255 = vmatprep.subr.bf16.mxu0 0
        %1256 = vmatpush1.bf16.msra.mxu0 0
        %1257 = vmatprep.subr.bf16.mxu0 0
        %1258 = vmatpush1.bf16.msra.mxu0 %v1242
        %1259 = vmatprep.subr.bf16.mxu0 0
        %1260 = vmatpush1.bf16.msra.mxu0 %v1241
        %1261 = vmatprep.subr.bf16.mxu0 0
        %1262 = vmatpush2.bf16.msra.mxu0 0
        %1263 = vmatprep.subr.bf16.mxu0 0
        %1264 = vmatpush2.bf16.msra.mxu0 0
        %1265 = vmatprep.subr.bf16.mxu0 0
        %1266 = vmatpush2.bf16.msra.mxu0 0
        %1267 = vmatprep.subr.bf16.mxu0 0
        %1268 = vmatpush2.bf16.msra.mxu0 0
        %1269 = vmatprep.subr.bf16.mxu0 0
        %1270 = vmatpush2.bf16.msra.mxu0 0
        %1271 = vmatprep.subr.bf16.mxu0 0
        %1272 = vmatpush2.bf16.msra.mxu0 0
        %1273 = vmatprep.subr.bf16.mxu0 0
        %1274 = vmatpush2.bf16.msra.mxu0 0
        %1275 = vmatprep.subr.bf16.mxu0 0
        %1276 = vmatpush2.bf16.msra.mxu0 0
        %1277 = vmatprep.mubr.bf16.mxu0 0
        %1278 = vmatmul.mubr.bf16.gmra.mxu0 %v912
        %v1279 = vpop.f32.mrf.mxu0
        %v1280 = vadd.f32 %v1231, %v1279
        %v1281 = vpop.f32.mrf.mxu0
        %v1282 = vpop.f32.mrf.mxu0
        %v1283 = vpop.f32.mrf.mxu0
        %1284 = vdwg.mxu0
        %v1285 = vmul.f32 %v1217, 1.442695
        %v1286 = vpow.pop %v1285
        %v1287 = vld [vmem:[%s856] sm:$0xf]
        %v1288 = vmul.f32 %v1286, %v1280
        %v1289 = vpack.c.bf16 %v1288, %v1288
        %vm1290 = vcmask 64512
        %v1292 = vsel %vm1290, %v1287, 0
        %vm1294 = vcmask 1043456
        %v1296 = vsel %vm1294, %v1289, 0
        %1298 = vmatprep.subr.bf16.mxu0 0
        %1299 = vmatpush1.bf16.msra.mxu0 0
        %1300 = vmatprep.subr.bf16.mxu0 0
        %1301 = vmatpush1.bf16.msra.mxu0 0
        %1302 = vmatprep.subr.bf16.mxu0 0
        %1303 = vmatpush1.bf16.msra.mxu0 0
        %1304 = vmatprep.subr.bf16.mxu0 0
        %1305 = vmatpush1.bf16.msra.mxu0 0
        %1306 = vmatprep.subr.bf16.mxu0 0
        %1307 = vmatpush1.bf16.msra.mxu0 0
        %1308 = vmatprep.subr.bf16.mxu0 0
        %1309 = vmatpush1.bf16.msra.mxu0 0
        %1310 = vmatprep.subr.bf16.mxu0 0
        %1311 = vmatpush1.bf16.msra.mxu0 0
        %1312 = vmatprep.subr.bf16.mxu0 0
        %1313 = vmatpush1.bf16.msra.mxu0 %v1296
        %1314 = vmatprep.subr.bf16.mxu0 0
        %1315 = vmatpush2.bf16.msra.mxu0 0
        %1316 = vmatprep.subr.bf16.mxu0 0
        %1317 = vmatpush2.bf16.msra.mxu0 0
        %1318 = vmatprep.subr.bf16.mxu0 0
        %1319 = vmatpush2.bf16.msra.mxu0 0
        %1320 = vmatprep.subr.bf16.mxu0 0
        %1321 = vmatpush2.bf16.msra.mxu0 0
        %1322 = vmatprep.subr.bf16.mxu0 0
        %1323 = vmatpush2.bf16.msra.mxu0 0
        %1324 = vmatprep.subr.bf16.mxu0 0
        %1325 = vmatpush2.bf16.msra.mxu0 0
        %1326 = vmatprep.subr.bf16.mxu0 0
        %1327 = vmatpush2.bf16.msra.mxu0 0
        %1328 = vmatprep.subr.bf16.mxu0 0
        %1329 = vmatpush2.bf16.msra.mxu0 0
        %1330 = vmatprep.mubr.bf16.mxu0 0
        %1331 = vmatmul.mubr.bf16.gmra.mxu0 %v1292
        %v1332 = vpop.f32.mrf.mxu0
        %v1333 = vadd.f32 0.0, %v1332
        %v1334 = vpop.f32.mrf.mxu0
        %v1335 = vpop.f32.mrf.mxu0
        %v1336 = vpop.f32.mrf.mxu0
        %1337 = vdwg.mxu0
        %v1338 = vpack.c.bf16 %v1286, %v1286
        %v1340 = vsel %vm1294, %v1338, 0
        %1342 = vmatprep.subr.bf16.mxu0 0
        %1343 = vmatpush1.bf16.msra.mxu0 0
        %1344 = vmatprep.subr.bf16.mxu0 0
        %1345 = vmatpush1.bf16.msra.mxu0 0
        %1346 = vmatprep.subr.bf16.mxu0 0
        %1347 = vmatpush1.bf16.msra.mxu0 0
        %1348 = vmatprep.subr.bf16.mxu0 0
        %1349 = vmatpush1.bf16.msra.mxu0 0
        %1350 = vmatprep.subr.bf16.mxu0 0
        %1351 = vmatpush1.bf16.msra.mxu0 0
        %1352 = vmatprep.subr.bf16.mxu0 0
        %1353 = vmatpush1.bf16.msra.mxu0 0
        %1354 = vmatprep.subr.bf16.mxu0 0
        %1355 = vmatpush1.bf16.msra.mxu0 0
        %1356 = vmatprep.subr.bf16.mxu0 0
        %1357 = vmatpush1.bf16.msra.mxu0 %v1340
        %1358 = vmatprep.subr.bf16.mxu0 0
        %1359 = vmatpush2.bf16.msra.mxu0 0
        %1360 = vmatprep.subr.bf16.mxu0 0
        %1361 = vmatpush2.bf16.msra.mxu0 0
        %1362 = vmatprep.subr.bf16.mxu0 0
        %1363 = vmatpush2.bf16.msra.mxu0 0
        %1364 = vmatprep.subr.bf16.mxu0 0
        %1365 = vmatpush2.bf16.msra.mxu0 0
        %1366 = vmatprep.subr.bf16.mxu0 0
        %1367 = vmatpush2.bf16.msra.mxu0 0
        %1368 = vmatprep.subr.bf16.mxu0 0
        %1369 = vmatpush2.bf16.msra.mxu0 0
        %1370 = vmatprep.subr.bf16.mxu0 0
        %1371 = vmatpush2.bf16.msra.mxu0 0
        %1372 = vmatprep.subr.bf16.mxu0 0
        %1373 = vmatpush2.bf16.msra.mxu0 0
        %1374 = vmatprep.mubr.bf16.mxu0 0
        %1375 = vmatmul.mubr.bf16.gmra.mxu0 %v1292
        %v1376 = vpop.f32.mrf.mxu0
        %v1377 = vadd.f32 0.0, %v1376
        %v1378 = vpop.f32.mrf.mxu0
        %v1379 = vpop.f32.mrf.mxu0
        %v1380 = vpop.f32.mrf.mxu0
        %1381 = vdwg.mxu0
        %v1382 = vrcp.pop %v1377
        %v1383 = vmul.f32 %v1333, %v1382
        %v1384 = vmul.f32 %v1154, 0.5
        %v1385 = vtanh.pop %v1384
        %v1386 = vadd.f32 %v1385, 1.0
        %v1387 = vmul.f32 %v1386, 0.5
        %v1388 = vmul.f32 %v1387, %v1383
        %v1389 = vld [vmem:[%s852] sm:$0xf]
        %v1390 = vld [vmem:[%s852 + $0x4] sm:$0xf]
        %v1391 = vld [vmem:[%s852 + $0x8] sm:$0xf]
        %v1392 = vld [vmem:[%s852 + $0xc] sm:$0xf]
        %v1393 = vpack.c.bf16 %v1388, %v1388
        %v1394 = vld [vmem:[%s694] sm:$0x1]
        %v1396 = vlaneseq
        %v1397 = vshrl.u32 %v1396, 7
        %v1398 = vsub.s32 0, %v1397
        %v1399 = vrot.slane %v1394, %v1398
        %v1405 = vunpack.c.l.b16 %v1389
        %v1406 = vunpack.c.l.b16 %v1390
        %v1407 = vunpack.c.l.b16 %v1391
        %v1408 = vunpack.c.l.b16 %v1392
        %v1409 = vpack.c.b16 %v1406, %v1405
        %v1410 = vpack.c.b16 %v1408, %v1407
        %v1414 = vsel %vm872, %v1393, 0
        %1416 = vmatprep.subr.bf16.mxu0 0
        %1417 = vmatpush1.bf16.msra.mxu0 0
        %1418 = vmatprep.subr.bf16.mxu0 0
        %1419 = vmatpush1.bf16.msra.mxu0 0
        %1420 = vmatprep.subr.bf16.mxu0 0
        %1421 = vmatpush1.bf16.msra.mxu0 0
        %1422 = vmatprep.subr.bf16.mxu0 0
        %1423 = vmatpush1.bf16.msra.mxu0 0
        %1424 = vmatprep.subr.bf16.mxu0 0
        %1425 = vmatpush1.bf16.msra.mxu0 0
        %1426 = vmatprep.subr.bf16.mxu0 0
        %1427 = vmatpush1.bf16.msra.mxu0 0
        %1428 = vmatprep.subr.bf16.mxu0 0
        %1429 = vmatpush1.bf16.msra.mxu0 %v1410
        %1430 = vmatprep.subr.bf16.mxu0 0
        %1431 = vmatpush1.bf16.msra.mxu0 %v1409
        %1432 = vmatprep.subr.bf16.mxu0 0
        %1433 = vmatpush2.bf16.msra.mxu0 0
        %1434 = vmatprep.subr.bf16.mxu0 0
        %1435 = vmatpush2.bf16.msra.mxu0 0
        %1436 = vmatprep.subr.bf16.mxu0 0
        %1437 = vmatpush2.bf16.msra.mxu0 0
        %1438 = vmatprep.subr.bf16.mxu0 0
        %1439 = vmatpush2.bf16.msra.mxu0 0
        %1440 = vmatprep.subr.bf16.mxu0 0
        %1441 = vmatpush2.bf16.msra.mxu0 0
        %1442 = vmatprep.subr.bf16.mxu0 0
        %1443 = vmatpush2.bf16.msra.mxu0 0
        %1444 = vmatprep.subr.bf16.mxu0 0
        %1445 = vmatpush2.bf16.msra.mxu0 0
        %1446 = vmatprep.subr.bf16.mxu0 0
        %1447 = vmatpush2.bf16.msra.mxu0 0
        %1448 = vmatprep.mubr.bf16.mxu0 0
        %1449 = vmatmul.mubr.bf16.gmra.mxu0 %v1414
        %v1450 = vpop.f32.mrf.mxu0
        %v1451 = vadd.f32 %v1399, %v1450
        %v1452 = vpop.f32.mrf.mxu0
        %v1453 = vpop.f32.mrf.mxu0
        %v1454 = vpop.f32.mrf.mxu0
        %1455 = vdwg.mxu0
        %v1456 = vadd.f32 %v871, %v1091
        %v1457 = vadd.f32 %v1456, %v1451
        %1458 = vst.msk [vmem:[#allocation2] sm:$0xff] %vm872, %v1457
        %v1459 = vld [vmem:[%s860] sm:$0xff]
        %v1460 = vadd.f32 %v1459, %v1457
        %1461 = vst.msk [vmem:[%s860] sm:$0xff] %vm872, %v1460
        %p1462 = scmp.lt.s32.totalorder %s40, 1
        %s1463 = scalar_select %p1462, %s40, 1
        %s1464 = smul.addr %s1463, 8
        %s1465 = scalar_lea.vmem %s16, %s1464
        // Predicated region
        $region105: #{decoder_forward.5} parent=83 // pred_check
          %p1466 = pneg %p482
        $region106: #{decoder_forward.5} parent=83 // pred_check_branch
          %1468 = sbr.rel (%p1466) target = $region108
        $region107: #{decoder_forward.5} parent=83 // pred_region
          _
        $region108: #{decoder_forward.5} parent=83 // pred_fallthru
          _
      $region84: #{decoder_forward.5} parent=5 // pred_fallthru
        _
      %p1469 = scmp.le.s32.totalorder 2, %s31
      // Predicated region
      $region109: #{decoder_forward.5} parent=5 // pred_check
        %p1470 = pneg %p1469
      $region110: #{decoder_forward.5} parent=5 // pred_check_branch
        %1472 = sbr.rel (%p1470) target = $region112
      $region111: #{decoder_forward.5} parent=5 // pred_region
        %s1473 = ssub.s32 %s31, 2
        // Predicated region
        $region113: #{decoder_forward.5} parent=111 // pred_check
          %p1474 = pneg %p488
        $region114: #{decoder_forward.5} parent=111 // pred_check_branch
          %1476 = sbr.rel (%p1474) target = $region116
        $region115: #{decoder_forward.5} parent=111 // pred_region
          %p1477 = scmp.lt.s32.totalorder %s42, 1
          %s1478 = scalar_select %p1477, %s42, 1
          %s1479 = smul.addr %s1478, 8
          %s1480 = scalar_lea.vmem %s16, %s1479
        $region116: #{decoder_forward.5} parent=111 // pred_fallthru
          _
      $region112: #{decoder_forward.5} parent=5 // pred_fallthru
        _
    $region6: #{decoder_forward.5} parent=1 // loop_footer
      %s35 = sadd.s32 1, %s31
    $region7: #{decoder_forward.5} parent=1 // loop_footer_branch
      %30 = sbr.rel target = $region3
    $region8: #{decoder_forward.5} parent=1 // loop_exit
      _
    %1481 = vsyncpa [#allocation4], 1
    %s1482 = scalar_lea.sflag [#allocation4], 1
    %1483 = vsyncpa %s1482, 1
    %1484 = vsyncpa [#allocation6], 1
    %s1485 = scalar_lea.sflag [#allocation6], 1
    %1486 = vsyncpa %s1485, 1
    %1487 = vsyncpa [#allocation9], 1
    %s1488 = scalar_lea.sflag [#allocation9], 1
    %1489 = vsyncpa %s1488, 1

// kernel: decoder_forward.3
$region0: #{decoder_forward.3}
  #allocation0 [shape = 'u32[]', space=smem, size = 0x4, offset = 0x4, fixed_abs, tag = 'smem constant byte address 0x4 - core index']
  #allocation1 [shape = 'u32[144,128]{1,0:T(1,128)}', space=vmem, size = 0x12000, scoped, tag = 'internal scratch']
  #allocation2 [shape = 'f32[8,16]{1,0:T(8,128)}', space=vmem, size = 0x1000, scoped, tag = 'scratch operand']
  %s0 = inlined_call_operand.vmem [shape: f32[2,8,16], index: 0, kind: input, shape index: {}]
  %s1 = inlined_call_operand.vmem [shape: bf16[2,16,16], index: 1, kind: input, shape index: {}]
  %s2 = inlined_call_operand.hbm [shape: f32[2,1,16], index: 2, kind: input, shape index: {}]
  %s3 = inlined_call_operand.vmem [shape: bf16[2,16,16], index: 3, kind: input, shape index: {}]
  %s4 = inlined_call_operand.hbm [shape: f32[2,1,16], index: 4, kind: input, shape index: {}]
  %s5 = inlined_call_operand.hbm [shape: bf16[2,16,16], index: 5, kind: input, shape index: {}]
  %s6 = inlined_call_operand.hbm [shape: f32[2,1,16], index: 6, kind: input, shape index: {}]
  %s7 = inlined_call_operand.hbm [shape: bf16[2,16,16], index: 7, kind: input, shape index: {}]
  %s8 = inlined_call_operand.hbm [shape: f32[2,1,16], index: 8, kind: input, shape index: {}]
  %s9 = inlined_call_operand.hbm [shape: bf16[2,16,16], index: 9, kind: input, shape index: {}]
  %s10 = inlined_call_operand.hbm [shape: f32[2,1,16], index: 10, kind: input, shape index: {}]
  %s11 = inlined_call_operand.hbm [shape: bf16[2,16,16], index: 11, kind: input, shape index: {}]
  %s12 = inlined_call_operand.hbm [shape: f32[2,1,16], index: 12, kind: input, shape index: {}]
  %s13 = inlined_call_operand.hbm [shape: bf16[2,16,16], index: 13, kind: input, shape index: {}]
  %s14 = inlined_call_operand.hbm [shape: f32[2,1,16], index: 14, kind: input, shape index: {}]
  %s15 = inlined_call_operand.hbm [shape: bf16[2,8,8], index: 15, kind: input, shape index: {}]
  %s16 = inlined_call_operand.vmem [shape: f32[2,8,16], index: 16, kind: output, shape index: {}]
  %s17 = sld [smem:[#allocation0]]
  $region153: #{decoder_forward.3} parent=0
    _
  %s19 = ssub.s32 1, %s17
  %s20 = scalar_select 0, %s19, %s17
  $region1: #{decoder_forward.3} parent=0
    #allocation3 [shape = 'u8[1024]{0}', space=vmem, size = 0x400, scoped, tag = 'input window, operand 2']
    #allocation4 [shape = 's32[2]{0}', space=sflag, size = 0x8, scoped, tag = 'scoped memory for decoder_forward.3']
    #allocation5 [shape = 'u8[1024]{0}', space=vmem, size = 0x400, scoped, tag = 'input window, operand 4']
    #allocation6 [shape = 's32[2]{0}', space=sflag, size = 0x8, scoped, tag = 'scoped memory for decoder_forward.3']
    #allocation7 [shape = 'u8[8192]{0}', space=vmem, size = 0x2000, scoped, tag = 'input window, operand 5']
    #allocation8 [shape = 'u8[1024]{0}', space=vmem, size = 0x400, scoped, tag = 'input window, operand 6']
    #allocation9 [shape = 's32[2]{0}', space=sflag, size = 0x8, scoped, tag = 'scoped memory for decoder_forward.3']
    #allocation10 [shape = 'u8[8192]{0}', space=vmem, size = 0x2000, scoped, tag = 'input window, operand 7']
    #allocation11 [shape = 'u8[1024]{0}', space=vmem, size = 0x400, scoped, tag = 'input window, operand 8']
    #allocation12 [shape = 's32[2]{0}', space=sflag, size = 0x8, scoped, tag = 'scoped memory for decoder_forward.3']
    #allocation13 [shape = 'u8[8192]{0}', space=vmem, size = 0x2000, scoped, tag = 'input window, operand 9']
    #allocation14 [shape = 'u8[1024]{0}', space=vmem, size = 0x400, scoped, tag = 'input window, operand 10']
    #allocation15 [shape = 's32[2]{0}', space=sflag, size = 0x8, scoped, tag = 'scoped memory for decoder_forward.3']
    #allocation16 [shape = 'u8[8192]{0}', space=vmem, size = 0x2000, scoped, tag = 'input window, operand 11']
    #allocation17 [shape = 'u8[1024]{0}', space=vmem, size = 0x400, scoped, tag = 'input window, operand 12']
    #allocation18 [shape = 's32[2]{0}', space=sflag, size = 0x8, scoped, tag = 'scoped memory for decoder_forward.3']
    #allocation19 [shape = 'u8[8192]{0}', space=vmem, size = 0x2000, scoped, tag = 'input window, operand 13']
    #allocation20 [shape = 'u8[1024]{0}', space=vmem, size = 0x400, scoped, tag = 'input window, operand 14']
    #allocation21 [shape = 's32[2]{0}', space=sflag, size = 0x8, scoped, tag = 'scoped memory for decoder_forward.3']
    #allocation22 [shape = 'u8[4096]{0}', space=vmem, size = 0x1000, scoped, tag = 'input window, operand 15']
    %21 = vsyncpa [#allocation4], 0
    %s22 = scalar_lea.sflag [#allocation4], 1
    %23 = vsyncpa %s22, 0
    %24 = vsyncpa [#allocation6], 0
    %s25 = scalar_lea.sflag [#allocation6], 1
    %26 = vsyncpa %s25, 0
    %27 = vsyncpa [#allocation9], 0
    %s28 = scalar_lea.sflag [#allocation9], 1
    %29 = vsyncpa %s28, 0
    %30 = vsyncpa [#allocation12], 0
    %s31 = scalar_lea.sflag [#allocation12], 1
    %32 = vsyncpa %s31, 0
    %33 = vsyncpa [#allocation15], 0
    %s34 = scalar_lea.sflag [#allocation15], 1
    %35 = vsyncpa %s34, 0
    %36 = vsyncpa [#allocation18], 0
    %s37 = scalar_lea.sflag [#allocation18], 1
    %38 = vsyncpa %s37, 0
    %39 = vsyncpa [#allocation21], 0
    %s40 = scalar_lea.sflag [#allocation21], 1
    %41 = vsyncpa %s40, 0
    loop: start=0, step=1, limit=6
    $region2: #{decoder_forward.3} parent=1 // loop_pre_header
      _
    $region3: #{decoder_forward.3} parent=1 // loop_header
      %s43 = sphi 0, %s47
      %p44 = scmp.ge.s32.totalorder %s43, 6
      %s50 = sphi 0, %s62
      %s51 = sphi 0, %s58
      %s52 = sphi 0, %s50
      %s53 = sphi 0, %s51
      %s54 = sphi 0, %s52
      %s55 = sphi 0, %s53
      %s65 = sphi 0, %s67
      %s68 = sphi 0, %s65
      %s69 = sphi 0, %s68
      %s85 = sphi 0, %s69
      %s91 = sphi 0, %s93
      %s94 = sphi 0, %s91
      %s95 = sphi 0, %s94
      %s111 = sphi 0, %s95
      %s117 = sphi 0, %s119
      %s120 = sphi 0, %s117
      %s121 = sphi 0, %s120
      %s137 = sphi 0, %s121
      %s143 = sphi 0, %s145
      %s146 = sphi 0, %s143
      %s147 = sphi 0, %s146
      %s163 = sphi 0, %s147
      %s169 = sphi 0, %s171
      %s172 = sphi 0, %s169
      %s173 = sphi 0, %s172
      %s189 = sphi 0, %s173
      %s195 = sphi 0, %s197
      %s198 = sphi 0, %s195
      %s199 = sphi 0, %s198
      %s215 = sphi 0, %s199
      %s221 = sphi 0, %s223
      %s224 = sphi 0, %s221
      %s225 = sphi 0, %s224
      %s241 = sphi 0, %s225
      %s247 = sphi 0, %s249
      %s250 = sphi 0, %s247
      %s251 = sphi 0, %s250
      %s267 = sphi 0, %s251
      %s273 = sphi 0, %s275
      %s276 = sphi 0, %s273
      %s277 = sphi 0, %s276
      %s293 = sphi 0, %s277
      %s299 = sphi 0, %s301
      %s302 = sphi 0, %s299
      %s303 = sphi 0, %s302
      %s319 = sphi 0, %s303
      %s325 = sphi 0, %s327
      %s328 = sphi 0, %s325
      %s329 = sphi 0, %s328
      %s345 = sphi 0, %s329
      %s351 = sphi 0, %s353
      %s354 = sphi 0, %s351
      %s355 = sphi 0, %s354
      %s371 = sphi 0, %s355
      %s377 = sphi 0, %s379
      %s380 = sphi 0, %s377
      %s381 = sphi 0, %s380
      %s397 = sphi 0, %s381
      %s403 = sphi 0, %s405
      %s406 = sphi 0, %s403
      %s407 = sphi 0, %s406
      %s423 = sphi 0, %s407
      %s429 = sphi 0, %s431
      %s432 = sphi 0, %s429
      %s433 = sphi 0, %s432
      %s449 = sphi 0, %s433
      %s455 = sphi 0, %s457
      %s458 = sphi 0, %s455
      %s459 = sphi 0, %s458
      %s475 = sphi 0, %s459
      %s481 = sphi 0, %s483
      %s484 = sphi 0, %s481
      %s485 = sphi 0, %s484
      %s501 = sphi 0, %s485
    $region4: #{decoder_forward.3} parent=1 // loop_header_branch
      %46 = sbr.rel (%p44) target = $region8
    $region5: #{decoder_forward.3} parent=1 // loop_body
      %s48 = ssub.s32 %s43, 1
      %s49 = ssub.s32 %s43, 2
      %s56 = sadd.s32 1, %s51
      %p57 = scmp.ge.s32.totalorder %s56, 2
      %s58 = scalar_select %p57, 0, %s56
      %s59 = sadd.s32 1, %s50
      %s60 = scalar_select %p57, %s59, %s50
      %p61 = scmp.ge.s32.totalorder %s60, 2
      %s62 = scalar_select %p61, 0, %s60
      %s63 = ssub.s32 %s50, %s62
      %p64 = scmp.eq.s32.totalorder %s63, 0
      %s66 = sadd.s32 %s65, 1
      %s67 = scalar_select %p64, %s65, %s66
      %p70 = pneg %p64
      %p71 = scmp.eq.s32.totalorder %s43, 3
      %p72 = por %p70, %p71
      %p73 = scmp.ne.s32.totalorder %s65, %s68
      %p74 = scmp.eq.s32.totalorder %s43, 0
      %p75 = por %p73, %p74
      %p76 = scmp.ne.s32.totalorder %s65, %s68
      %p77 = scmp.eq.s32.totalorder %s48, 3
      %p78 = por %p76, %p77
      %p79 = scmp.ne.s32.totalorder %s68, %s69
      %p80 = scmp.eq.s32.totalorder %s48, 0
      %p81 = por %p79, %p80
      %p82 = scmp.ne.s32.totalorder %s68, %s69
      %p83 = scmp.eq.s32.totalorder %s49, 3
      %p84 = por %p82, %p83
      %p86 = scmp.ne.s32.totalorder %s69, %s85
      %p87 = scmp.eq.s32.totalorder %s49, 0
      %p88 = por %p86, %p87
      %s89 = ssub.s32 %s51, %s58
      %p90 = scmp.eq.s32.totalorder %s89, 0
      %s92 = sadd.s32 %s91, 1
      %s93 = scalar_select %p90, %s91, %s92
      %p96 = pneg %p90
      %p97 = scmp.eq.s32.totalorder %s43, 3
      %p98 = por %p96, %p97
      %p99 = scmp.ne.s32.totalorder %s91, %s94
      %p100 = scmp.eq.s32.totalorder %s43, 0
      %p101 = por %p99, %p100
      %p102 = scmp.ne.s32.totalorder %s91, %s94
      %p103 = scmp.eq.s32.totalorder %s48, 3
      %p104 = por %p102, %p103
      %p105 = scmp.ne.s32.totalorder %s94, %s95
      %p106 = scmp.eq.s32.totalorder %s48, 0
      %p107 = por %p105, %p106
      %p108 = scmp.ne.s32.totalorder %s94, %s95
      %p109 = scmp.eq.s32.totalorder %s49, 3
      %p110 = por %p108, %p109
      %p112 = scmp.ne.s32.totalorder %s95, %s111
      %p113 = scmp.eq.s32.totalorder %s49, 0
      %p114 = por %p112, %p113
      %s115 = ssub.s32 %s51, %s58
      %p116 = scmp.eq.s32.totalorder %s115, 0
      %s118 = sadd.s32 %s117, 1
      %s119 = scalar_select %p116, %s117, %s118
      %p122 = pneg %p116
      %p123 = scmp.eq.s32.totalorder %s43, 3
      %p124 = por %p122, %p123
      %p125 = scmp.ne.s32.totalorder %s117, %s120
      %p126 = scmp.eq.s32.totalorder %s43, 0
      %p127 = por %p125, %p126
      %p128 = scmp.ne.s32.totalorder %s117, %s120
      %p129 = scmp.eq.s32.totalorder %s48, 3
      %p130 = por %p128, %p129
      %p131 = scmp.ne.s32.totalorder %s120, %s121
      %p132 = scmp.eq.s32.totalorder %s48, 0
      %p133 = por %p131, %p132
      %p134 = scmp.ne.s32.totalorder %s120, %s121
      %p135 = scmp.eq.s32.totalorder %s49, 3
      %p136 = por %p134, %p135
      %p138 = scmp.ne.s32.totalorder %s121, %s137
      %p139 = scmp.eq.s32.totalorder %s49, 0
      %p140 = por %p138, %p139
      %s141 = ssub.s32 %s51, %s58
      %p142 = scmp.eq.s32.totalorder %s141, 0
      %s144 = sadd.s32 %s143, 1
      %s145 = scalar_select %p142, %s143, %s144
      %p148 = pneg %p142
      %p149 = scmp.eq.s32.totalorder %s43, 3
      %p150 = por %p148, %p149
      %p151 = scmp.ne.s32.totalorder %s143, %s146
      %p152 = scmp.eq.s32.totalorder %s43, 0
      %p153 = por %p151, %p152
      %p154 = scmp.ne.s32.totalorder %s143, %s146
      %p155 = scmp.eq.s32.totalorder %s48, 3
      %p156 = por %p154, %p155
      %p157 = scmp.ne.s32.totalorder %s146, %s147
      %p158 = scmp.eq.s32.totalorder %s48, 0
      %p159 = por %p157, %p158
      %p160 = scmp.ne.s32.totalorder %s146, %s147
      %p161 = scmp.eq.s32.totalorder %s49, 3
      %p162 = por %p160, %p161
      %p164 = scmp.ne.s32.totalorder %s147, %s163
      %p165 = scmp.eq.s32.totalorder %s49, 0
      %p166 = por %p164, %p165
      %s167 = ssub.s32 %s51, %s58
      %p168 = scmp.eq.s32.totalorder %s167, 0
      %s170 = sadd.s32 %s169, 1
      %s171 = scalar_select %p168, %s169, %s170
      %p174 = pneg %p168
      %p175 = scmp.eq.s32.totalorder %s43, 3
      %p176 = por %p174, %p175
      %p177 = scmp.ne.s32.totalorder %s169, %s172
      %p178 = scmp.eq.s32.totalorder %s43, 0
      %p179 = por %p177, %p178
      %p180 = scmp.ne.s32.totalorder %s169, %s172
      %p181 = scmp.eq.s32.totalorder %s48, 3
      %p182 = por %p180, %p181
      %p183 = scmp.ne.s32.totalorder %s172, %s173
      %p184 = scmp.eq.s32.totalorder %s48, 0
      %p185 = por %p183, %p184
      %p186 = scmp.ne.s32.totalorder %s172, %s173
      %p187 = scmp.eq.s32.totalorder %s49, 3
      %p188 = por %p186, %p187
      %p190 = scmp.ne.s32.totalorder %s173, %s189
      %p191 = scmp.eq.s32.totalorder %s49, 0
      %p192 = por %p190, %p191
      %s193 = ssub.s32 %s51, %s58
      %p194 = scmp.eq.s32.totalorder %s193, 0
      %s196 = sadd.s32 %s195, 1
      %s197 = scalar_select %p194, %s195, %s196
      %p200 = pneg %p194
      %p201 = scmp.eq.s32.totalorder %s43, 3
      %p202 = por %p200, %p201
      %p203 = scmp.ne.s32.totalorder %s195, %s198
      %p204 = scmp.eq.s32.totalorder %s43, 0
      %p205 = por %p203, %p204
      %p206 = scmp.ne.s32.totalorder %s195, %s198
      %p207 = scmp.eq.s32.totalorder %s48, 3
      %p208 = por %p206, %p207
      %p209 = scmp.ne.s32.totalorder %s198, %s199
      %p210 = scmp.eq.s32.totalorder %s48, 0
      %p211 = por %p209, %p210
      %p212 = scmp.ne.s32.totalorder %s198, %s199
      %p213 = scmp.eq.s32.totalorder %s49, 3
      %p214 = por %p212, %p213
      %p216 = scmp.ne.s32.totalorder %s199, %s215
      %p217 = scmp.eq.s32.totalorder %s49, 0
      %p218 = por %p216, %p217
      %s219 = ssub.s32 %s51, %s58
      %p220 = scmp.eq.s32.totalorder %s219, 0
      %s222 = sadd.s32 %s221, 1
      %s223 = scalar_select %p220, %s221, %s222
      %p226 = pneg %p220
      %p227 = scmp.eq.s32.totalorder %s43, 3
      %p228 = por %p226, %p227
      %p229 = scmp.ne.s32.totalorder %s221, %s224
      %p230 = scmp.eq.s32.totalorder %s43, 0
      %p231 = por %p229, %p230
      %p232 = scmp.ne.s32.totalorder %s221, %s224
      %p233 = scmp.eq.s32.totalorder %s48, 3
      %p234 = por %p232, %p233
      %p235 = scmp.ne.s32.totalorder %s224, %s225
      %p236 = scmp.eq.s32.totalorder %s48, 0
      %p237 = por %p235, %p236
      %p238 = scmp.ne.s32.totalorder %s224, %s225
      %p239 = scmp.eq.s32.totalorder %s49, 3
      %p240 = por %p238, %p239
      %p242 = scmp.ne.s32.totalorder %s225, %s241
      %p243 = scmp.eq.s32.totalorder %s49, 0
      %p244 = por %p242, %p243
      %s245 = ssub.s32 %s51, %s58
      %p246 = scmp.eq.s32.totalorder %s245, 0
      %s248 = sadd.s32 %s247, 1
      %s249 = scalar_select %p246, %s247, %s248
      %p252 = pneg %p246
      %p253 = scmp.eq.s32.totalorder %s43, 3
      %p254 = por %p252, %p253
      %p255 = scmp.ne.s32.totalorder %s247, %s250
      %p256 = scmp.eq.s32.totalorder %s43, 0
      %p257 = por %p255, %p256
      %p258 = scmp.ne.s32.totalorder %s247, %s250
      %p259 = scmp.eq.s32.totalorder %s48, 3
      %p260 = por %p258, %p259
      %p261 = scmp.ne.s32.totalorder %s250, %s251
      %p262 = scmp.eq.s32.totalorder %s48, 0
      %p263 = por %p261, %p262
      %p264 = scmp.ne.s32.totalorder %s250, %s251
      %p265 = scmp.eq.s32.totalorder %s49, 3
      %p266 = por %p264, %p265
      %p268 = scmp.ne.s32.totalorder %s251, %s267
      %p269 = scmp.eq.s32.totalorder %s49, 0
      %p270 = por %p268, %p269
      %s271 = ssub.s32 %s51, %s58
      %p272 = scmp.eq.s32.totalorder %s271, 0
      %s274 = sadd.s32 %s273, 1
      %s275 = scalar_select %p272, %s273, %s274
      %p278 = pneg %p272
      %p279 = scmp.eq.s32.totalorder %s43, 3
      %p280 = por %p278, %p279
      %p281 = scmp.ne.s32.totalorder %s273, %s276
      %p282 = scmp.eq.s32.totalorder %s43, 0
      %p283 = por %p281, %p282
      %p284 = scmp.ne.s32.totalorder %s273, %s276
      %p285 = scmp.eq.s32.totalorder %s48, 3
      %p286 = por %p284, %p285
      %p287 = scmp.ne.s32.totalorder %s276, %s277
      %p288 = scmp.eq.s32.totalorder %s48, 0
      %p289 = por %p287, %p288
      %p290 = scmp.ne.s32.totalorder %s276, %s277
      %p291 = scmp.eq.s32.totalorder %s49, 3
      %p292 = por %p290, %p291
      %p294 = scmp.ne.s32.totalorder %s277, %s293
      %p295 = scmp.eq.s32.totalorder %s49, 0
      %p296 = por %p294, %p295
      %s297 = ssub.s32 %s51, %s58
      %p298 = scmp.eq.s32.totalorder %s297, 0
      %s300 = sadd.s32 %s299, 1
      %s301 = scalar_select %p298, %s299, %s300
      %p304 = pneg %p298
      %p305 = scmp.eq.s32.totalorder %s43, 3
      %p306 = por %p304, %p305
      %p307 = scmp.ne.s32.totalorder %s299, %s302
      %p308 = scmp.eq.s32.totalorder %s43, 0
      %p309 = por %p307, %p308
      %p310 = scmp.ne.s32.totalorder %s299, %s302
      %p311 = scmp.eq.s32.totalorder %s48, 3
      %p312 = por %p310, %p311
      %p313 = scmp.ne.s32.totalorder %s302, %s303
      %p314 = scmp.eq.s32.totalorder %s48, 0
      %p315 = por %p313, %p314
      %p316 = scmp.ne.s32.totalorder %s302, %s303
      %p317 = scmp.eq.s32.totalorder %s49, 3
      %p318 = por %p316, %p317
      %p320 = scmp.ne.s32.totalorder %s303, %s319
      %p321 = scmp.eq.s32.totalorder %s49, 0
      %p322 = por %p320, %p321
      %s323 = ssub.s32 %s51, %s58
      %p324 = scmp.eq.s32.totalorder %s323, 0
      %s326 = sadd.s32 %s325, 1
      %s327 = scalar_select %p324, %s325, %s326
      %p330 = pneg %p324
      %p331 = scmp.eq.s32.totalorder %s43, 3
      %p332 = por %p330, %p331
      %p333 = scmp.ne.s32.totalorder %s325, %s328
      %p334 = scmp.eq.s32.totalorder %s43, 0
      %p335 = por %p333, %p334
      %p336 = scmp.ne.s32.totalorder %s325, %s328
      %p337 = scmp.eq.s32.totalorder %s48, 3
      %p338 = por %p336, %p337
      %p339 = scmp.ne.s32.totalorder %s328, %s329
      %p340 = scmp.eq.s32.totalorder %s48, 0
      %p341 = por %p339, %p340
      %p342 = scmp.ne.s32.totalorder %s328, %s329
      %p343 = scmp.eq.s32.totalorder %s49, 3
      %p344 = por %p342, %p343
      %p346 = scmp.ne.s32.totalorder %s329, %s345
      %p347 = scmp.eq.s32.totalorder %s49, 0
      %p348 = por %p346, %p347
      %s349 = ssub.s32 %s51, %s58
      %p350 = scmp.eq.s32.totalorder %s349, 0
      %s352 = sadd.s32 %s351, 1
      %s353 = scalar_select %p350, %s351, %s352
      %p356 = pneg %p350
      %p357 = scmp.eq.s32.totalorder %s43, 3
      %p358 = por %p356, %p357
      %p359 = scmp.ne.s32.totalorder %s351, %s354
      %p360 = scmp.eq.s32.totalorder %s43, 0
      %p361 = por %p359, %p360
      %p362 = scmp.ne.s32.totalorder %s351, %s354
      %p363 = scmp.eq.s32.totalorder %s48, 3
      %p364 = por %p362, %p363
      %p365 = scmp.ne.s32.totalorder %s354, %s355
      %p366 = scmp.eq.s32.totalorder %s48, 0
      %p367 = por %p365, %p366
      %p368 = scmp.ne.s32.totalorder %s354, %s355
      %p369 = scmp.eq.s32.totalorder %s49, 3
      %p370 = por %p368, %p369
      %p372 = scmp.ne.s32.totalorder %s355, %s371
      %p373 = scmp.eq.s32.totalorder %s49, 0
      %p374 = por %p372, %p373
      %s375 = ssub.s32 %s51, %s58
      %p376 = scmp.eq.s32.totalorder %s375, 0
      %s378 = sadd.s32 %s377, 1
      %s379 = scalar_select %p376, %s377, %s378
      %p382 = pneg %p376
      %p383 = scmp.eq.s32.totalorder %s43, 3
      %p384 = por %p382, %p383
      %p385 = scmp.ne.s32.totalorder %s377, %s380
      %p386 = scmp.eq.s32.totalorder %s43, 0
      %p387 = por %p385, %p386
      %p388 = scmp.ne.s32.totalorder %s377, %s380
      %p389 = scmp.eq.s32.totalorder %s48, 3
      %p390 = por %p388, %p389
      %p391 = scmp.ne.s32.totalorder %s380, %s381
      %p392 = scmp.eq.s32.totalorder %s48, 0
      %p393 = por %p391, %p392
      %p394 = scmp.ne.s32.totalorder %s380, %s381
      %p395 = scmp.eq.s32.totalorder %s49, 3
      %p396 = por %p394, %p395
      %p398 = scmp.ne.s32.totalorder %s381, %s397
      %p399 = scmp.eq.s32.totalorder %s49, 0
      %p400 = por %p398, %p399
      %s401 = ssub.s32 %s51, %s58
      %p402 = scmp.eq.s32.totalorder %s401, 0
      %s404 = sadd.s32 %s403, 1
      %s405 = scalar_select %p402, %s403, %s404
      %p408 = pneg %p402
      %p409 = scmp.eq.s32.totalorder %s43, 3
      %p410 = por %p408, %p409
      %p411 = scmp.ne.s32.totalorder %s403, %s406
      %p412 = scmp.eq.s32.totalorder %s43, 0
      %p413 = por %p411, %p412
      %p414 = scmp.ne.s32.totalorder %s403, %s406
      %p415 = scmp.eq.s32.totalorder %s48, 3
      %p416 = por %p414, %p415
      %p417 = scmp.ne.s32.totalorder %s406, %s407
      %p418 = scmp.eq.s32.totalorder %s48, 0
      %p419 = por %p417, %p418
      %p420 = scmp.ne.s32.totalorder %s406, %s407
      %p421 = scmp.eq.s32.totalorder %s49, 3
      %p422 = por %p420, %p421
      %p424 = scmp.ne.s32.totalorder %s407, %s423
      %p425 = scmp.eq.s32.totalorder %s49, 0
      %p426 = por %p424, %p425
      %s427 = ssub.s32 %s51, %s58
      %p428 = scmp.eq.s32.totalorder %s427, 0
      %s430 = sadd.s32 %s429, 1
      %s431 = scalar_select %p428, %s429, %s430
      %p434 = pneg %p428
      %p435 = scmp.eq.s32.totalorder %s43, 3
      %p436 = por %p434, %p435
      %p437 = scmp.ne.s32.totalorder %s429, %s432
      %p438 = scmp.eq.s32.totalorder %s43, 0
      %p439 = por %p437, %p438
      %p440 = scmp.ne.s32.totalorder %s429, %s432
      %p441 = scmp.eq.s32.totalorder %s48, 3
      %p442 = por %p440, %p441
      %p443 = scmp.ne.s32.totalorder %s432, %s433
      %p444 = scmp.eq.s32.totalorder %s48, 0
      %p445 = por %p443, %p444
      %p446 = scmp.ne.s32.totalorder %s432, %s433
      %p447 = scmp.eq.s32.totalorder %s49, 3
      %p448 = por %p446, %p447
      %p450 = scmp.ne.s32.totalorder %s433, %s449
      %p451 = scmp.eq.s32.totalorder %s49, 0
      %p452 = por %p450, %p451
      %s453 = ssub.s32 %s51, %s58
      %p454 = scmp.eq.s32.totalorder %s453, 0
      %s456 = sadd.s32 %s455, 1
      %s457 = scalar_select %p454, %s455, %s456
      %p460 = pneg %p454
      %p461 = scmp.eq.s32.totalorder %s43, 3
      %p462 = por %p460, %p461
      %p463 = scmp.ne.s32.totalorder %s455, %s458
      %p464 = scmp.eq.s32.totalorder %s43, 0
      %p465 = por %p463, %p464
      %p466 = scmp.ne.s32.totalorder %s455, %s458
      %p467 = scmp.eq.s32.totalorder %s48, 3
      %p468 = por %p466, %p467
      %p469 = scmp.ne.s32.totalorder %s458, %s459
      %p470 = scmp.eq.s32.totalorder %s48, 0
      %p471 = por %p469, %p470
      %p472 = scmp.ne.s32.totalorder %s458, %s459
      %p473 = scmp.eq.s32.totalorder %s49, 3
      %p474 = por %p472, %p473
      %p476 = scmp.ne.s32.totalorder %s459, %s475
      %p477 = scmp.eq.s32.totalorder %s49, 0
      %p478 = por %p476, %p477
      %s479 = ssub.s32 %s50, %s62
      %p480 = scmp.eq.s32.totalorder %s479, 0
      %s482 = sadd.s32 %s481, 1
      %s483 = scalar_select %p480, %s481, %s482
      %p486 = pneg %p480
      %p487 = scmp.eq.s32.totalorder %s43, 3
      %p488 = por %p486, %p487
      %p489 = scmp.ne.s32.totalorder %s481, %s484
      %p490 = scmp.eq.s32.totalorder %s43, 0
      %p491 = por %p489, %p490
      %p492 = scmp.ne.s32.totalorder %s481, %s484
      %p493 = scmp.eq.s32.totalorder %s48, 3
      %p494 = por %p492, %p493
      %p495 = scmp.ne.s32.totalorder %s484, %s485
      %p496 = scmp.eq.s32.totalorder %s48, 0
      %p497 = por %p495, %p496
      %p498 = scmp.ne.s32.totalorder %s484, %s485
      %p499 = scmp.eq.s32.totalorder %s49, 3
      %p500 = por %p498, %p499
      %p502 = scmp.ne.s32.totalorder %s485, %s501
      %p503 = scmp.eq.s32.totalorder %s49, 0
      %p504 = por %p502, %p503
      %p505 = scmp.le.s32.totalorder 1, %s43
      %p506 = scmp.lt.s32.totalorder %s43, 5
      %p507 = pnand %p505, %p506
      %p508 = pneg %p507
      // Predicated region
      $region9: #{decoder_forward.3} parent=5 // pred_check
        _
      $region10: #{decoder_forward.3} parent=5 // pred_check_branch
        %510 = sbr.rel (%p507) target = $region12
      $region11: #{decoder_forward.3} parent=5 // pred_region
        %s511 = ssub.s32 %s43, 1
      $region12: #{decoder_forward.3} parent=5 // pred_fallthru
        _
      %p512 = scmp.lt.s32.totalorder %s43, 4
      // Predicated region
      $region13: #{decoder_forward.3} parent=5 // pred_check
        %p513 = pneg %p512
      $region14: #{decoder_forward.3} parent=5 // pred_check_branch
        %515 = sbr.rel (%p513) target = $region16
      $region15: #{decoder_forward.3} parent=5 // pred_region
        // Predicated region
        $region17: #{decoder_forward.3} parent=15 // pred_check
          %p516 = pneg %p75
        $region18: #{decoder_forward.3} parent=15 // pred_check_branch
          %518 = sbr.rel (%p516) target = $region20
        $region19: #{decoder_forward.3} parent=15 // pred_region
          %p519 = scmp.lt.s32.totalorder %s50, 1
          %s520 = scalar_select %p519, %s50, 1
          %s521 = smul.addr %s520, 8
          %s522 = scalar_lea.vmem %s0, %s521
        $region20: #{decoder_forward.3} parent=15 // pred_fallthru
          _
        // Predicated region
        $region21: #{decoder_forward.3} parent=15 // pred_check
          %p523 = pneg %p101
        $region22: #{decoder_forward.3} parent=15 // pred_check_branch
          %525 = sbr.rel (%p523) target = $region24
        $region23: #{decoder_forward.3} parent=15 // pred_region
          %p526 = scmp.lt.s32.totalorder %s51, 1
          %s527 = scalar_select %p526, %s51, 1
          %s528 = smul.addr %s527, 2
          %s529 = smul.addr %s528, 4
          %s530 = scalar_lea.vmem %s1, %s529
        $region24: #{decoder_forward.3} parent=15 // pred_fallthru
          _
        // Predicated region
        $region25: #{decoder_forward.3} parent=15 // pred_check
          %p531 = pneg %p127
        $region26: #{decoder_forward.3} parent=15 // pred_check_branch
          %533 = sbr.rel (%p531) target = $region28
        $region27: #{decoder_forward.3} parent=15 // pred_region
          %s534 = sand.u32 %s117, 1
          %s535 = scalar_lea.sflag [#allocation4], %s534
          %s536 = sand.u32 %s117, 1
          %s537 = scalar_lea.vmem [#allocation3], %s536
          %s539 = ssub.s32 16, 16
          %540 = vsyncadd %s535, %s539
          %s541 = smul.addr %s51, 16
          %s542 = scalar_lea.hbm %s2, %s541
          %s544 = sshll.u32 %s537, 4
          %s545 = int_to_ptr.vmem [resolvable:$true] %s544
          %547 = dma.hbm_to_vmem [thread:$0]  %s542, 16, %s545, %s535
        $region28: #{decoder_forward.3} parent=15 // pred_fallthru
          _
        // Predicated region
        $region29: #{decoder_forward.3} parent=15 // pred_check
          %p548 = pneg %p153
        $region30: #{decoder_forward.3} parent=15 // pred_check_branch
          %550 = sbr.rel (%p548) target = $region32
        $region31: #{decoder_forward.3} parent=15 // pred_region
          %p551 = scmp.lt.s32.totalorder %s51, 1
          %s552 = scalar_select %p551, %s51, 1
          %s553 = smul.addr %s552, 2
          %s554 = smul.addr %s553, 4
          %s555 = scalar_lea.vmem %s3, %s554
        $region32: #{decoder_forward.3} parent=15 // pred_fallthru
          _
        // Predicated region
        $region33: #{decoder_forward.3} parent=15 // pred_check
          %p556 = pneg %p179
        $region34: #{decoder_forward.3} parent=15 // pred_check_branch
          %558 = sbr.rel (%p556) target = $region36
        $region35: #{decoder_forward.3} parent=15 // pred_region
          %s559 = sand.u32 %s43, 1
          %s560 = scalar_lea.sflag [#allocation6], %s559
          %s561 = sand.u32 %s169, 1
          %s562 = scalar_lea.vmem [#allocation5], %s561
          %s564 = ssub.s32 16, 16
          %565 = vsyncadd %s560, %s564
          %s566 = smul.addr %s51, 16
          %s567 = scalar_lea.hbm %s4, %s566
          %s569 = sshll.u32 %s562, 4
          %s570 = int_to_ptr.vmem [resolvable:$true] %s569
          %572 = dma.hbm_to_vmem [thread:$0]  %s567, 16, %s570, %s560
        $region36: #{decoder_forward.3} parent=15 // pred_fallthru
          _
        // Predicated region
        $region37: #{decoder_forward.3} parent=15 // pred_check
          %p573 = pneg %p205
        $region38: #{decoder_forward.3} parent=15 // pred_check_branch
          %575 = sbr.rel (%p573) target = $region40
        $region39: #{decoder_forward.3} parent=15 // pred_region
          %s576 = sand.u32 %s43, 1
          %s577 = scalar_lea.sflag [#allocation6], %s576
          %s578 = sand.u32 %s195, 1
          %s579 = smul.addr %s578, 8
          %s580 = scalar_lea.vmem [#allocation7], %s579
          %s582 = ssub.s32 128, 128
          %583 = vsyncadd %s577, %s582
          %s584 = smul.addr %s51, 2
          %s585 = smul.addr %s584, 64
          %s586 = scalar_lea.hbm %s5, %s585
          %s587 = sshll.u32 %s580, 4
          %s588 = int_to_ptr.vmem [resolvable:$true] %s587
          %593 = dma.hbm_to_vmem [thread:$0]  %s586, 128, %s588, %s577, 64, 64, 4
        $region40: #{decoder_forward.3} parent=15 // pred_fallthru
          _
        // Predicated region
        $region41: #{decoder_forward.3} parent=15 // pred_check
          %p594 = pneg %p231
        $region42: #{decoder_forward.3} parent=15 // pred_check_branch
          %596 = sbr.rel (%p594) target = $region44
        $region43: #{decoder_forward.3} parent=15 // pred_region
          %s597 = sand.u32 %s43, 1
          %s598 = scalar_lea.sflag [#allocation9], %s597
          %s599 = sand.u32 %s221, 1
          %s600 = scalar_lea.vmem [#allocation8], %s599
          %s602 = ssub.s32 16, 16
          %603 = vsyncadd %s598, %s602
          %s604 = smul.addr %s51, 16
          %s605 = scalar_lea.hbm %s6, %s604
          %s607 = sshll.u32 %s600, 4
          %s608 = int_to_ptr.vmem [resolvable:$true] %s607
          %610 = dma.hbm_to_vmem [thread:$0]  %s605, 16, %s608, %s598
        $region44: #{decoder_forward.3} parent=15 // pred_fallthru
          _
        // Predicated region
        $region45: #{decoder_forward.3} parent=15 // pred_check
          %p611 = pneg %p257
        $region46: #{decoder_forward.3} parent=15 // pred_check_branch
          %613 = sbr.rel (%p611) target = $region48
        $region47: #{decoder_forward.3} parent=15 // pred_region
          %s614 = sand.u32 %s43, 1
          %s615 = scalar_lea.sflag [#allocation9], %s614
          %s616 = sand.u32 %s247, 1
          %s617 = smul.addr %s616, 8
          %s618 = scalar_lea.vmem [#allocation10], %s617
          %s620 = ssub.s32 128, 128
          %621 = vsyncadd %s615, %s620
          %s622 = smul.addr %s51, 2
          %s623 = smul.addr %s622, 64
          %s624 = scalar_lea.hbm %s7, %s623
          %s625 = sshll.u32 %s618, 4
          %s626 = int_to_ptr.vmem [resolvable:$true] %s625
          %631 = dma.hbm_to_vmem [thread:$0]  %s624, 128, %s626, %s615, 64, 64, 4
        $region48: #{decoder_forward.3} parent=15 // pred_fallthru
          _
        // Predicated region
        $region49: #{decoder_forward.3} parent=15 // pred_check
          %p632 = pneg %p283
        $region50: #{decoder_forward.3} parent=15 // pred_check_branch
          %634 = sbr.rel (%p632) target = $region52
        $region51: #{decoder_forward.3} parent=15 // pred_region
          %s635 = sand.u32 %s43, 1
          %s636 = scalar_lea.sflag [#allocation12], %s635
          %s637 = sand.u32 %s273, 1
          %s638 = scalar_lea.vmem [#allocation11], %s637
          %s640 = ssub.s32 16, 16
          %641 = vsyncadd %s636, %s640
          %s642 = smul.addr %s51, 16
          %s643 = scalar_lea.hbm %s8, %s642
          %s645 = sshll.u32 %s638, 4
          %s646 = int_to_ptr.vmem [resolvable:$true] %s645
          %648 = dma.hbm_to_vmem [thread:$0]  %s643, 16, %s646, %s636
        $region52: #{decoder_forward.3} parent=15 // pred_fallthru
          _
        // Predicated region
        $region53: #{decoder_forward.3} parent=15 // pred_check
          %p649 = pneg %p309
        $region54: #{decoder_forward.3} parent=15 // pred_check_branch
          %651 = sbr.rel (%p649) target = $region56
        $region55: #{decoder_forward.3} parent=15 // pred_region
          %s652 = sand.u32 %s43, 1
          %s653 = scalar_lea.sflag [#allocation12], %s652
          %s654 = sand.u32 %s299, 1
          %s655 = smul.addr %s654, 8
          %s656 = scalar_lea.vmem [#allocation13], %s655
          %s658 = ssub.s32 128, 128
          %659 = vsyncadd %s653, %s658
          %s660 = smul.addr %s51, 2
          %s661 = smul.addr %s660, 64
          %s662 = scalar_lea.hbm %s9, %s661
          %s663 = sshll.u32 %s656, 4
          %s664 = int_to_ptr.vmem [resolvable:$true] %s663
          %669 = dma.hbm_to_vmem [thread:$0]  %s662, 128, %s664, %s653, 64, 64, 4
        $region56: #{decoder_forward.3} parent=15 // pred_fallthru
          _
        // Predicated region
        $region57: #{decoder_forward.3} parent=15 // pred_check
          %p670 = pneg %p335
        $region58: #{decoder_forward.3} parent=15 // pred_check_branch
          %672 = sbr.rel (%p670) target = $region60
        $region59: #{decoder_forward.3} parent=15 // pred_region
          %s673 = sand.u32 %s43, 1
          %s674 = scalar_lea.sflag [#allocation15], %s673
          %s675 = sand.u32 %s325, 1
          %s676 = scalar_lea.vmem [#allocation14], %s675
          %s678 = ssub.s32 16, 16
          %679 = vsyncadd %s674, %s678
          %s680 = smul.addr %s51, 16
          %s681 = scalar_lea.hbm %s10, %s680
          %s683 = sshll.u32 %s676, 4
          %s684 = int_to_ptr.vmem [resolvable:$true] %s683
          %686 = dma.hbm_to_vmem [thread:$0]  %s681, 16, %s684, %s674
        $region60: #{decoder_forward.3} parent=15 // pred_fallthru
          _
        // Predicated region
        $region61: #{decoder_forward.3} parent=15 // pred_check
          %p687 = pneg %p361
        $region62: #{decoder_forward.3} parent=15 // pred_check_branch
          %689 = sbr.rel (%p687) target = $region64
        $region63: #{decoder_forward.3} parent=15 // pred_region
          %s690 = sand.u32 %s43, 1
          %s691 = scalar_lea.sflag [#allocation15], %s690
          %s692 = sand.u32 %s351, 1
          %s693 = smul.addr %s692, 8
          %s694 = scalar_lea.vmem [#allocation16], %s693
          %s696 = ssub.s32 128, 128
          %697 = vsyncadd %s691, %s696
          %s698 = smul.addr %s51, 2
          %s699 = smul.addr %s698, 64
          %s700 = scalar_lea.hbm %s11, %s699
          %s701 = sshll.u32 %s694, 4
          %s702 = int_to_ptr.vmem [resolvable:$true] %s701
          %707 = dma.hbm_to_vmem [thread:$0]  %s700, 128, %s702, %s691, 64, 64, 4
        $region64: #{decoder_forward.3} parent=15 // pred_fallthru
          _
        // Predicated region
        $region65: #{decoder_forward.3} parent=15 // pred_check
          %p708 = pneg %p387
        $region66: #{decoder_forward.3} parent=15 // pred_check_branch
          %710 = sbr.rel (%p708) target = $region68
        $region67: #{decoder_forward.3} parent=15 // pred_region
          %s711 = sand.u32 %s43, 1
          %s712 = scalar_lea.sflag [#allocation18], %s711
          %s713 = sand.u32 %s377, 1
          %s714 = scalar_lea.vmem [#allocation17], %s713
          %s716 = ssub.s32 16, 16
          %717 = vsyncadd %s712, %s716
          %s718 = smul.addr %s51, 16
          %s719 = scalar_lea.hbm %s12, %s718
          %s721 = sshll.u32 %s714, 4
          %s722 = int_to_ptr.vmem [resolvable:$true] %s721
          %724 = dma.hbm_to_vmem [thread:$0]  %s719, 16, %s722, %s712
        $region68: #{decoder_forward.3} parent=15 // pred_fallthru
          _
        // Predicated region
        $region69: #{decoder_forward.3} parent=15 // pred_check
          %p725 = pneg %p413
        $region70: #{decoder_forward.3} parent=15 // pred_check_branch
          %727 = sbr.rel (%p725) target = $region72
        $region71: #{decoder_forward.3} parent=15 // pred_region
          %s728 = sand.u32 %s43, 1
          %s729 = scalar_lea.sflag [#allocation18], %s728
          %s730 = sand.u32 %s403, 1
          %s731 = smul.addr %s730, 8
          %s732 = scalar_lea.vmem [#allocation19], %s731
          %s734 = ssub.s32 128, 128
          %735 = vsyncadd %s729, %s734
          %s736 = smul.addr %s51, 2
          %s737 = smul.addr %s736, 64
          %s738 = scalar_lea.hbm %s13, %s737
          %s739 = sshll.u32 %s732, 4
          %s740 = int_to_ptr.vmem [resolvable:$true] %s739
          %745 = dma.hbm_to_vmem [thread:$0]  %s738, 128, %s740, %s729, 64, 64, 4
        $region72: #{decoder_forward.3} parent=15 // pred_fallthru
          _
        // Predicated region
        $region73: #{decoder_forward.3} parent=15 // pred_check
          %p746 = pneg %p439
        $region74: #{decoder_forward.3} parent=15 // pred_check_branch
          %748 = sbr.rel (%p746) target = $region76
        $region75: #{decoder_forward.3} parent=15 // pred_region
          %s749 = sand.u32 %s43, 1
          %s750 = scalar_lea.sflag [#allocation21], %s749
          %s751 = sand.u32 %s429, 1
          %s752 = scalar_lea.vmem [#allocation20], %s751
          %s754 = ssub.s32 16, 16
          %755 = vsyncadd %s750, %s754
          %s756 = smul.addr %s51, 16
          %s757 = scalar_lea.hbm %s14, %s756
          %s759 = sshll.u32 %s752, 4
          %s760 = int_to_ptr.vmem [resolvable:$true] %s759
          %762 = dma.hbm_to_vmem [thread:$0]  %s757, 16, %s760, %s750
        $region76: #{decoder_forward.3} parent=15 // pred_fallthru
          _
        // Predicated region
        $region77: #{decoder_forward.3} parent=15 // pred_check
          %p763 = pneg %p465
        $region78: #{decoder_forward.3} parent=15 // pred_check_branch
          %765 = sbr.rel (%p763) target = $region80
        $region79: #{decoder_forward.3} parent=15 // pred_region
          %s766 = sand.u32 %s43, 1
          %s767 = scalar_lea.sflag [#allocation21], %s766
          %s768 = sand.u32 %s455, 1
          %s769 = smul.addr %s768, 4
          %s770 = scalar_lea.vmem [#allocation22], %s769
          %s772 = ssub.s32 64, 64
          %773 = vsyncadd %s767, %s772
          %s774 = smul.addr %s51, 64
          %s775 = scalar_lea.hbm %s15, %s774
          %s777 = sshll.u32 %s770, 4
          %s778 = int_to_ptr.vmem [resolvable:$true] %s777
          %780 = dma.hbm_to_vmem [thread:$0]  %s775, 64, %s778, %s767
        $region80: #{decoder_forward.3} parent=15 // pred_fallthru
          _
      $region16: #{decoder_forward.3} parent=5 // pred_fallthru
        _
      %p781 = scmp.le.s32.totalorder 1, %s43
      %p782 = scmp.lt.s32.totalorder %s43, 5
      %p783 = pnand %p781, %p782
      %p784 = pneg %p783
      // Predicated region
      $region81: #{decoder_forward.3} parent=5 // pred_check
        _
      $region82: #{decoder_forward.3} parent=5 // pred_check_branch
        %786 = sbr.rel (%p783) target = $region84
      $region83: #{decoder_forward.3} parent=5 // pred_region
        %s787 = ssub.s32 %s43, 1
        %s788 = sand.u32 %s120, 1
        %s789 = scalar_lea.sflag [#allocation4], %s788
        %s790 = sand.u32 %s120, 1
        %s791 = scalar_lea.vmem [#allocation3], %s790
        // Predicated region
        $region85: #{decoder_forward.3} parent=83 // pred_check
          %p792 = pneg %p133
        $region86: #{decoder_forward.3} parent=83 // pred_check_branch
          %794 = sbr.rel (%p792) target = $region88
        $region87: #{decoder_forward.3} parent=83 // pred_region
          %795 = dma.done %s789, 16
        $region88: #{decoder_forward.3} parent=83 // pred_fallthru
          _
        %s796 = sand.u32 %s48, 1
        %s797 = scalar_lea.sflag [#allocation6], %s796
        %s798 = sand.u32 %s172, 1
        %s799 = scalar_lea.vmem [#allocation5], %s798
        // Predicated region
        $region89: #{decoder_forward.3} parent=83 // pred_check
          %p800 = pneg %p185
        $region90: #{decoder_forward.3} parent=83 // pred_check_branch
          %802 = sbr.rel (%p800) target = $region92
        $region91: #{decoder_forward.3} parent=83 // pred_region
          %803 = dma.done %s797, 16
        $region92: #{decoder_forward.3} parent=83 // pred_fallthru
          _
        %s804 = sand.u32 %s48, 1
        %s805 = scalar_lea.sflag [#allocation6], %s804
        %s806 = sand.u32 %s198, 1
        %s807 = smul.addr %s806, 8
        %s808 = scalar_lea.vmem [#allocation7], %s807
        // Predicated region
        $region93: #{decoder_forward.3} parent=83 // pred_check
          %p809 = pneg %p211
        $region94: #{decoder_forward.3} parent=83 // pred_check_branch
          %811 = sbr.rel (%p809) target = $region96
        $region95: #{decoder_forward.3} parent=83 // pred_region
          %812 = dma.done %s805, 128
        $region96: #{decoder_forward.3} parent=83 // pred_fallthru
          _
        %s813 = sand.u32 %s48, 1
        %s814 = scalar_lea.sflag [#allocation9], %s813
        %s815 = sand.u32 %s224, 1
        %s816 = scalar_lea.vmem [#allocation8], %s815
        // Predicated region
        $region97: #{decoder_forward.3} parent=83 // pred_check
          %p817 = pneg %p237
        $region98: #{decoder_forward.3} parent=83 // pred_check_branch
          %819 = sbr.rel (%p817) target = $region100
        $region99: #{decoder_forward.3} parent=83 // pred_region
          %820 = dma.done %s814, 16
        $region100: #{decoder_forward.3} parent=83 // pred_fallthru
          _
        %s821 = sand.u32 %s48, 1
        %s822 = scalar_lea.sflag [#allocation9], %s821
        %s823 = sand.u32 %s250, 1
        %s824 = smul.addr %s823, 8
        %s825 = scalar_lea.vmem [#allocation10], %s824
        // Predicated region
        $region101: #{decoder_forward.3} parent=83 // pred_check
          %p826 = pneg %p263
        $region102: #{decoder_forward.3} parent=83 // pred_check_branch
          %828 = sbr.rel (%p826) target = $region104
        $region103: #{decoder_forward.3} parent=83 // pred_region
          %829 = dma.done %s822, 128
        $region104: #{decoder_forward.3} parent=83 // pred_fallthru
          _
        %s830 = sand.u32 %s48, 1
        %s831 = scalar_lea.sflag [#allocation12], %s830
        %s832 = sand.u32 %s276, 1
        %s833 = scalar_lea.vmem [#allocation11], %s832
        // Predicated region
        $region105: #{decoder_forward.3} parent=83 // pred_check
          %p834 = pneg %p289
        $region106: #{decoder_forward.3} parent=83 // pred_check_branch
          %836 = sbr.rel (%p834) target = $region108
        $region107: #{decoder_forward.3} parent=83 // pred_region
          %837 = dma.done %s831, 16
        $region108: #{decoder_forward.3} parent=83 // pred_fallthru
          _
        %s838 = sand.u32 %s48, 1
        %s839 = scalar_lea.sflag [#allocation12], %s838
        %s840 = sand.u32 %s302, 1
        %s841 = smul.addr %s840, 8
        %s842 = scalar_lea.vmem [#allocation13], %s841
        // Predicated region
        $region109: #{decoder_forward.3} parent=83 // pred_check
          %p843 = pneg %p315
        $region110: #{decoder_forward.3} parent=83 // pred_check_branch
          %845 = sbr.rel (%p843) target = $region112
        $region111: #{decoder_forward.3} parent=83 // pred_region
          %846 = dma.done %s839, 128
        $region112: #{decoder_forward.3} parent=83 // pred_fallthru
          _
        %s847 = sand.u32 %s48, 1
        %s848 = scalar_lea.sflag [#allocation15], %s847
        %s849 = sand.u32 %s328, 1
        %s850 = scalar_lea.vmem [#allocation14], %s849
        // Predicated region
        $region113: #{decoder_forward.3} parent=83 // pred_check
          %p851 = pneg %p341
        $region114: #{decoder_forward.3} parent=83 // pred_check_branch
          %853 = sbr.rel (%p851) target = $region116
        $region115: #{decoder_forward.3} parent=83 // pred_region
          %854 = dma.done %s848, 16
        $region116: #{decoder_forward.3} parent=83 // pred_fallthru
          _
        %s855 = sand.u32 %s48, 1
        %s856 = scalar_lea.sflag [#allocation15], %s855
        %s857 = sand.u32 %s354, 1
        %s858 = smul.addr %s857, 8
        %s859 = scalar_lea.vmem [#allocation16], %s858
        // Predicated region
        $region117: #{decoder_forward.3} parent=83 // pred_check
          %p860 = pneg %p367
        $region118: #{decoder_forward.3} parent=83 // pred_check_branch
          %862 = sbr.rel (%p860) target = $region120
        $region119: #{decoder_forward.3} parent=83 // pred_region
          %863 = dma.done %s856, 128
        $region120: #{decoder_forward.3} parent=83 // pred_fallthru
          _
        %s864 = sand.u32 %s48, 1
        %s865 = scalar_lea.sflag [#allocation18], %s864
        %s866 = sand.u32 %s380, 1
        %s867 = scalar_lea.vmem [#allocation17], %s866
        // Predicated region
        $region121: #{decoder_forward.3} parent=83 // pred_check
          %p868 = pneg %p393
        $region122: #{decoder_forward.3} parent=83 // pred_check_branch
          %870 = sbr.rel (%p868) target = $region124
        $region123: #{decoder_forward.3} parent=83 // pred_region
          %871 = dma.done %s865, 16
        $region124: #{decoder_forward.3} parent=83 // pred_fallthru
          _
        %s872 = sand.u32 %s48, 1
        %s873 = scalar_lea.sflag [#allocation18], %s872
        %s874 = sand.u32 %s406, 1
        %s875 = smul.addr %s874, 8
        %s876 = scalar_lea.vmem [#allocation19], %s875
        // Predicated region
        $region125: #{decoder_forward.3} parent=83 // pred_check
          %p877 = pneg %p419
        $region126: #{decoder_forward.3} parent=83 // pred_check_branch
          %879 = sbr.rel (%p877) target = $region128
        $region127: #{decoder_forward.3} parent=83 // pred_region
          %880 = dma.done %s873, 128
        $region128: #{decoder_forward.3} parent=83 // pred_fallthru
          _
        %s881 = sand.u32 %s48, 1
        %s882 = scalar_lea.sflag [#allocation21], %s881
        %s883 = sand.u32 %s432, 1
        %s884 = scalar_lea.vmem [#allocation20], %s883
        // Predicated region
        $region129: #{decoder_forward.3} parent=83 // pred_check
          %p885 = pneg %p445
        $region130: #{decoder_forward.3} parent=83 // pred_check_branch
          %887 = sbr.rel (%p885) target = $region132
        $region131: #{decoder_forward.3} parent=83 // pred_region
          %888 = dma.done %s882, 16
        $region132: #{decoder_forward.3} parent=83 // pred_fallthru
          _
        %s889 = sand.u32 %s48, 1
        %s890 = scalar_lea.sflag [#allocation21], %s889
        %s891 = sand.u32 %s458, 1
        %s892 = smul.addr %s891, 4
        %s893 = scalar_lea.vmem [#allocation22], %s892
        // Predicated region
        $region133: #{decoder_forward.3} parent=83 // pred_check
          %p894 = pneg %p471
        $region134: #{decoder_forward.3} parent=83 // pred_check_branch
          %896 = sbr.rel (%p894) target = $region136
        $region135: #{decoder_forward.3} parent=83 // pred_region
          %897 = dma.done %s890, 64
        $region136: #{decoder_forward.3} parent=83 // pred_fallthru
          _
        %p898 = scmp.lt.s32.totalorder %s52, 1
        %s899 = scalar_select %p898, %s52, 1
        %s900 = smul.addr %s899, 8
        %s901 = scalar_lea.vmem %s0, %s900
        %p902 = pneg %p81
        %p903 = pneg %p78
        %p904 = scmp.lt.s32.totalorder %s53, 1
        %s905 = scalar_select %p904, %s53, 1
        %s906 = smul.addr %s905, 2
        %s907 = smul.addr %s906, 4
        %s908 = scalar_lea.vmem %s1, %s907
        %p909 = pneg %p107
        %p910 = pneg %p104
        %s911 = sand.u32 %s120, 1
        %s912 = scalar_lea.sflag [#allocation4], %s911
        %s913 = sand.u32 %s120, 1
        %s914 = scalar_lea.vmem [#allocation3], %s913
        %p915 = pneg %p133
        %p916 = pneg %p130
        %p917 = scmp.lt.s32.totalorder %s53, 1
        %s918 = scalar_select %p917, %s53, 1
        %s919 = smul.addr %s918, 2
        %s920 = smul.addr %s919, 4
        %s921 = scalar_lea.vmem %s3, %s920
        %p922 = pneg %p159
        %p923 = pneg %p156
        %s924 = sand.u32 %s48, 1
        %s925 = scalar_lea.sflag [#allocation6], %s924
        %s926 = sand.u32 %s172, 1
        %s927 = scalar_lea.vmem [#allocation5], %s926
        %p928 = pneg %p185
        %p929 = pneg %p182
        %s930 = sand.u32 %s48, 1
        %s931 = scalar_lea.sflag [#allocation6], %s930
        %s932 = sand.u32 %s198, 1
        %s933 = smul.addr %s932, 8
        %s934 = scalar_lea.vmem [#allocation7], %s933
        %p935 = pneg %p211
        %p936 = pneg %p208
        %s937 = sand.u32 %s48, 1
        %s938 = scalar_lea.sflag [#allocation9], %s937
        %s939 = sand.u32 %s224, 1
        %s940 = scalar_lea.vmem [#allocation8], %s939
        %p941 = pneg %p237
        %p942 = pneg %p234
        %s943 = sand.u32 %s48, 1
        %s944 = scalar_lea.sflag [#allocation9], %s943
        %s945 = sand.u32 %s250, 1
        %s946 = smul.addr %s945, 8
        %s947 = scalar_lea.vmem [#allocation10], %s946
        %p948 = pneg %p263
        %p949 = pneg %p260
        %s950 = sand.u32 %s48, 1
        %s951 = scalar_lea.sflag [#allocation12], %s950
        %s952 = sand.u32 %s276, 1
        %s953 = scalar_lea.vmem [#allocation11], %s952
        %p954 = pneg %p289
        %p955 = pneg %p286
        %s956 = sand.u32 %s48, 1
        %s957 = scalar_lea.sflag [#allocation12], %s956
        %s958 = sand.u32 %s302, 1
        %s959 = smul.addr %s958, 8
        %s960 = scalar_lea.vmem [#allocation13], %s959
        %p961 = pneg %p315
        %p962 = pneg %p312
        %s963 = sand.u32 %s48, 1
        %s964 = scalar_lea.sflag [#allocation15], %s963
        %s965 = sand.u32 %s328, 1
        %s966 = scalar_lea.vmem [#allocation14], %s965
        %p967 = pneg %p341
        %p968 = pneg %p338
        %s969 = sand.u32 %s48, 1
        %s970 = scalar_lea.sflag [#allocation15], %s969
        %s971 = sand.u32 %s354, 1
        %s972 = smul.addr %s971, 8
        %s973 = scalar_lea.vmem [#allocation16], %s972
        %p974 = pneg %p367
        %p975 = pneg %p364
        %s976 = sand.u32 %s48, 1
        %s977 = scalar_lea.sflag [#allocation18], %s976
        %s978 = sand.u32 %s380, 1
        %s979 = scalar_lea.vmem [#allocation17], %s978
        %p980 = pneg %p393
        %p981 = pneg %p390
        %s982 = sand.u32 %s48, 1
        %s983 = scalar_lea.sflag [#allocation18], %s982
        %s984 = sand.u32 %s406, 1
        %s985 = smul.addr %s984, 8
        %s986 = scalar_lea.vmem [#allocation19], %s985
        %p987 = pneg %p419
        %p988 = pneg %p416
        %s989 = sand.u32 %s48, 1
        %s990 = scalar_lea.sflag [#allocation21], %s989
        %s991 = sand.u32 %s432, 1
        %s992 = scalar_lea.vmem [#allocation20], %s991
        %p993 = pneg %p445
        %p994 = pneg %p442
        %s995 = sand.u32 %s48, 1
        %s996 = scalar_lea.sflag [#allocation21], %s995
        %s997 = sand.u32 %s458, 1
        %s998 = smul.addr %s997, 4
        %s999 = scalar_lea.vmem [#allocation22], %s998
        %p1000 = pneg %p471
        %p1001 = pneg %p468
        %p1002 = pneg %p497
        %p1003 = pneg %p494
        %p1004 = scmp.lt.s32.totalorder %s52, 1
        %s1005 = scalar_select %p1004, %s52, 1
        %s1006 = smul.addr %s1005, 8
        %s1007 = scalar_lea.vmem %s16, %s1006
        %p1008 = scmp.lt.s32.totalorder %s52, 1
        %s1009 = scalar_select %p1008, %s52, 1
        %s1010 = smul.addr %s1009, 8
        %s1011 = scalar_lea.vmem %s0, %s1010
        %p1012 = scmp.lt.s32.totalorder %s53, 1
        %s1013 = scalar_select %p1012, %s53, 1
        %s1014 = smul.addr %s1013, 2
        %s1015 = smul.addr %s1014, 4
        %s1016 = scalar_lea.vmem %s1, %s1015
        %p1017 = scmp.lt.s32.totalorder %s53, 1
        %s1018 = scalar_select %p1017, %s53, 1
        %s1019 = smul.addr %s1018, 2
        %s1020 = smul.addr %s1019, 4
        %s1021 = scalar_lea.vmem %s3, %s1020
        %p1022 = scmp.lt.s32.totalorder %s52, 1
        %s1023 = scalar_select %p1022, %s52, 1
        %s1024 = smul.addr %s1023, 8
        %s1025 = scalar_lea.vmem %s16, %s1024
        %p1027 = scmp.eq.s32.totalorder %s53, 0
        // Predicated region
        $region137: #{decoder_forward.3} parent=83 // pred_check
          %p1028 = pneg %p1027
        $region138: #{decoder_forward.3} parent=83 // pred_check_branch
          %1030 = sbr.rel (%p1028) target = $region140
        $region139: #{decoder_forward.3} parent=83 // pred_region
          %v1031 = vld [vmem:[%s1011] sm:$0xff]
          %vm1032 = vcmask 130048
          %1033 = vst.msk [vmem:[#allocation2] sm:$0xff] %vm1032, %v1031
          %v1034 = vld [vmem:[%s1011] sm:$0xff]
          %1035 = vst.msk [vmem:[%s1025] sm:$0xff] %vm1032, %v1034
        $region140: #{decoder_forward.3} parent=83 // pred_fallthru
          _
        %v1036 = vld [vmem:[#allocation2] sm:$0xff]
        %vm1037 = vcmask 130048
        %v1038 = vsel %vm1037, %v1036, 0.0
        %1039 = vadd.xlane.f32.xlu0 %v1038
        %v1040 = vpop.xlane.xlu0 %1039
        %v1041 = vrcp.pop 16.0
        %v1042 = vmul.f32 %v1040, %v1041
        %v1043 = vsub.f32 %v1036, %v1042
        %v1044 = vmul.f32 %v1043, %v1043
        %v1045 = vsel %vm1037, %v1044, 0.0
        %1046 = vadd.xlane.f32.xlu0 %v1045
        %v1047 = vpop.xlane.xlu0 %1046
        %v1048 = vmul.f32 %v1047, %v1041
        %v1049 = vadd.f32 %v1048, 1.1754944e-38
        %v1050 = vrsqrt.pop %v1049
        %v1051 = vmul.f32 %v1043, %v1050
        %v1052 = vld [vmem:[%s1016] sm:$0xf]
        %v1053 = vld [vmem:[%s1016 + $0x4] sm:$0xf]
        %v1054 = vpack.c.bf16 %v1051, %v1051
        %v1055 = vld [vmem:[%s791] sm:$0x1]
        %v1057 = vlaneseq
        %v1058 = vshrl.u32 %v1057, 7
        %v1059 = vsub.s32 0, %v1058
        %v1060 = vrot.slane %v1055, %v1059
        %v1064 = vunpack.c.l.b16 %v1052
        %v1065 = vunpack.c.l.b16 %v1053
        %v1066 = vpack.c.b16 %v1065, %v1064
        %v1069 = vsel %vm1037, %v1054, 0
        %1071 = vmatprep.subr.bf16.mxu0 0
        %1072 = vmatpush1.bf16.msra.mxu0 0
        %1073 = vmatprep.subr.bf16.mxu0 0
        %1074 = vmatpush1.bf16.msra.mxu0 0
        %1075 = vmatprep.subr.bf16.mxu0 0
        %1076 = vmatpush1.bf16.msra.mxu0 0
        %1077 = vmatprep.subr.bf16.mxu0 0
        %1078 = vmatpush1.bf16.msra.mxu0 0
        %1079 = vmatprep.subr.bf16.mxu0 0
        %1080 = vmatpush1.bf16.msra.mxu0 0
        %1081 = vmatprep.subr.bf16.mxu0 0
        %1082 = vmatpush1.bf16.msra.mxu0 0
        %1083 = vmatprep.subr.bf16.mxu0 0
        %1084 = vmatpush1.bf16.msra.mxu0 0
        %1085 = vmatprep.subr.bf16.mxu0 0
        %1086 = vmatpush1.bf16.msra.mxu0 %v1066
        %1087 = vmatprep.subr.bf16.mxu0 0
        %1088 = vmatpush2.bf16.msra.mxu0 0
        %1089 = vmatprep.subr.bf16.mxu0 0
        %1090 = vmatpush2.bf16.msra.mxu0 0
        %1091 = vmatprep.subr.bf16.mxu0 0
        %1092 = vmatpush2.bf16.msra.mxu0 0
        %1093 = vmatprep.subr.bf16.mxu0 0
        %1094 = vmatpush2.bf16.msra.mxu0 0
        %1095 = vmatprep.subr.bf16.mxu0 0
        %1096 = vmatpush2.bf16.msra.mxu0 0
        %1097 = vmatprep.subr.bf16.mxu0 0
        %1098 = vmatpush2.bf16.msra.mxu0 0
        %1099 = vmatprep.subr.bf16.mxu0 0
        %1100 = vmatpush2.bf16.msra.mxu0 0
        %1101 = vmatprep.subr.bf16.mxu0 0
        %1102 = vmatpush2.bf16.msra.mxu0 0
        %1103 = vmatprep.mubr.bf16.mxu0 0
        %1104 = vmatmul.mubr.bf16.gmra.mxu0 %v1069
        %v1105 = vpop.f32.mrf.mxu0
        %v1106 = vadd.f32 %v1060, %v1105
        %v1107 = vpop.f32.mrf.mxu0
        %v1108 = vpop.f32.mrf.mxu0
        %v1109 = vpop.f32.mrf.mxu0
        %1110 = vdwg.mxu0
        %v1111 = vld [vmem:[%s1021] sm:$0xf]
        %v1112 = vld [vmem:[%s1021 + $0x4] sm:$0xf]
        %v1113 = vld [vmem:[%s799] sm:$0x1]
        %v1115 = vlaneseq
        %v1116 = vshrl.u32 %v1115, 7
        %v1117 = vsub.s32 0, %v1116
        %v1118 = vrot.slane %v1113, %v1117
        %v1122 = vunpack.c.l.b16 %v1111
        %v1123 = vunpack.c.l.b16 %v1112
        %v1124 = vpack.c.b16 %v1123, %v1122
        %1126 = vmatprep.subr.bf16.mxu0 0
        %1127 = vmatpush1.bf16.msra.mxu0 0
        %1128 = vmatprep.subr.bf16.mxu0 0
        %1129 = vmatpush1.bf16.msra.mxu0 0
        %1130 = vmatprep.subr.bf16.mxu0 0
        %1131 = vmatpush1.bf16.msra.mxu0 0
        %1132 = vmatprep.subr.bf16.mxu0 0
        %1133 = vmatpush1.bf16.msra.mxu0 0
        %1134 = vmatprep.subr.bf16.mxu0 0
        %1135 = vmatpush1.bf16.msra.mxu0 0
        %1136 = vmatprep.subr.bf16.mxu0 0
        %1137 = vmatpush1.bf16.msra.mxu0 0
        %1138 = vmatprep.subr.bf16.mxu0 0
        %1139 = vmatpush1.bf16.msra.mxu0 0
        %1140 = vmatprep.subr.bf16.mxu0 0
        %1141 = vmatpush1.bf16.msra.mxu0 %v1124
        %1142 = vmatprep.subr.bf16.mxu0 0
        %1143 = vmatpush2.bf16.msra.mxu0 0
        %1144 = vmatprep.subr.bf16.mxu0 0
        %1145 = vmatpush2.bf16.msra.mxu0 0
        %1146 = vmatprep.subr.bf16.mxu0 0
        %1147 = vmatpush2.bf16.msra.mxu0 0
        %1148 = vmatprep.subr.bf16.mxu0 0
        %1149 = vmatpush2.bf16.msra.mxu0 0
        %1150 = vmatprep.subr.bf16.mxu0 0
        %1151 = vmatpush2.bf16.msra.mxu0 0
        %1152 = vmatprep.subr.bf16.mxu0 0
        %1153 = vmatpush2.bf16.msra.mxu0 0
        %1154 = vmatprep.subr.bf16.mxu0 0
        %1155 = vmatpush2.bf16.msra.mxu0 0
        %1156 = vmatprep.subr.bf16.mxu0 0
        %1157 = vmatpush2.bf16.msra.mxu0 0
        %1158 = vmatprep.mubr.bf16.mxu0 0
        %1159 = vmatmul.mubr.bf16.gmra.mxu0 %v1069
        %v1160 = vpop.f32.mrf.mxu0
        %v1161 = vadd.f32 %v1118, %v1160
        %v1162 = vpop.f32.mrf.mxu0
        %v1163 = vpop.f32.mrf.mxu0
        %v1164 = vpop.f32.mrf.mxu0
        %1165 = vdwg.mxu0
        %v1166 = vmax.f32 %v1161, 0.0
        %v1167 = vand.u32 2147483647, %v1161
        %v1168 = vsub.f32 0.0, %v1167
        %v1169 = vmul.f32 %v1168, 1.442695
        %v1170 = vpow.pop %v1169
        %v1171 = vadd.f32 %v1170, 1.0
        %v1172 = vlog2.pop %v1171
        %v1173 = vmul.f32 %v1172, 0.6931472
        %v1174 = vadd.f32 %v1166, %v1173
        %v1175 = vtanh.pop %v1174
        %v1176 = vmul.f32 %v1161, %v1175
        %v1177 = vmul.f32 %v1106, %v1176
        %v1178 = vld [vmem:[%s808] sm:$0xf]
        %v1179 = vld [vmem:[%s808 + $0x4] sm:$0xf]
        %v1180 = vpack.c.bf16 %v1177, %v1177
        %v1181 = vld [vmem:[%s816] sm:$0x1]
        %v1183 = vlaneseq
        %v1184 = vshrl.u32 %v1183, 7
        %v1185 = vsub.s32 0, %v1184
        %v1186 = vrot.slane %v1181, %v1185
        %v1190 = vunpack.c.l.b16 %v1178
        %v1191 = vunpack.c.l.b16 %v1179
        %v1192 = vpack.c.b16 %v1191, %v1190
        %v1195 = vsel %vm1037, %v1180, 0
        %1197 = vmatprep.subr.bf16.mxu0 0
        %1198 = vmatpush1.bf16.msra.mxu0 0
        %1199 = vmatprep.subr.bf16.mxu0 0
        %1200 = vmatpush1.bf16.msra.mxu0 0
        %1201 = vmatprep.subr.bf16.mxu0 0
        %1202 = vmatpush1.bf16.msra.mxu0 0
        %1203 = vmatprep.subr.bf16.mxu0 0
        %1204 = vmatpush1.bf16.msra.mxu0 0
        %1205 = vmatprep.subr.bf16.mxu0 0
        %1206 = vmatpush1.bf16.msra.mxu0 0
        %1207 = vmatprep.subr.bf16.mxu0 0
        %1208 = vmatpush1.bf16.msra.mxu0 0
        %1209 = vmatprep.subr.bf16.mxu0 0
        %1210 = vmatpush1.bf16.msra.mxu0 0
        %1211 = vmatprep.subr.bf16.mxu0 0
        %1212 = vmatpush1.bf16.msra.mxu0 %v1192
        %1213 = vmatprep.subr.bf16.mxu0 0
        %1214 = vmatpush2.bf16.msra.mxu0 0
        %1215 = vmatprep.subr.bf16.mxu0 0
        %1216 = vmatpush2.bf16.msra.mxu0 0
        %1217 = vmatprep.subr.bf16.mxu0 0
        %1218 = vmatpush2.bf16.msra.mxu0 0
        %1219 = vmatprep.subr.bf16.mxu0 0
        %1220 = vmatpush2.bf16.msra.mxu0 0
        %1221 = vmatprep.subr.bf16.mxu0 0
        %1222 = vmatpush2.bf16.msra.mxu0 0
        %1223 = vmatprep.subr.bf16.mxu0 0
        %1224 = vmatpush2.bf16.msra.mxu0 0
        %1225 = vmatprep.subr.bf16.mxu0 0
        %1226 = vmatpush2.bf16.msra.mxu0 0
        %1227 = vmatprep.subr.bf16.mxu0 0
        %1228 = vmatpush2.bf16.msra.mxu0 0
        %1229 = vmatprep.mubr.bf16.mxu0 0
        %1230 = vmatmul.mubr.bf16.gmra.mxu0 %v1195
        %v1231 = vpop.f32.mrf.mxu0
        %v1232 = vadd.f32 %v1186, %v1231
        %v1233 = vpop.f32.mrf.mxu0
        %v1234 = vpop.f32.mrf.mxu0
        %v1235 = vpop.f32.mrf.mxu0
        %1236 = vdwg.mxu0
        %v1237 = vld [vmem:[%s825] sm:$0xf]
        %v1238 = vld [vmem:[%s825 + $0x4] sm:$0xf]
        %v1239 = vld [vmem:[%s833] sm:$0x1]
        %v1241 = vlaneseq
        %v1242 = vshrl.u32 %v1241, 7
        %v1243 = vsub.s32 0, %v1242
        %v1244 = vrot.slane %v1239, %v1243
        %v1248 = vunpack.c.l.b16 %v1237
        %v1249 = vunpack.c.l.b16 %v1238
        %v1250 = vpack.c.b16 %v1249, %v1248
        %1252 = vmatprep.subr.bf16.mxu0 0
        %1253 = vmatpush1.bf16.msra.mxu0 0
        %1254 = vmatprep.subr.bf16.mxu0 0
        %1255 = vmatpush1.bf16.msra.mxu0 0
        %1256 = vmatprep.subr.bf16.mxu0 0
        %1257 = vmatpush1.bf16.msra.mxu0 0
        %1258 = vmatprep.subr.bf16.mxu0 0
        %1259 = vmatpush1.bf16.msra.mxu0 0
        %1260 = vmatprep.subr.bf16.mxu0 0
        %1261 = vmatpush1.bf16.msra.mxu0 0
        %1262 = vmatprep.subr.bf16.mxu0 0
        %1263 = vmatpush1.bf16.msra.mxu0 0
        %1264 = vmatprep.subr.bf16.mxu0 0
        %1265 = vmatpush1.bf16.msra.mxu0 0
        %1266 = vmatprep.subr.bf16.mxu0 0
        %1267 = vmatpush1.bf16.msra.mxu0 %v1250
        %1268 = vmatprep.subr.bf16.mxu0 0
        %1269 = vmatpush2.bf16.msra.mxu0 0
        %1270 = vmatprep.subr.bf16.mxu0 0
        %1271 = vmatpush2.bf16.msra.mxu0 0
        %1272 = vmatprep.subr.bf16.mxu0 0
        %1273 = vmatpush2.bf16.msra.mxu0 0
        %1274 = vmatprep.subr.bf16.mxu0 0
        %1275 = vmatpush2.bf16.msra.mxu0 0
        %1276 = vmatprep.subr.bf16.mxu0 0
        %1277 = vmatpush2.bf16.msra.mxu0 0
        %1278 = vmatprep.subr.bf16.mxu0 0
        %1279 = vmatpush2.bf16.msra.mxu0 0
        %1280 = vmatprep.subr.bf16.mxu0 0
        %1281 = vmatpush2.bf16.msra.mxu0 0
        %1282 = vmatprep.subr.bf16.mxu0 0
        %1283 = vmatpush2.bf16.msra.mxu0 0
        %1284 = vmatprep.mubr.bf16.mxu0 0
        %1285 = vmatmul.mubr.bf16.gmra.mxu0 %v1069
        %v1286 = vpop.f32.mrf.mxu0
        %v1287 = vadd.f32 %v1244, %v1286
        %v1288 = vpop.f32.mrf.mxu0
        %v1289 = vpop.f32.mrf.mxu0
        %v1290 = vpop.f32.mrf.mxu0
        %1291 = vdwg.mxu0
        %v1292 = vld [vmem:[%s842] sm:$0xf]
        %v1293 = vld [vmem:[%s842 + $0x4] sm:$0xf]
        %v1294 = vld [vmem:[%s850] sm:$0x1]
        %v1296 = vlaneseq
        %v1297 = vshrl.u32 %v1296, 7
        %v1298 = vsub.s32 0, %v1297
        %v1299 = vrot.slane %v1294, %v1298
        %v1303 = vunpack.c.l.b16 %v1292
        %v1304 = vunpack.c.l.b16 %v1293
        %v1305 = vpack.c.b16 %v1304, %v1303
        %1307 = vmatprep.subr.bf16.mxu0 0
        %1308 = vmatpush1.bf16.msra.mxu0 0
        %1309 = vmatprep.subr.bf16.mxu0 0
        %1310 = vmatpush1.bf16.msra.mxu0 0
        %1311 = vmatprep.subr.bf16.mxu0 0
        %1312 = vmatpush1.bf16.msra.mxu0 0
        %1313 = vmatprep.subr.bf16.mxu0 0
        %1314 = vmatpush1.bf16.msra.mxu0 0
        %1315 = vmatprep.subr.bf16.mxu0 0
        %1316 = vmatpush1.bf16.msra.mxu0 0
        %1317 = vmatprep.subr.bf16.mxu0 0
        %1318 = vmatpush1.bf16.msra.mxu0 0
        %1319 = vmatprep.subr.bf16.mxu0 0
        %1320 = vmatpush1.bf16.msra.mxu0 0
        %1321 = vmatprep.subr.bf16.mxu0 0
        %1322 = vmatpush1.bf16.msra.mxu0 %v1305
        %1323 = vmatprep.subr.bf16.mxu0 0
        %1324 = vmatpush2.bf16.msra.mxu0 0
        %1325 = vmatprep.subr.bf16.mxu0 0
        %1326 = vmatpush2.bf16.msra.mxu0 0
        %1327 = vmatprep.subr.bf16.mxu0 0
        %1328 = vmatpush2.bf16.msra.mxu0 0
        %1329 = vmatprep.subr.bf16.mxu0 0
        %1330 = vmatpush2.bf16.msra.mxu0 0
        %1331 = vmatprep.subr.bf16.mxu0 0
        %1332 = vmatpush2.bf16.msra.mxu0 0
        %1333 = vmatprep.subr.bf16.mxu0 0
        %1334 = vmatpush2.bf16.msra.mxu0 0
        %1335 = vmatprep.subr.bf16.mxu0 0
        %1336 = vmatpush2.bf16.msra.mxu0 0
        %1337 = vmatprep.subr.bf16.mxu0 0
        %1338 = vmatpush2.bf16.msra.mxu0 0
        %1339 = vmatprep.mubr.bf16.mxu0 0
        %1340 = vmatmul.mubr.bf16.gmra.mxu0 %v1069
        %v1341 = vpop.f32.mrf.mxu0
        %v1342 = vadd.f32 %v1299, %v1341
        %v1343 = vpop.f32.mrf.mxu0
        %v1344 = vpop.f32.mrf.mxu0
        %v1345 = vpop.f32.mrf.mxu0
        %1346 = vdwg.mxu0
        %v1347 = vld [vmem:[%s859] sm:$0xf]
        %v1348 = vld [vmem:[%s859 + $0x4] sm:$0xf]
        %v1349 = vld [vmem:[%s867] sm:$0x1]
        %v1351 = vlaneseq
        %v1352 = vshrl.u32 %v1351, 7
        %v1353 = vsub.s32 0, %v1352
        %v1354 = vrot.slane %v1349, %v1353
        %v1358 = vunpack.c.l.b16 %v1347
        %v1359 = vunpack.c.l.b16 %v1348
        %v1360 = vpack.c.b16 %v1359, %v1358
        %1362 = vmatprep.subr.bf16.mxu0 0
        %1363 = vmatpush1.bf16.msra.mxu0 0
        %1364 = vmatprep.subr.bf16.mxu0 0
        %1365 = vmatpush1.bf16.msra.mxu0 0
        %1366 = vmatprep.subr.bf16.mxu0 0
        %1367 = vmatpush1.bf16.msra.mxu0 0
        %1368 = vmatprep.subr.bf16.mxu0 0
        %1369 = vmatpush1.bf16.msra.mxu0 0
        %1370 = vmatprep.subr.bf16.mxu0 0
        %1371 = vmatpush1.bf16.msra.mxu0 0
        %1372 = vmatprep.subr.bf16.mxu0 0
        %1373 = vmatpush1.bf16.msra.mxu0 0
        %1374 = vmatprep.subr.bf16.mxu0 0
        %1375 = vmatpush1.bf16.msra.mxu0 0
        %1376 = vmatprep.subr.bf16.mxu0 0
        %1377 = vmatpush1.bf16.msra.mxu0 %v1360
        %1378 = vmatprep.subr.bf16.mxu0 0
        %1379 = vmatpush2.bf16.msra.mxu0 0
        %1380 = vmatprep.subr.bf16.mxu0 0
        %1381 = vmatpush2.bf16.msra.mxu0 0
        %1382 = vmatprep.subr.bf16.mxu0 0
        %1383 = vmatpush2.bf16.msra.mxu0 0
        %1384 = vmatprep.subr.bf16.mxu0 0
        %1385 = vmatpush2.bf16.msra.mxu0 0
        %1386 = vmatprep.subr.bf16.mxu0 0
        %1387 = vmatpush2.bf16.msra.mxu0 0
        %1388 = vmatprep.subr.bf16.mxu0 0
        %1389 = vmatpush2.bf16.msra.mxu0 0
        %1390 = vmatprep.subr.bf16.mxu0 0
        %1391 = vmatpush2.bf16.msra.mxu0 0
        %1392 = vmatprep.subr.bf16.mxu0 0
        %1393 = vmatpush2.bf16.msra.mxu0 0
        %1394 = vmatprep.mubr.bf16.mxu0 0
        %1395 = vmatmul.mubr.bf16.gmra.mxu0 %v1069
        %v1396 = vpop.f32.mrf.mxu0
        %v1397 = vadd.f32 %v1354, %v1396
        %v1398 = vpop.f32.mrf.mxu0
        %v1399 = vpop.f32.mrf.mxu0
        %v1400 = vpop.f32.mrf.mxu0
        %1401 = vdwg.mxu0
        %v1402 = vmul.f32 %v1342, 1.442695
        %v1403 = vpow.pop %v1402
        %v1404 = vld [vmem:[%s893] sm:$0xf]
        %v1405 = vmul.f32 %v1403, %v1397
        %v1406 = vpack.c.bf16 %v1405, %v1405
        %vm1407 = vcmask 64512
        %v1409 = vsel %vm1407, %v1404, 0
        %vm1411 = vcmask 1043456
        %v1413 = vsel %vm1411, %v1406, 0
        %1415 = vmatprep.subr.bf16.mxu0 0
        %1416 = vmatpush1.bf16.msra.mxu0 0
        %1417 = vmatprep.subr.bf16.mxu0 0
        %1418 = vmatpush1.bf16.msra.mxu0 0
        %1419 = vmatprep.subr.bf16.mxu0 0
        %1420 = vmatpush1.bf16.msra.mxu0 0
        %1421 = vmatprep.subr.bf16.mxu0 0
        %1422 = vmatpush1.bf16.msra.mxu0 0
        %1423 = vmatprep.subr.bf16.mxu0 0
        %1424 = vmatpush1.bf16.msra.mxu0 0
        %1425 = vmatprep.subr.bf16.mxu0 0
        %1426 = vmatpush1.bf16.msra.mxu0 0
        %1427 = vmatprep.subr.bf16.mxu0 0
        %1428 = vmatpush1.bf16.msra.mxu0 0
        %1429 = vmatprep.subr.bf16.mxu0 0
        %1430 = vmatpush1.bf16.msra.mxu0 %v1413
        %1431 = vmatprep.subr.bf16.mxu0 0
        %1432 = vmatpush2.bf16.msra.mxu0 0
        %1433 = vmatprep.subr.bf16.mxu0 0
        %1434 = vmatpush2.bf16.msra.mxu0 0
        %1435 = vmatprep.subr.bf16.mxu0 0
        %1436 = vmatpush2.bf16.msra.mxu0 0
        %1437 = vmatprep.subr.bf16.mxu0 0
        %1438 = vmatpush2.bf16.msra.mxu0 0
        %1439 = vmatprep.subr.bf16.mxu0 0
        %1440 = vmatpush2.bf16.msra.mxu0 0
        %1441 = vmatprep.subr.bf16.mxu0 0
        %1442 = vmatpush2.bf16.msra.mxu0 0
        %1443 = vmatprep.subr.bf16.mxu0 0
        %1444 = vmatpush2.bf16.msra.mxu0 0
        %1445 = vmatprep.subr.bf16.mxu0 0
        %1446 = vmatpush2.bf16.msra.mxu0 0
        %1447 = vmatprep.mubr.bf16.mxu0 0
        %1448 = vmatmul.mubr.bf16.gmra.mxu0 %v1409
        %v1449 = vpop.f32.mrf.mxu0
        %v1450 = vadd.f32 0.0, %v1449
        %v1451 = vpop.f32.mrf.mxu0
        %v1452 = vpop.f32.mrf.mxu0
        %v1453 = vpop.f32.mrf.mxu0
        %1454 = vdwg.mxu0
        %v1455 = vpack.c.bf16 %v1403, %v1403
        %v1457 = vsel %vm1411, %v1455, 0
        %1459 = vmatprep.subr.bf16.mxu0 0
        %1460 = vmatpush1.bf16.msra.mxu0 0
        %1461 = vmatprep.subr.bf16.mxu0 0
        %1462 = vmatpush1.bf16.msra.mxu0 0
        %1463 = vmatprep.subr.bf16.mxu0 0
        %1464 = vmatpush1.bf16.msra.mxu0 0
        %1465 = vmatprep.subr.bf16.mxu0 0
        %1466 = vmatpush1.bf16.msra.mxu0 0
        %1467 = vmatprep.subr.bf16.mxu0 0
        %1468 = vmatpush1.bf16.msra.mxu0 0
        %1469 = vmatprep.subr.bf16.mxu0 0
        %1470 = vmatpush1.bf16.msra.mxu0 0
        %1471 = vmatprep.subr.bf16.mxu0 0
        %1472 = vmatpush1.bf16.msra.mxu0 0
        %1473 = vmatprep.subr.bf16.mxu0 0
        %1474 = vmatpush1.bf16.msra.mxu0 %v1457
        %1475 = vmatprep.subr.bf16.mxu0 0
        %1476 = vmatpush2.bf16.msra.mxu0 0
        %1477 = vmatprep.subr.bf16.mxu0 0
        %1478 = vmatpush2.bf16.msra.mxu0 0
        %1479 = vmatprep.subr.bf16.mxu0 0
        %1480 = vmatpush2.bf16.msra.mxu0 0
        %1481 = vmatprep.subr.bf16.mxu0 0
        %1482 = vmatpush2.bf16.msra.mxu0 0
        %1483 = vmatprep.subr.bf16.mxu0 0
        %1484 = vmatpush2.bf16.msra.mxu0 0
        %1485 = vmatprep.subr.bf16.mxu0 0
        %1486 = vmatpush2.bf16.msra.mxu0 0
        %1487 = vmatprep.subr.bf16.mxu0 0
        %1488 = vmatpush2.bf16.msra.mxu0 0
        %1489 = vmatprep.subr.bf16.mxu0 0
        %1490 = vmatpush2.bf16.msra.mxu0 0
        %1491 = vmatprep.mubr.bf16.mxu0 0
        %1492 = vmatmul.mubr.bf16.gmra.mxu0 %v1409
        %v1493 = vpop.f32.mrf.mxu0
        %v1494 = vadd.f32 0.0, %v1493
        %v1495 = vpop.f32.mrf.mxu0
        %v1496 = vpop.f32.mrf.mxu0
        %v1497 = vpop.f32.mrf.mxu0
        %1498 = vdwg.mxu0
        %v1499 = vrcp.pop %v1494
        %v1500 = vmul.f32 %v1450, %v1499
        %v1501 = vmul.f32 %v1287, 0.5
        %v1502 = vtanh.pop %v1501
        %v1503 = vadd.f32 %v1502, 1.0
        %v1504 = vmul.f32 %v1503, 0.5
        %v1505 = vmul.f32 %v1504, %v1500
        %v1506 = vld [vmem:[%s876] sm:$0xf]
        %v1507 = vld [vmem:[%s876 + $0x4] sm:$0xf]
        %v1508 = vpack.c.bf16 %v1505, %v1505
        %v1509 = vld [vmem:[%s884] sm:$0x1]
        %v1511 = vlaneseq
        %v1512 = vshrl.u32 %v1511, 7
        %v1513 = vsub.s32 0, %v1512
        %v1514 = vrot.slane %v1509, %v1513
        %v1518 = vunpack.c.l.b16 %v1506
        %v1519 = vunpack.c.l.b16 %v1507
        %v1520 = vpack.c.b16 %v1519, %v1518
        %v1523 = vsel %vm1037, %v1508, 0
        %1525 = vmatprep.subr.bf16.mxu0 0
        %1526 = vmatpush1.bf16.msra.mxu0 0
        %1527 = vmatprep.subr.bf16.mxu0 0
        %1528 = vmatpush1.bf16.msra.mxu0 0
        %1529 = vmatprep.subr.bf16.mxu0 0
        %1530 = vmatpush1.bf16.msra.mxu0 0
        %1531 = vmatprep.subr.bf16.mxu0 0
        %1532 = vmatpush1.bf16.msra.mxu0 0
        %1533 = vmatprep.subr.bf16.mxu0 0
        %1534 = vmatpush1.bf16.msra.mxu0 0
        %1535 = vmatprep.subr.bf16.mxu0 0
        %1536 = vmatpush1.bf16.msra.mxu0 0
        %1537 = vmatprep.subr.bf16.mxu0 0
        %1538 = vmatpush1.bf16.msra.mxu0 0
        %1539 = vmatprep.subr.bf16.mxu0 0
        %1540 = vmatpush1.bf16.msra.mxu0 %v1520
        %1541 = vmatprep.subr.bf16.mxu0 0
        %1542 = vmatpush2.bf16.msra.mxu0 0
        %1543 = vmatprep.subr.bf16.mxu0 0
        %1544 = vmatpush2.bf16.msra.mxu0 0
        %1545 = vmatprep.subr.bf16.mxu0 0
        %1546 = vmatpush2.bf16.msra.mxu0 0
        %1547 = vmatprep.subr.bf16.mxu0 0
        %1548 = vmatpush2.bf16.msra.mxu0 0
        %1549 = vmatprep.subr.bf16.mxu0 0
        %1550 = vmatpush2.bf16.msra.mxu0 0
        %1551 = vmatprep.subr.bf16.mxu0 0
        %1552 = vmatpush2.bf16.msra.mxu0 0
        %1553 = vmatprep.subr.bf16.mxu0 0
        %1554 = vmatpush2.bf16.msra.mxu0 0
        %1555 = vmatprep.subr.bf16.mxu0 0
        %1556 = vmatpush2.bf16.msra.mxu0 0
        %1557 = vmatprep.mubr.bf16.mxu0 0
        %1558 = vmatmul.mubr.bf16.gmra.mxu0 %v1523
        %v1559 = vpop.f32.mrf.mxu0
        %v1560 = vadd.f32 %v1514, %v1559
        %v1561 = vpop.f32.mrf.mxu0
        %v1562 = vpop.f32.mrf.mxu0
        %v1563 = vpop.f32.mrf.mxu0
        %1564 = vdwg.mxu0
        %v1565 = vadd.f32 %v1036, %v1232
        %v1566 = vadd.f32 %v1565, %v1560
        %1567 = vst.msk [vmem:[#allocation2] sm:$0xff] %vm1037, %v1566
        %v1568 = vld [vmem:[%s1025] sm:$0xff]
        %v1569 = vadd.f32 %v1568, %v1566
        %1570 = vst.msk [vmem:[%s1025] sm:$0xff] %vm1037, %v1569
        %p1571 = scmp.lt.s32.totalorder %s52, 1
        %s1572 = scalar_select %p1571, %s52, 1
        %s1573 = smul.addr %s1572, 8
        %s1574 = scalar_lea.vmem %s16, %s1573
        // Predicated region
        $region141: #{decoder_forward.3} parent=83 // pred_check
          %p1575 = pneg %p494
        $region142: #{decoder_forward.3} parent=83 // pred_check_branch
          %1577 = sbr.rel (%p1575) target = $region144
        $region143: #{decoder_forward.3} parent=83 // pred_region
          _
        $region144: #{decoder_forward.3} parent=83 // pred_fallthru
          _
      $region84: #{decoder_forward.3} parent=5 // pred_fallthru
        _
      %p1578 = scmp.le.s32.totalorder 2, %s43
      // Predicated region
      $region145: #{decoder_forward.3} parent=5 // pred_check
        %p1579 = pneg %p1578
      $region146: #{decoder_forward.3} parent=5 // pred_check_branch
        %1581 = sbr.rel (%p1579) target = $region148
      $region147: #{decoder_forward.3} parent=5 // pred_region
        %s1582 = ssub.s32 %s43, 2
        // Predicated region
        $region149: #{decoder_forward.3} parent=147 // pred_check
          %p1583 = pneg %p500
        $region150: #{decoder_forward.3} parent=147 // pred_check_branch
          %1585 = sbr.rel (%p1583) target = $region152
        $region151: #{decoder_forward.3} parent=147 // pred_region
          %p1586 = scmp.lt.s32.totalorder %s54, 1
          %s1587 = scalar_select %p1586, %s54, 1
          %s1588 = smul.addr %s1587, 8
          %s1589 = scalar_lea.vmem %s16, %s1588
        $region152: #{decoder_forward.3} parent=147 // pred_fallthru
          _
      $region148: #{decoder_forward.3} parent=5 // pred_fallthru
        _
    $region6: #{decoder_forward.3} parent=1 // loop_footer
      %s47 = sadd.s32 1, %s43
    $region7: #{decoder_forward.3} parent=1 // loop_footer_branch
      %42 = sbr.rel target = $region3
    $region8: #{decoder_forward.3} parent=1 // loop_exit
      _
    %1590 = vsyncpa [#allocation4], 1
    %s1591 = scalar_lea.sflag [#allocation4], 1
    %1592 = vsyncpa %s1591, 1
    %1593 = vsyncpa [#allocation6], 1
    %s1594 = scalar_lea.sflag [#allocation6], 1
    %1595 = vsyncpa %s1594, 1
    %1596 = vsyncpa [#allocation9], 1
    %s1597 = scalar_lea.sflag [#allocation9], 1
    %1598 = vsyncpa %s1597, 1
    %1599 = vsyncpa [#allocation12], 1
    %s1600 = scalar_lea.sflag [#allocation12], 1
    %1601 = vsyncpa %s1600, 1
    %1602 = vsyncpa [#allocation15], 1
    %s1603 = scalar_lea.sflag [#allocation15], 1
    %1604 = vsyncpa %s1603, 1
    %1605 = vsyncpa [#allocation18], 1
    %s1606 = scalar_lea.sflag [#allocation18], 1
    %1607 = vsyncpa %s1606, 1
    %1608 = vsyncpa [#allocation21], 1
    %s1609 = scalar_lea.sflag [#allocation21], 1
    %1610 = vsyncpa %s1609, 1

</llo_original>
